<compile_context>
chip_gen: v7x
topology: tpu7x:2x2x1
jax: 0.10.0
libtpu: 0.0.40
codegen_flags: <defaults>
</compile_context>

<pallas_src>
import jax
import jax.numpy as jnp
from jax import lax
from jax.experimental import pallas as pl
from jax.experimental.pallas import tpu as pltpu


# ---------------------------------------------------------------------------
# Kernel 1: folded GroupNorm affine + fused QKV projection.
# x tile is NCHW-layout (C, block_p); outputs q/k/v are (block_p, C) bf16 with
# the layout change folded into the MXU contraction (contract over C of both).
# ---------------------------------------------------------------------------
def _gn_qkv_kernel(x_ref, a_ref, b_ref, wqkv_ref, bqkv_ref,
                   q_ref, k_ref, v_ref):
    c = x_ref.shape[1]
    x = x_ref[0]                                     # (C, tp) f32, NCHW layout
    xn = x * a_ref[0] + b_ref[0]                     # a = inv*gamma, b = beta - mean*a
    # (tp, 3C) = xn^T @ Wqkv   (trans_a folded into the contraction)
    qkv = lax.dot_general(xn.astype(jnp.bfloat16), wqkv_ref[...],
                          (((0,), (0,)), ((), ())),
                          preferred_element_type=jnp.float32) + bqkv_ref[...]
    q_ref[0] = qkv[:, :c].astype(jnp.bfloat16)       # 1/sqrt(C) already in Wq/bq
    k_ref[0] = qkv[:, c:2 * c].astype(jnp.bfloat16)
    v_ref[0] = qkv[:, 2 * c:].astype(jnp.bfloat16)


# ---------------------------------------------------------------------------
# Kernel 2: flash-style attention + output projection + residual add.
# Grid = (batch, q_tiles, kv_tiles); kv axis is the (arbitrary) reduction.
# Residual / output are read & written in NCHW layout; the out-proj is done as
# Wo^T @ attn^T on the MXU so the result lands directly in NCHW.
# ---------------------------------------------------------------------------
def _flash_attn_kernel(q_ref, k_ref, v_ref, xres_ref, wo_ref, bo_ref,
                       o_ref, m_scr, l_scr, acc_scr):
    ki = pl.program_id(2)

    @pl.when(ki == 0)
    def _init():
        m_scr[...] = jnp.full_like(m_scr, -jnp.inf)
        l_scr[...] = jnp.zeros_like(l_scr)
        acc_scr[...] = jnp.zeros_like(acc_scr)

    q = q_ref[0]                                     # (tq, C)  bf16 (pre-scaled)
    k = k_ref[0]                                     # (tkv, C) bf16
    v = v_ref[0]                                     # (tkv, C) bf16

    # scores = q @ k^T with the transpose folded into the contraction.
    s = lax.dot_general(q, k, (((1,), (1,)), ((), ())),
                        preferred_element_type=jnp.float32)      # (tq, tkv) f32

    m_prev = m_scr[...]                              # (tq, 1)
    m_new = jnp.maximum(m_prev, jnp.max(s, axis=-1, keepdims=True))
    alpha = jnp.exp(m_prev - m_new)
    p = jnp.exp(s - m_new)
    l_scr[...] = alpha * l_scr[...] + jnp.sum(p, axis=-1, keepdims=True)
    acc_scr[...] = alpha * acc_scr[...] + jnp.dot(
        p.astype(jnp.bfloat16), v, preferred_element_type=jnp.float32)
    m_scr[...] = m_new

    @pl.when(ki == pl.num_programs(2) - 1)
    def _finalize():
        attn = (acc_scr[...] * pl.reciprocal(l_scr[...], approx=True)
                ).astype(jnp.bfloat16)                           # (tq, C)
        # out^T = Wo^T @ attn^T, computed directly in NCHW layout on the MXU.
        out_t = lax.dot_general(wo_ref[...], attn, (((0,), (1,)), ((), ())),
                                preferred_element_type=jnp.float32)  # (C, tq)
        o_ref[0] = (out_t + bo_ref[...] + xres_ref[0]).astype(o_ref.dtype)


# ---------------------------------------------------------------------------
# Wrapper helpers.
# ---------------------------------------------------------------------------
def _tile_defaults():
    """Per-generation tile / VMEM defaults (see perf review)."""
    kind = ""
    try:
        kind = jax.devices()[0].device_kind.lower()
    except Exception:  # pragma: no cover - device query best-effort only
        pass
    if "v6" in kind:
        # v6e: HBM-bound -> big q tiles cut K/V re-streaming 4x; 128 MiB VMEM.
        return dict(block_p=1024, block_q=2048, block_kv=1024,
                    vmem_limit_bytes=96 * 1024 * 1024)
    if "v7" in kind or "7x" in kind:
        # v7x: compute-bound, 64 MiB VMEM/TC -> cap tiles, keep headroom.
        return dict(block_p=512, block_q=1024, block_kv=1024,
                    vmem_limit_bytes=44 * 1024 * 1024)
    # v5e / unknown: MXU-bound, moderate tiles; default scoped VMEM is small.
    return dict(block_p=512, block_q=512, block_kv=1024,
                vmem_limit_bytes=48 * 1024 * 1024)


def _fit_block(extent, want):
    """Largest lane-aligned (multiple of 128) divisor of `extent` <= `want`;
    falls back to the full extent (always a legal block) instead of silently
    picking an unaligned size."""
    b = min(want, extent)
    b -= b % 128
    while b >= 128:
        if extent % b == 0:
            return b
        b -= 128
    return extent


def _const_spec(block_shape, single_buffer):
    """BlockSpec for a grid-invariant operand (constant index_map).  With
    single_buffer=True, request one pipeline buffer instead of two."""
    idx = lambda *args: (0,) * len(block_shape)
    if single_buffer:
        try:
            return pl.BlockSpec(block_shape, idx, pipeline_mode=pl.Buffered(1))
        except TypeError:
            pass
    return pl.BlockSpec(block_shape, idx)


# ---------------------------------------------------------------------------
# Forward pass.
# ---------------------------------------------------------------------------
def attention_block(x_nchw, params, *, num_groups=32, eps=1e-5,
                    block_p=None, block_q=None, block_kv=None,
                    vmem_limit_bytes=None, single_buffer_weights=True):
    n, c, h, w = x_nchw.shape
    hw = h * w
    assert c % num_groups == 0
    cg = c // num_groups
    x_nchw = x_nchw.astype(jnp.float32)

    defaults = _tile_defaults()
    block_p = defaults["block_p"] if block_p is None else block_p
    block_q = defaults["block_q"] if block_q is None else block_q
    block_kv = defaults["block_kv"] if block_kv is None else block_kv
    vmem_limit_bytes = (defaults["vmem_limit_bytes"]
                        if vmem_limit_bytes is None else vmem_limit_bytes)

    # ---- GroupNorm stats: cheap memory-bound plain-JAX pre-pass.
    # Centered two-pass variance (avoids E[x^2]-E[x]^2 cancellation), then the
    # whole normalization is folded into a per-channel affine a*x + b.
    xg = x_nchw.reshape(n, num_groups, cg * hw)
    gmean = jnp.mean(xg, axis=-1)                                # (n, G)
    gvar = jnp.mean(jnp.square(xg - gmean[..., None]), axis=-1)  # (n, G)
    ginv = lax.rsqrt(gvar + eps)
    mean_c = jnp.repeat(gmean, cg, axis=-1)                      # (n, C)
    inv_c = jnp.repeat(ginv, cg, axis=-1)                        # (n, C)
    a = inv_c * params["gamma"][None, :].astype(jnp.float32)     # (n, C)
    b = params["beta"][None, :].astype(jnp.float32) - mean_c * a # (n, C)
    a_cb = a[:, :, None]                                         # (n, C, 1)
    b_cb = b[:, :, None]                                         # (n, C, 1)

    # ---- NCHW kept as-is: kernels handle the (N,C,HW) <-> (N,HW,C) layouts.
    x_flat = x_nchw.reshape(n, c, hw)                            # free reshape

    # ---- tile sizes.
    block_p = _fit_block(hw, block_p)
    block_q = _fit_block(hw, block_q)
    block_kv = _fit_block(hw, block_kv)
    # v7x has 2 TensorCores; keep >= 2 parallel output blocks so neither idles.
    while (n * (hw // block_q) < 2 and block_q >= 256
           and hw % (block_q // 2) == 0):
        block_q //= 2

    # ---- weight prep: fold 1/sqrt(C) into Wq/bq, concat QKV, bf16 MXU inputs.
    scale = 1.0 / (float(c) ** 0.5)
    wqkv = jnp.concatenate(
        [params["wq"] * scale, params["wk"], params["wv"]],
        axis=1).astype(jnp.bfloat16)                             # (C, 3C)
    bqkv = jnp.concatenate(
        [params["bq"] * scale, params["bk"], params["bv"]]
    )[None, :].astype(jnp.float32)                               # (1, 3C)
    wo = params["wo"].astype(jnp.bfloat16)                       # (C, C)
    bo_col = params["bo"][:, None].astype(jnp.float32)           # (C, 1) NCHW bias

    # ---- Pallas call 1: GroupNorm affine + QKV projection (NCHW in, NHWC out).
    np_ = hw // block_p
    q, k, v = pl.pallas_call(
        _gn_qkv_kernel,
        out_shape=(jax.ShapeDtypeStruct((n, hw, c), jnp.bfloat16),
                   jax.ShapeDtypeStruct((n, hw, c), jnp.bfloat16),
                   jax.ShapeDtypeStruct((n, hw, c), jnp.bfloat16)),
        grid=(n, np_),
        in_specs=[
            pl.BlockSpec((1, c, block_p), lambda b_, t: (b_, 0, t)),  # x (NCHW)
            pl.BlockSpec((1, c, 1), lambda b_, t: (b_, 0, 0)),        # a
            pl.BlockSpec((1, c, 1), lambda b_, t: (b_, 0, 0)),        # b
            _const_spec((c, 3 * c), single_buffer_weights),           # Wqkv
            _const_spec((1, 3 * c), single_buffer_weights),           # bqkv
        ],
        out_specs=[pl.BlockSpec((1, block_p, c), lambda b_, t: (b_, t, 0))] * 3,
        compiler_params=pltpu.CompilerParams(
            dimension_semantics=("parallel", "parallel"),
            vmem_limit_bytes=vmem_limit_bytes),
    )(x_flat, a_cb, b_cb, wqkv, bqkv)

    # ---- Pallas call 2: flash attention + out-proj + residual (NCHW output).
    nq = hw // block_q
    nkv = hw // block_kv
    out_flat = pl.pallas_call(
        _flash_attn_kernel,
        out_shape=jax.ShapeDtypeStruct((n, c, hw), jnp.float32),
        grid=(n, nq, nkv),
        in_specs=[
            pl.BlockSpec((1, block_q, c), lambda b_, qi, ki: (b_, qi, 0)),   # q
            pl.BlockSpec((1, block_kv, c), lambda b_, qi, ki: (b_, ki, 0)),  # k
            pl.BlockSpec((1, block_kv, c), lambda b_, qi, ki: (b_, ki, 0)),  # v
            pl.BlockSpec((1, c, block_q), lambda b_, qi, ki: (b_, 0, qi)),   # resid (NCHW)
            _const_spec((c, c), single_buffer_weights),                      # Wo
            _const_spec((c, 1), single_buffer_weights),                      # bo
        ],
        out_specs=pl.BlockSpec((1, c, block_q), lambda b_, qi, ki: (b_, 0, qi)),
        scratch_shapes=[
            pltpu.VMEM((block_q, 1), jnp.float32),   # running max m
            pltpu.VMEM((block_q, 1), jnp.float32),   # running denom l
            pltpu.VMEM((block_q, c), jnp.float32),   # running numerator acc
        ],
        compiler_params=pltpu.CompilerParams(
            dimension_semantics=("parallel", "parallel", "arbitrary"),
            vmem_limit_bytes=vmem_limit_bytes),
    )(q, k, v, x_flat, wo, bo_col)

    return out_flat.reshape(n, c, h, w)              # already NCHW, free reshape


# ---------------------------------------------------------------------------
# Synthetic parameters and a bf16-matched reference (mirrors the kernels'
# bf16 MXU inputs / f32 accumulation so the tolerance can be meaningful).
# ---------------------------------------------------------------------------
def init_params(key, c):
    # Right-multiply convention: y = x @ W + b (i.e. W = torch_weight.T).
    ks = jax.random.split(key, 10)
    sc = 1.0 / (c ** 0.5)
    return {
        "gamma": jax.random.normal(ks[0], (c,), jnp.float32) * 0.1 + 1.0,
        "beta": jax.random.normal(ks[1], (c,), jnp.float32) * 0.1,
        "wq": jax.random.normal(ks[2], (c, c), jnp.float32) * sc,
        "wk": jax.random.normal(ks[3], (c, c), jnp.float32) * sc,
        "wv": jax.random.normal(ks[4], (c, c), jnp.float32) * sc,
        "wo": jax.random.normal(ks[5], (c, c), jnp.float32) * sc,
        "bq": jax.random.normal(ks[6], (c,), jnp.float32) * 0.01,
        "bk": jax.random.normal(ks[7], (c,), jnp.float32) * 0.01,
        "bv": jax.random.normal(ks[8], (c,), jnp.float32) * 0.01,
        "bo": jax.random.normal(ks[9], (c,), jnp.float32) * 0.01,
    }


def reference_bf16(x, params, *, num_groups=32, eps=1e-5):
    """Module semantics with the same bf16 matmul inputs / f32 accumulation as
    the kernels (pl.reciprocal(approx) & flash-softmax ordering not modelled)."""
    n, c, h, w = x.shape
    hw = h * w
    cg = c // num_groups
    x = x.astype(jnp.float32)
    xg = x.reshape(n, num_groups, cg * hw)
    mean = jnp.mean(xg, axis=-1)
    var = jnp.mean(jnp.square(xg - mean[..., None]), axis=-1)
    inv = lax.rsqrt(var + eps)
    a = jnp.repeat(inv, cg, axis=-1) * params["gamma"][None, :]
    b = params["beta"][None, :] - jnp.repeat(mean, cg, axis=-1) * a
    seq = jnp.transpose(x.reshape(n, c, hw), (0, 2, 1))
    xn = seq * a[:, None, :] + b[:, None, :]
    scale = 1.0 / float(c) ** 0.5
    f = lambda m: m.astype(jnp.bfloat16)
    q = jnp.einsum("npc,cd->npd", f(xn), f(params["wq"] * scale),
                   preferred_element_type=jnp.float32) + params["bq"] * scale
    k = jnp.einsum("npc,cd->npd", f(xn), f(params["wk"]),
                   preferred_element_type=jnp.float32) + params["bk"]
    v = jnp.einsum("npc,cd->npd", f(xn), f(params["wv"]),
                   preferred_element_type=jnp.float32) + params["bv"]
    s = jnp.einsum("nqc,nkc->nqk", f(q), f(k),
                   preferred_element_type=jnp.float32)
    p = jax.nn.softmax(s, axis=-1)
    o = jnp.einsum("nqk,nkc->nqc", f(p), f(v),
                   preferred_element_type=jnp.float32)
    o = jnp.einsum("nqc,cd->nqd", f(o), f(params["wo"]),
                   preferred_element_type=jnp.float32) + params["bo"]
    o = jnp.transpose(o, (0, 2, 1)).reshape(n, c, h, w)
    return o + x


if __name__ == "__main__":
    # GroupNorm(32, C) needs C % 32 == 0; C=128 keeps the lane dim fully used.
    # HW = 16*16 = 256 with 128-row tiles exercises the multi-tile flash path
    # (nq=2, nkv=2) and the kv-axis init/finalize logic.
    N, C, H, W = 2, 128, 16, 16
    key = jax.random.PRNGKey(0)
    kx, kp = jax.random.split(key)
    x = jax.random.normal(kx, (N, C, H, W), jnp.float32)
    params = init_params(kp, C)

    kwargs = dict(block_p=128, block_q=128, block_kv=128)
    try:
        out = jax.block_until_ready(
            attention_block(x, params, single_buffer_weights=True, **kwargs))
    except Exception:
        # pipeline_mode=pl.Buffered(1) unsupported on this jax build -> retry
        # with default (double-buffered) weight specs.
        out = jax.block_until_ready(
            attention_block(x, params, single_buffer_weights=False, **kwargs))

    ref = reference_bf16(x, params)
    assert out.shape == (N, C, H, W)
    diff = jnp.abs(out - ref)
    err_max = float(jnp.max(diff))
    err_rms = float(jnp.sqrt(jnp.mean(jnp.square(diff))))
    # Remaining gap vs the bf16-matched reference: flash vs direct softmax,
    # pre- vs post-normalization bf16 rounding of p, approx reciprocal.
    assert err_rms < 1e-2, ("rms", err_rms)
    assert err_max < 5e-2, ("max", err_max)

    print("KERNEL_OK")
</pallas_src>

<mosaic_0001>
module attributes {stable_mosaic.version = 11 : i64} {
  func.func @_gn_qkv_kernel(%arg0: i32, %arg1: i32, %arg2: memref<1x128x128xf32, #tpu.memory_space<vmem>>, %arg3: memref<1x128x1xf32, #tpu.memory_space<vmem>>, %arg4: memref<1x128x1xf32, #tpu.memory_space<vmem>>, %arg5: memref<128x384xbf16, #tpu.memory_space<vmem>>, %arg6: memref<1x384xf32, #tpu.memory_space<vmem>>, %arg7: memref<1x128x128xbf16, #tpu.memory_space<vmem>>, %arg8: memref<1x128x128xbf16, #tpu.memory_space<vmem>>, %arg9: memref<1x128x128xbf16, #tpu.memory_space<vmem>>) attributes {dimension_semantics = [#tpu.dimension_semantics<parallel>, #tpu.dimension_semantics<parallel>], iteration_bounds = array<i64: 2, 2>, scalar_prefetch = 0 : i64, scratch_operands = 0 : i64, tpu.core_type = #tpu.core_type<tc>, window_params = [{transform_indices = @transform_0, window_bounds = array<i64: 1, 128, 128>}, {transform_indices = @transform_1, window_bounds = array<i64: 1, 128, 1>}, {transform_indices = @transform_2, window_bounds = array<i64: 1, 128, 1>}, {pipeline_mode = #tpu.pipeline_mode<synchronous>, transform_indices = @transform_3, window_bounds = array<i64: 128, 384>}, {pipeline_mode = #tpu.pipeline_mode<synchronous>, transform_indices = @transform_4, window_bounds = array<i64: 1, 384>}, {transform_indices = @transform_5, window_bounds = array<i64: 1, 128, 128>}, {transform_indices = @transform_6, window_bounds = array<i64: 1, 128, 128>}, {transform_indices = @transform_7, window_bounds = array<i64: 1, 128, 128>}]} {
    %c0 = arith.constant 0 : index
    %c0_0 = arith.constant 0 : index
    %c0_1 = arith.constant 0 : index
    %0 = vector.load %arg2[%c0, %c0_0, %c0_1] : memref<1x128x128xf32, #tpu.memory_space<vmem>>, vector<1x128x128xf32>
    %1 = vector.shape_cast %0 : vector<1x128x128xf32> to vector<128x128xf32>
    %c0_2 = arith.constant 0 : index
    %c0_3 = arith.constant 0 : index
    %c0_4 = arith.constant 0 : index
    %2 = vector.load %arg3[%c0_2, %c0_3, %c0_4] : memref<1x128x1xf32, #tpu.memory_space<vmem>>, vector<1x128x1xf32>
    %3 = vector.shape_cast %2 : vector<1x128x1xf32> to vector<128x1xf32>
    %4 = vector.broadcast %3 : vector<128x1xf32> to vector<128x128xf32>
    %5 = arith.mulf %1, %4 : vector<128x128xf32>
    %c0_5 = arith.constant 0 : index
    %c0_6 = arith.constant 0 : index
    %c0_7 = arith.constant 0 : index
    %6 = vector.load %arg4[%c0_5, %c0_6, %c0_7] : memref<1x128x1xf32, #tpu.memory_space<vmem>>, vector<1x128x1xf32>
    %7 = vector.shape_cast %6 : vector<1x128x1xf32> to vector<128x1xf32>
    %8 = vector.broadcast %7 : vector<128x1xf32> to vector<128x128xf32>
    %9 = arith.addf %5, %8 : vector<128x128xf32>
    %10 = arith.truncf %9 : vector<128x128xf32> to vector<128x128xbf16>
    %c0_8 = arith.constant 0 : index
    %c0_9 = arith.constant 0 : index
    %11 = vector.load %arg5[%c0_8, %c0_9] : memref<128x384xbf16, #tpu.memory_space<vmem>>, vector<128x384xbf16>
    %cst = arith.constant dense<0.000000e+00> : vector<128x384xf32>
    %12 = tpu.matmul %10, %11, %cst {dimension_numbers = #tpu.dot_dimension_numbers<[0], [0], [1], [1], [0, 1, 1, 1], [], []>} : vector<128x128xbf16>, vector<128x384xbf16>, vector<128x384xf32> -> vector<128x384xf32>
    %c0_10 = arith.constant 0 : index
    %c0_11 = arith.constant 0 : index
    %13 = vector.load %arg6[%c0_10, %c0_11] : memref<1x384xf32, #tpu.memory_space<vmem>>, vector<1x384xf32>
    %14 = vector.broadcast %13 : vector<1x384xf32> to vector<128x384xf32>
    %15 = arith.addf %12, %14 : vector<128x384xf32>
    %16 = vector.extract_strided_slice %15 {offsets = [0, 0], sizes = [128, 128], strides = [1, 1]} : vector<128x384xf32> to vector<128x128xf32>
    %17 = arith.truncf %16 : vector<128x128xf32> to vector<128x128xbf16>
    %c0_12 = arith.constant 0 : index
    %c0_13 = arith.constant 0 : index
    %c0_14 = arith.constant 0 : index
    %18 = vector.load %arg7[%c0_12, %c0_13, %c0_14] : memref<1x128x128xbf16, #tpu.memory_space<vmem>>, vector<1x128x128xbf16>
    %19 = vector.shape_cast %18 : vector<1x128x128xbf16> to vector<128x128xbf16>
    %20 = vector.shape_cast %17 : vector<128x128xbf16> to vector<1x128x128xbf16>
    tpu.vector_store %arg7[%c0_12, %c0_13, %c0_14], %20 {strides = array<i32>} : memref<1x128x128xbf16, #tpu.memory_space<vmem>>, vector<1x128x128xbf16>,
    %21 = vector.extract_strided_slice %15 {offsets = [0, 128], sizes = [128, 128], strides = [1, 1]} : vector<128x384xf32> to vector<128x128xf32>
    %22 = arith.truncf %21 : vector<128x128xf32> to vector<128x128xbf16>
    %c0_15 = arith.constant 0 : index
    %c0_16 = arith.constant 0 : index
    %c0_17 = arith.constant 0 : index
    %23 = vector.load %arg8[%c0_15, %c0_16, %c0_17] : memref<1x128x128xbf16, #tpu.memory_space<vmem>>, vector<1x128x128xbf16>
    %24 = vector.shape_cast %23 : vector<1x128x128xbf16> to vector<128x128xbf16>
    %25 = vector.shape_cast %22 : vector<128x128xbf16> to vector<1x128x128xbf16>
    tpu.vector_store %arg8[%c0_15, %c0_16, %c0_17], %25 {strides = array<i32>} : memref<1x128x128xbf16, #tpu.memory_space<vmem>>, vector<1x128x128xbf16>,
    %26 = vector.extract_strided_slice %15 {offsets = [0, 256], sizes = [128, 128], strides = [1, 1]} : vector<128x384xf32> to vector<128x128xf32>
    %27 = arith.truncf %26 : vector<128x128xf32> to vector<128x128xbf16>
    %c0_18 = arith.constant 0 : index
    %c0_19 = arith.constant 0 : index
    %c0_20 = arith.constant 0 : index
    %28 = vector.load %arg9[%c0_18, %c0_19, %c0_20] : memref<1x128x128xbf16, #tpu.memory_space<vmem>>, vector<1x128x128xbf16>
    %29 = vector.shape_cast %28 : vector<1x128x128xbf16> to vector<128x128xbf16>
    %30 = vector.shape_cast %27 : vector<128x128xbf16> to vector<1x128x128xbf16>
    tpu.vector_store %arg9[%c0_18, %c0_19, %c0_20], %30 {strides = array<i32>} : memref<1x128x128xbf16, #tpu.memory_space<vmem>>, vector<1x128x128xbf16>,
    return
  }
  func.func @transform_0(%arg0: i32, %arg1: i32) -> (i32, i32, i32) {
    %c0_i32 = arith.constant 0 : i32
    %c0_i32_0 = arith.constant 0 : i32
    return %arg0, %c0_i32, %arg1 : i32, i32, i32
  }
  func.func @transform_1(%arg0: i32, %arg1: i32) -> (i32, i32, i32) {
    %c0_i32 = arith.constant 0 : i32
    %c0_i32_0 = arith.constant 0 : i32
    %c0_i32_1 = arith.constant 0 : i32
    return %arg0, %c0_i32, %c0_i32_0 : i32, i32, i32
  }
  func.func @transform_2(%arg0: i32, %arg1: i32) -> (i32, i32, i32) {
    %c0_i32 = arith.constant 0 : i32
    %c0_i32_0 = arith.constant 0 : i32
    %c0_i32_1 = arith.constant 0 : i32
    return %arg0, %c0_i32, %c0_i32_0 : i32, i32, i32
  }
  func.func @transform_3(%arg0: i32, %arg1: i32) -> (i32, i32) {
    %c0_i32 = arith.constant 0 : i32
    %c0_i32_0 = arith.constant 0 : i32
    %c0_i32_1 = arith.constant 0 : i32
    return %c0_i32, %c0_i32_0 : i32, i32
  }
  func.func @transform_4(%arg0: i32, %arg1: i32) -> (i32, i32) {
    %c0_i32 = arith.constant 0 : i32
    %c0_i32_0 = arith.constant 0 : i32
    %c0_i32_1 = arith.constant 0 : i32
    return %c0_i32, %c0_i32_0 : i32, i32
  }
  func.func @transform_5(%arg0: i32, %arg1: i32) -> (i32, i32, i32) {
    %c0_i32 = arith.constant 0 : i32
    %c0_i32_0 = arith.constant 0 : i32
    return %arg0, %arg1, %c0_i32 : i32, i32, i32
  }
  func.func @transform_6(%arg0: i32, %arg1: i32) -> (i32, i32, i32) {
    %c0_i32 = arith.constant 0 : i32
    %c0_i32_0 = arith.constant 0 : i32
    return %arg0, %arg1, %c0_i32 : i32, i32, i32
  }
  func.func @transform_7(%arg0: i32, %arg1: i32) -> (i32, i32, i32) {
    %c0_i32 = arith.constant 0 : i32
    %c0_i32_0 = arith.constant 0 : i32
    return %arg0, %arg1, %c0_i32 : i32, i32, i32
  }
}

module attributes {stable_mosaic.version = 11 : i64} {
  func.func @_gn_qkv_kernel(%arg0: i32, %arg1: i32, %arg2: memref<1x128x128xf32, #tpu.memory_space<vmem>>, %arg3: memref<1x128x1xf32, #tpu.memory_space<vmem>>, %arg4: memref<1x128x1xf32, #tpu.memory_space<vmem>>, %arg5: memref<128x384xbf16, #tpu.memory_space<vmem>>, %arg6: memref<1x384xf32, #tpu.memory_space<vmem>>, %arg7: memref<1x128x128xbf16, #tpu.memory_space<vmem>>, %arg8: memref<1x128x128xbf16, #tpu.memory_space<vmem>>, %arg9: memref<1x128x128xbf16, #tpu.memory_space<vmem>>) attributes {dimension_semantics = [#tpu.dimension_semantics<parallel>, #tpu.dimension_semantics<parallel>], iteration_bounds = array<i64: 2, 2>, scalar_prefetch = 0 : i64, scratch_operands = 0 : i64, tpu.core_type = #tpu.core_type<tc>, window_params = [{transform_indices = @transform_0, window_bounds = array<i64: 1, 128, 128>}, {transform_indices = @transform_1, window_bounds = array<i64: 1, 128, 1>}, {transform_indices = @transform_2, window_bounds = array<i64: 1, 128, 1>}, {pipeline_mode = #tpu.pipeline_mode<synchronous>, transform_indices = @transform_3, window_bounds = array<i64: 128, 384>}, {pipeline_mode = #tpu.pipeline_mode<synchronous>, transform_indices = @transform_4, window_bounds = array<i64: 1, 384>}, {transform_indices = @transform_5, window_bounds = array<i64: 1, 128, 128>}, {transform_indices = @transform_6, window_bounds = array<i64: 1, 128, 128>}, {transform_indices = @transform_7, window_bounds = array<i64: 1, 128, 128>}]} {
    %c0 = arith.constant 0 : index
    %c0_0 = arith.constant 0 : index
    %c0_1 = arith.constant 0 : index
    %0 = vector.load %arg2[%c0, %c0_0, %c0_1] : memref<1x128x128xf32, #tpu.memory_space<vmem>>, vector<1x128x128xf32>
    %1 = vector.shape_cast %0 : vector<1x128x128xf32> to vector<128x128xf32>
    %c0_2 = arith.constant 0 : index
    %c0_3 = arith.constant 0 : index
    %c0_4 = arith.constant 0 : index
    %2 = vector.load %arg3[%c0_2, %c0_3, %c0_4] : memref<1x128x1xf32, #tpu.memory_space<vmem>>, vector<1x128x1xf32>
    %3 = vector.shape_cast %2 : vector<1x128x1xf32> to vector<128x1xf32>
    %4 = vector.broadcast %3 : vector<128x1xf32> to vector<128x128xf32>
    %5 = arith.mulf %1, %4 : vector<128x128xf32>
    %c0_5 = arith.constant 0 : index
    %c0_6 = arith.constant 0 : index
    %c0_7 = arith.constant 0 : index
    %6 = vector.load %arg4[%c0_5, %c0_6, %c0_7] : memref<1x128x1xf32, #tpu.memory_space<vmem>>, vector<1x128x1xf32>
    %7 = vector.shape_cast %6 : vector<1x128x1xf32> to vector<128x1xf32>
    %8 = vector.broadcast %7 : vector<128x1xf32> to vector<128x128xf32>
    %9 = arith.addf %5, %8 : vector<128x128xf32>
    %10 = arith.truncf %9 : vector<128x128xf32> to vector<128x128xbf16>
    %c0_8 = arith.constant 0 : index
    %c0_9 = arith.constant 0 : index
    %11 = vector.load %arg5[%c0_8, %c0_9] : memref<128x384xbf16, #tpu.memory_space<vmem>>, vector<128x384xbf16>
    %cst = arith.constant dense<0.000000e+00> : vector<128x384xf32>
    %12 = tpu.matmul %10, %11, %cst {dimension_numbers = #tpu.dot_dimension_numbers<[0], [0], [1], [1], [0, 1, 1, 1], [], []>} : vector<128x128xbf16>, vector<128x384xbf16>, vector<128x384xf32> -> vector<128x384xf32>
    %c0_10 = arith.constant 0 : index
    %c0_11 = arith.constant 0 : index
    %13 = vector.load %arg6[%c0_10, %c0_11] : memref<1x384xf32, #tpu.memory_space<vmem>>, vector<1x384xf32>
    %14 = vector.broadcast %13 : vector<1x384xf32> to vector<128x384xf32>
    %15 = arith.addf %12, %14 : vector<128x384xf32>
    %16 = vector.extract_strided_slice %15 {offsets = [0, 0], sizes = [128, 128], strides = [1, 1]} : vector<128x384xf32> to vector<128x128xf32>
    %17 = arith.truncf %16 : vector<128x128xf32> to vector<128x128xbf16>
    %c0_12 = arith.constant 0 : index
    %c0_13 = arith.constant 0 : index
    %c0_14 = arith.constant 0 : index
    %18 = vector.load %arg7[%c0_12, %c0_13, %c0_14] : memref<1x128x128xbf16, #tpu.memory_space<vmem>>, vector<1x128x128xbf16>
    %19 = vector.shape_cast %18 : vector<1x128x128xbf16> to vector<128x128xbf16>
    %20 = vector.shape_cast %17 : vector<128x128xbf16> to vector<1x128x128xbf16>
    tpu.vector_store %arg7[%c0_12, %c0_13, %c0_14], %20 {strides = array<i32>} : memref<1x128x128xbf16, #tpu.memory_space<vmem>>, vector<1x128x128xbf16>,
    %21 = vector.extract_strided_slice %15 {offsets = [0, 128], sizes = [128, 128], strides = [1, 1]} : vector<128x384xf32> to vector<128x128xf32>
    %22 = arith.truncf %21 : vector<128x128xf32> to vector<128x128xbf16>
    %c0_15 = arith.constant 0 : index
    %c0_16 = arith.constant 0 : index
    %c0_17 = arith.constant 0 : index
    %23 = vector.load %arg8[%c0_15, %c0_16, %c0_17] : memref<1x128x128xbf16, #tpu.memory_space<vmem>>, vector<1x128x128xbf16>
    %24 = vector.shape_cast %23 : vector<1x128x128xbf16> to vector<128x128xbf16>
    %25 = vector.shape_cast %22 : vector<128x128xbf16> to vector<1x128x128xbf16>
    tpu.vector_store %arg8[%c0_15, %c0_16, %c0_17], %25 {strides = array<i32>} : memref<1x128x128xbf16, #tpu.memory_space<vmem>>, vector<1x128x128xbf16>,
    %26 = vector.extract_strided_slice %15 {offsets = [0, 256], sizes = [128, 128], strides = [1, 1]} : vector<128x384xf32> to vector<128x128xf32>
    %27 = arith.truncf %26 : vector<128x128xf32> to vector<128x128xbf16>
    %c0_18 = arith.constant 0 : index
    %c0_19 = arith.constant 0 : index
    %c0_20 = arith.constant 0 : index
    %28 = vector.load %arg9[%c0_18, %c0_19, %c0_20] : memref<1x128x128xbf16, #tpu.memory_space<vmem>>, vector<1x128x128xbf16>
    %29 = vector.shape_cast %28 : vector<1x128x128xbf16> to vector<128x128xbf16>
    %30 = vector.shape_cast %27 : vector<128x128xbf16> to vector<1x128x128xbf16>
    tpu.vector_store %arg9[%c0_18, %c0_19, %c0_20], %30 {strides = array<i32>} : memref<1x128x128xbf16, #tpu.memory_space<vmem>>, vector<1x128x128xbf16>,
    return
  }
  func.func @transform_0(%arg0: i32, %arg1: i32) -> (i32, i32, i32) {
    %c0_i32 = arith.constant 0 : i32
    %c0_i32_0 = arith.constant 0 : i32
    return %arg0, %c0_i32, %arg1 : i32, i32, i32
  }
  func.func @transform_1(%arg0: i32, %arg1: i32) -> (i32, i32, i32) {
    %c0_i32 = arith.constant 0 : i32
    %c0_i32_0 = arith.constant 0 : i32
    %c0_i32_1 = arith.constant 0 : i32
    return %arg0, %c0_i32, %c0_i32_0 : i32, i32, i32
  }
  func.func @transform_2(%arg0: i32, %arg1: i32) -> (i32, i32, i32) {
    %c0_i32 = arith.constant 0 : i32
    %c0_i32_0 = arith.constant 0 : i32
    %c0_i32_1 = arith.constant 0 : i32
    return %arg0, %c0_i32, %c0_i32_0 : i32, i32, i32
  }
  func.func @transform_3(%arg0: i32, %arg1: i32) -> (i32, i32) {
    %c0_i32 = arith.constant 0 : i32
    %c0_i32_0 = arith.constant 0 : i32
    %c0_i32_1 = arith.constant 0 : i32
    return %c0_i32, %c0_i32_0 : i32, i32
  }
  func.func @transform_4(%arg0: i32, %arg1: i32) -> (i32, i32) {
    %c0_i32 = arith.constant 0 : i32
    %c0_i32_0 = arith.constant 0 : i32
    %c0_i32_1 = arith.constant 0 : i32
    return %c0_i32, %c0_i32_0 : i32, i32
  }
  func.func @transform_5(%arg0: i32, %arg1: i32) -> (i32, i32, i32) {
    %c0_i32 = arith.constant 0 : i32
    %c0_i32_0 = arith.constant 0 : i32
    return %arg0, %arg1, %c0_i32 : i32, i32, i32
  }
  func.func @transform_6(%arg0: i32, %arg1: i32) -> (i32, i32, i32) {
    %c0_i32 = arith.constant 0 : i32
    %c0_i32_0 = arith.constant 0 : i32
    return %arg0, %arg1, %c0_i32 : i32, i32, i32
  }
  func.func @transform_7(%arg0: i32, %arg1: i32) -> (i32, i32, i32) {
    %c0_i32 = arith.constant 0 : i32
    %c0_i32_0 = arith.constant 0 : i32
    return %arg0, %arg1, %c0_i32 : i32, i32, i32
  }
}

</mosaic_0001>

<llo_original>
// kernel: tpu_custom_call.1
$region0: #{tpu_custom_call.1}
  #allocation0 [shape = 'u32[]', space=smem, size = 0x4, offset = 0x4, fixed_abs, tag = 'smem constant byte address 0x4 - core index']
  #allocation1 [shape = 'u32[144,128]{1,0:T(1,128)}', space=vmem, size = 0x12000, scoped, tag = 'internal scratch']
  %s0 = inlined_call_operand.vmem [shape: f32[2,128,256], index: 0, kind: input, shape index: {}]
  %s1 = inlined_call_operand.vmem [shape: f32[2,128,1], index: 1, kind: input, shape index: {}]
  %s2 = inlined_call_operand.vmem [shape: f32[2,128,1], index: 2, kind: input, shape index: {}]
  %s3 = inlined_call_operand.hbm [shape: bf16[128,384], index: 3, kind: input, shape index: {}]
  %s4 = inlined_call_operand.vmem [shape: f32[1,384], index: 4, kind: input, shape index: {}]
  %s5 = inlined_call_operand.hbm [shape: bf16[2,256,128], index: 5, kind: output, shape index: {0}]
  %s6 = inlined_call_operand.hbm [shape: bf16[2,256,128], index: 6, kind: output, shape index: {1}]
  %s7 = inlined_call_operand.hbm [shape: bf16[2,256,128], index: 7, kind: output, shape index: {2}]
  %8 = xla_tuple %s5, %s6, %s7
  %s9 = sld [smem:[#allocation0]]
  $region111: #{tpu_custom_call.1} parent=0
    _
  %s11 = ssub.s32 1, %s9
  %s12 = scalar_select 0, %s11, %s9
  $region1: #{tpu_custom_call.1} parent=0
    #allocation2 [shape = 'u8[131072]{0}', space=vmem, size = 0x20000, scoped, tag = 'input window, operand 0']
    #allocation3 [shape = 'u8[98304]{0}', space=vmem, size = 0x18000, scoped, tag = 'input window, operand 3, single buffered']
    #allocation4 [shape = 's32[2]{0}', space=sflag, size = 0x8, scoped, tag = 'scoped memory for tpu_custom_call.1']
    #allocation5 [shape = 's32[2]{0}', space=sflag, size = 0x8, scoped, tag = 'scoped memory for tpu_custom_call.1']
    #allocation6 [shape = 'u8[65536]{0}', space=vmem, size = 0x10000, scoped, tag = 'output window, operand 0']
    #allocation7 [shape = 'u8[65536]{0}', space=vmem, size = 0x10000, scoped, tag = 'output window, operand 1']
    #allocation8 [shape = 's32[2]{0}', space=sflag, size = 0x8, scoped, tag = 'scoped memory for tpu_custom_call.1']
    #allocation9 [shape = 'u8[65536]{0}', space=vmem, size = 0x10000, scoped, tag = 'output window, operand 2']
    %13 = vsyncpa [#allocation4], 0
    %14 = vsyncpa [#allocation5], 0
    %s15 = scalar_lea.sflag [#allocation5], 1
    %16 = vsyncpa %s15, 0
    %17 = vsyncpa [#allocation8], 0
    %s18 = scalar_lea.sflag [#allocation8], 1
    %19 = vsyncpa %s18, 0
    loop: start=0, step=1, limit=6
    $region2: #{tpu_custom_call.1} parent=1 // loop_pre_header
      _
    $region3: #{tpu_custom_call.1} parent=1 // loop_header
      %s21 = sphi 0, %s25
      %p22 = scmp.ge.s32.totalorder %s21, 6
      %s28 = sphi 0, %s40
      %s29 = sphi 0, %s36
      %s30 = sphi 0, %s28
      %s31 = sphi 0, %s29
      %s32 = sphi 0, %s30
      %s33 = sphi 0, %s31
      %s45 = sphi 0, %s47
      %s48 = sphi 0, %s45
      %s49 = sphi 0, %s48
      %s65 = sphi 0, %s49
      %s71 = sphi 0, %s73
      %s74 = sphi 0, %s71
      %s75 = sphi 0, %s74
      %s91 = sphi 0, %s75
      %s97 = sphi 0, %s99
      %s100 = sphi 0, %s97
      %s101 = sphi 0, %s100
      %s117 = sphi 0, %s101
      %s121 = sphi 0, %s121
      %s123 = sphi 0, %s121
      %s124 = sphi 0, %s123
      %s138 = sphi 0, %s124
      %s142 = sphi 0, %s142
      %s144 = sphi 0, %s142
      %s145 = sphi 0, %s144
      %s159 = sphi 0, %s145
      %s167 = sphi 0, %s169
      %s170 = sphi 0, %s167
      %s171 = sphi 0, %s170
      %s187 = sphi 0, %s171
      %s195 = sphi 0, %s197
      %s198 = sphi 0, %s195
      %s199 = sphi 0, %s198
      %s215 = sphi 0, %s199
      %s223 = sphi 0, %s225
      %s226 = sphi 0, %s223
      %s227 = sphi 0, %s226
      %s243 = sphi 0, %s227
    $region4: #{tpu_custom_call.1} parent=1 // loop_header_branch
      %24 = sbr.rel (%p22) target = $region8
    $region5: #{tpu_custom_call.1} parent=1 // loop_body
      %s26 = ssub.s32 %s21, 1
      %s27 = ssub.s32 %s21, 2
      %s34 = sadd.s32 1, %s29
      %p35 = scmp.ge.s32.totalorder %s34, 2
      %s36 = scalar_select %p35, 0, %s34
      %s37 = sadd.s32 1, %s28
      %s38 = scalar_select %p35, %s37, %s28
      %p39 = scmp.ge.s32.totalorder %s38, 2
      %s40 = scalar_select %p39, 0, %s38
      %s41 = ssub.s32 %s28, %s40
      %s42 = ssub.s32 %s29, %s36
      %s43 = sor.u32 %s41, %s42
      %p44 = scmp.eq.s32.totalorder %s43, 0
      %s46 = sadd.s32 %s45, 1
      %s47 = scalar_select %p44, %s45, %s46
      %p50 = pneg %p44
      %p51 = scmp.eq.s32.totalorder %s21, 3
      %p52 = por %p50, %p51
      %p53 = scmp.ne.s32.totalorder %s45, %s48
      %p54 = scmp.eq.s32.totalorder %s21, 0
      %p55 = por %p53, %p54
      %p56 = scmp.ne.s32.totalorder %s45, %s48
      %p57 = scmp.eq.s32.totalorder %s26, 3
      %p58 = por %p56, %p57
      %p59 = scmp.ne.s32.totalorder %s48, %s49
      %p60 = scmp.eq.s32.totalorder %s26, 0
      %p61 = por %p59, %p60
      %p62 = scmp.ne.s32.totalorder %s48, %s49
      %p63 = scmp.eq.s32.totalorder %s27, 3
      %p64 = por %p62, %p63
      %p66 = scmp.ne.s32.totalorder %s49, %s65
      %p67 = scmp.eq.s32.totalorder %s27, 0
      %p68 = por %p66, %p67
      %s69 = ssub.s32 %s28, %s40
      %p70 = scmp.eq.s32.totalorder %s69, 0
      %s72 = sadd.s32 %s71, 1
      %s73 = scalar_select %p70, %s71, %s72
      %p76 = pneg %p70
      %p77 = scmp.eq.s32.totalorder %s21, 3
      %p78 = por %p76, %p77
      %p79 = scmp.ne.s32.totalorder %s71, %s74
      %p80 = scmp.eq.s32.totalorder %s21, 0
      %p81 = por %p79, %p80
      %p82 = scmp.ne.s32.totalorder %s71, %s74
      %p83 = scmp.eq.s32.totalorder %s26, 3
      %p84 = por %p82, %p83
      %p85 = scmp.ne.s32.totalorder %s74, %s75
      %p86 = scmp.eq.s32.totalorder %s26, 0
      %p87 = por %p85, %p86
      %p88 = scmp.ne.s32.totalorder %s74, %s75
      %p89 = scmp.eq.s32.totalorder %s27, 3
      %p90 = por %p88, %p89
      %p92 = scmp.ne.s32.totalorder %s75, %s91
      %p93 = scmp.eq.s32.totalorder %s27, 0
      %p94 = por %p92, %p93
      %s95 = ssub.s32 %s28, %s40
      %p96 = scmp.eq.s32.totalorder %s95, 0
      %s98 = sadd.s32 %s97, 1
      %s99 = scalar_select %p96, %s97, %s98
      %p102 = pneg %p96
      %p103 = scmp.eq.s32.totalorder %s21, 3
      %p104 = por %p102, %p103
      %p105 = scmp.ne.s32.totalorder %s97, %s100
      %p106 = scmp.eq.s32.totalorder %s21, 0
      %p107 = por %p105, %p106
      %p108 = scmp.ne.s32.totalorder %s97, %s100
      %p109 = scmp.eq.s32.totalorder %s26, 3
      %p110 = por %p108, %p109
      %p111 = scmp.ne.s32.totalorder %s100, %s101
      %p112 = scmp.eq.s32.totalorder %s26, 0
      %p113 = por %p111, %p112
      %p114 = scmp.ne.s32.totalorder %s100, %s101
      %p115 = scmp.eq.s32.totalorder %s27, 3
      %p116 = por %p114, %p115
      %p118 = scmp.ne.s32.totalorder %s101, %s117
      %p119 = scmp.eq.s32.totalorder %s27, 0
      %p120 = por %p118, %p119
      %s122 = sadd.s32 %s121, 1
      %p125 = scmp.eq.s32.totalorder %s21, 3
      %p126 = scmp.ne.s32.totalorder %s121, %s123
      %p127 = scmp.eq.s32.totalorder %s21, 0
      %p128 = por %p126, %p127
      %p129 = scmp.ne.s32.totalorder %s121, %s123
      %p130 = scmp.eq.s32.totalorder %s26, 3
      %p131 = por %p129, %p130
      %p132 = scmp.ne.s32.totalorder %s123, %s124
      %p133 = scmp.eq.s32.totalorder %s26, 0
      %p134 = por %p132, %p133
      %p135 = scmp.ne.s32.totalorder %s123, %s124
      %p136 = scmp.eq.s32.totalorder %s27, 3
      %p137 = por %p135, %p136
      %p139 = scmp.ne.s32.totalorder %s124, %s138
      %p140 = scmp.eq.s32.totalorder %s27, 0
      %p141 = por %p139, %p140
      %s143 = sadd.s32 %s142, 1
      %p146 = scmp.eq.s32.totalorder %s21, 3
      %p147 = scmp.ne.s32.totalorder %s142, %s144
      %p148 = scmp.eq.s32.totalorder %s21, 0
      %p149 = por %p147, %p148
      %p150 = scmp.ne.s32.totalorder %s142, %s144
      %p151 = scmp.eq.s32.totalorder %s26, 3
      %p152 = por %p150, %p151
      %p153 = scmp.ne.s32.totalorder %s144, %s145
      %p154 = scmp.eq.s32.totalorder %s26, 0
      %p155 = por %p153, %p154
      %p156 = scmp.ne.s32.totalorder %s144, %s145
      %p157 = scmp.eq.s32.totalorder %s27, 3
      %p158 = por %p156, %p157
      %p160 = scmp.ne.s32.totalorder %s145, %s159
      %p161 = scmp.eq.s32.totalorder %s27, 0
      %p162 = por %p160, %p161
      %s163 = ssub.s32 %s28, %s40
      %s164 = ssub.s32 %s29, %s36
      %s165 = sor.u32 %s163, %s164
      %p166 = scmp.eq.s32.totalorder %s165, 0
      %s168 = sadd.s32 %s167, 1
      %s169 = scalar_select %p166, %s167, %s168
      %p172 = pneg %p166
      %p173 = scmp.eq.s32.totalorder %s21, 3
      %p174 = por %p172, %p173
      %p175 = scmp.ne.s32.totalorder %s167, %s170
      %p176 = scmp.eq.s32.totalorder %s21, 0
      %p177 = por %p175, %p176
      %p178 = scmp.ne.s32.totalorder %s167, %s170
      %p179 = scmp.eq.s32.totalorder %s26, 3
      %p180 = por %p178, %p179
      %p181 = scmp.ne.s32.totalorder %s170, %s171
      %p182 = scmp.eq.s32.totalorder %s26, 0
      %p183 = por %p181, %p182
      %p184 = scmp.ne.s32.totalorder %s170, %s171
      %p185 = scmp.eq.s32.totalorder %s27, 3
      %p186 = por %p184, %p185
      %p188 = scmp.ne.s32.totalorder %s171, %s187
      %p189 = scmp.eq.s32.totalorder %s27, 0
      %p190 = por %p188, %p189
      %s191 = ssub.s32 %s28, %s40
      %s192 = ssub.s32 %s29, %s36
      %s193 = sor.u32 %s191, %s192
      %p194 = scmp.eq.s32.totalorder %s193, 0
      %s196 = sadd.s32 %s195, 1
      %s197 = scalar_select %p194, %s195, %s196
      %p200 = pneg %p194
      %p201 = scmp.eq.s32.totalorder %s21, 3
      %p202 = por %p200, %p201
      %p203 = scmp.ne.s32.totalorder %s195, %s198
      %p204 = scmp.eq.s32.totalorder %s21, 0
      %p205 = por %p203, %p204
      %p206 = scmp.ne.s32.totalorder %s195, %s198
      %p207 = scmp.eq.s32.totalorder %s26, 3
      %p208 = por %p206, %p207
      %p209 = scmp.ne.s32.totalorder %s198, %s199
      %p210 = scmp.eq.s32.totalorder %s26, 0
      %p211 = por %p209, %p210
      %p212 = scmp.ne.s32.totalorder %s198, %s199
      %p213 = scmp.eq.s32.totalorder %s27, 3
      %p214 = por %p212, %p213
      %p216 = scmp.ne.s32.totalorder %s199, %s215
      %p217 = scmp.eq.s32.totalorder %s27, 0
      %p218 = por %p216, %p217
      %s219 = ssub.s32 %s28, %s40
      %s220 = ssub.s32 %s29, %s36
      %s221 = sor.u32 %s219, %s220
      %p222 = scmp.eq.s32.totalorder %s221, 0
      %s224 = sadd.s32 %s223, 1
      %s225 = scalar_select %p222, %s223, %s224
      %p228 = pneg %p222
      %p229 = scmp.eq.s32.totalorder %s21, 3
      %p230 = por %p228, %p229
      %p231 = scmp.ne.s32.totalorder %s223, %s226
      %p232 = scmp.eq.s32.totalorder %s21, 0
      %p233 = por %p231, %p232
      %p234 = scmp.ne.s32.totalorder %s223, %s226
      %p235 = scmp.eq.s32.totalorder %s26, 3
      %p236 = por %p234, %p235
      %p237 = scmp.ne.s32.totalorder %s226, %s227
      %p238 = scmp.eq.s32.totalorder %s26, 0
      %p239 = por %p237, %p238
      %p240 = scmp.ne.s32.totalorder %s226, %s227
      %p241 = scmp.eq.s32.totalorder %s27, 3
      %p242 = por %p240, %p241
      %p244 = scmp.ne.s32.totalorder %s227, %s243
      %p245 = scmp.eq.s32.totalorder %s27, 0
      %p246 = por %p244, %p245
      %p247 = scmp.le.s32.totalorder 1, %s21
      %p248 = scmp.lt.s32.totalorder %s21, 5
      %p249 = pnand %p247, %p248
      %p250 = pneg %p249
      // Predicated region
      $region9: #{tpu_custom_call.1} parent=5 // pred_check
        _
      $region10: #{tpu_custom_call.1} parent=5 // pred_check_branch
        %252 = sbr.rel (%p249) target = $region12
      $region11: #{tpu_custom_call.1} parent=5 // pred_region
        %s253 = ssub.s32 %s21, 1
        // Predicated region
        $region13: #{tpu_custom_call.1} parent=11 // pred_check
          %p254 = pneg %p134
        $region14: #{tpu_custom_call.1} parent=11 // pred_check_branch
          %256 = sbr.rel (%p254) target = $region16
        $region15: #{tpu_custom_call.1} parent=11 // pred_region
          %s258 = ssub.s32 3072, 3072
          %259 = vsyncadd [#allocation4], %s258
          %s260 = sshll.u32 [#allocation3], 4
          %s261 = int_to_ptr.vmem [resolvable:$true] %s260
          %266 = dma.hbm_to_vmem [thread:$0]  %s3, 3072, %s261, [#allocation4], 192, 192, 12
        $region16: #{tpu_custom_call.1} parent=11 // pred_fallthru
          _
        // Predicated region
        $region17: #{tpu_custom_call.1} parent=11 // pred_check
          %p267 = pneg %p155
        $region18: #{tpu_custom_call.1} parent=11 // pred_check_branch
          %269 = sbr.rel (%p267) target = $region20
        $region19: #{tpu_custom_call.1} parent=11 // pred_region
          _
        $region20: #{tpu_custom_call.1} parent=11 // pred_fallthru
          _
      $region12: #{tpu_custom_call.1} parent=5 // pred_fallthru
        _
      %p270 = scmp.lt.s32.totalorder %s21, 4
      // Predicated region
      $region21: #{tpu_custom_call.1} parent=5 // pred_check
        %p271 = pneg %p270
      $region22: #{tpu_custom_call.1} parent=5 // pred_check_branch
        %273 = sbr.rel (%p271) target = $region24
      $region23: #{tpu_custom_call.1} parent=5 // pred_region
        // Predicated region
        $region25: #{tpu_custom_call.1} parent=23 // pred_check
          %p274 = pneg %p55
        $region26: #{tpu_custom_call.1} parent=23 // pred_check_branch
          %276 = sbr.rel (%p274) target = $region28
        $region27: #{tpu_custom_call.1} parent=23 // pred_region
          %s277 = sand.u32 %s45, 1
          %s278 = sand.u32 %s45, 1
          %s279 = smul.addr %s278, 128
          %s280 = scalar_lea.vmem [#allocation2], %s279
          %s281 = smul.addr %s28, 32
          %s282 = sadd.s32 %s29, %s281
          %s283 = smul.addr %s282, 8
          %s284 = scalar_lea.vmem %s0, %s283
          // Predicated region
          $region29: #{tpu_custom_call.1} parent=27 // pred_check
            _
          $region30: #{tpu_custom_call.1} parent=27 // pred_check_branch
            %286 = sbr.rel (0) target = $region32
          $region31: #{tpu_custom_call.1} parent=27 // pred_region
            // Predicated region
            $region33: #{tpu_custom_call.1} parent=31 // pred_check
              _
            $region34: #{tpu_custom_call.1} parent=31 // pred_check_branch
              %288 = sbr.rel (0) target = $region36
            $region35: #{tpu_custom_call.1} parent=31 // pred_region
              // Predicated region
              $region48: #{tpu_custom_call.1} parent=35 // pred_check
                _
              $region49: #{tpu_custom_call.1} parent=35 // pred_check_branch
                %333 = sbr.rel (0) target = $region51
              $region50: #{tpu_custom_call.1} parent=35 // pred_region
                loop: start=0, step=1, limit=1
                $region52: #{tpu_custom_call.1} parent=50 // loop_pre_header
                  _
                $region53: #{tpu_custom_call.1} parent=50 // loop_header
                  %s335 = sphi 0, %s339
                  %p336 = scmp.ge.s32.totalorder %s335, 1
                  %s340 = sphi %s284, %s284
                  %s341 = sphi %s280, %s280
                $region54: #{tpu_custom_call.1} parent=50 // loop_header_branch
                  %338 = sbr.rel (%p336) target = $region58
                $region55: #{tpu_custom_call.1} parent=50 // loop_body
                  %v342 = vld [vmem:[%s340] sm:$0xff]
                  %343 = vst [vmem:[%s341] sm:$0xff] %v342
                  %v344 = vld [vmem:[%s340 + $0x10] sm:$0xff]
                  %345 = vst [vmem:[%s341 + $0x8] sm:$0xff] %v344
                  %v346 = vld [vmem:[%s340 + $0x20] sm:$0xff]
                  %347 = vst [vmem:[%s341 + $0x10] sm:$0xff] %v346
                  %v348 = vld [vmem:[%s340 + $0x30] sm:$0xff]
                  %349 = vst [vmem:[%s341 + $0x18] sm:$0xff] %v348
                  %v350 = vld [vmem:[%s340 + $0x40] sm:$0xff]
                  %351 = vst [vmem:[%s341 + $0x20] sm:$0xff] %v350
                  %v352 = vld [vmem:[%s340 + $0x50] sm:$0xff]
                  %353 = vst [vmem:[%s341 + $0x28] sm:$0xff] %v352
                  %v354 = vld [vmem:[%s340 + $0x60] sm:$0xff]
                  %355 = vst [vmem:[%s341 + $0x30] sm:$0xff] %v354
                  %v356 = vld [vmem:[%s340 + $0x70] sm:$0xff]
                  %357 = vst [vmem:[%s341 + $0x38] sm:$0xff] %v356
                  %v358 = vld [vmem:[%s340 + $0x80] sm:$0xff]
                  %359 = vst [vmem:[%s341 + $0x40] sm:$0xff] %v358
                  %v360 = vld [vmem:[%s340 + $0x90] sm:$0xff]
                  %361 = vst [vmem:[%s341 + $0x48] sm:$0xff] %v360
                  %v362 = vld [vmem:[%s340 + $0xa0] sm:$0xff]
                  %363 = vst [vmem:[%s341 + $0x50] sm:$0xff] %v362
                  %v364 = vld [vmem:[%s340 + $0xb0] sm:$0xff]
                  %365 = vst [vmem:[%s341 + $0x58] sm:$0xff] %v364
                  %v366 = vld [vmem:[%s340 + $0xc0] sm:$0xff]
                  %367 = vst [vmem:[%s341 + $0x60] sm:$0xff] %v366
                  %v368 = vld [vmem:[%s340 + $0xd0] sm:$0xff]
                  %369 = vst [vmem:[%s341 + $0x68] sm:$0xff] %v368
                  %v370 = vld [vmem:[%s340 + $0xe0] sm:$0xff]
                  %371 = vst [vmem:[%s341 + $0x70] sm:$0xff] %v370
                  %v372 = vld [vmem:[%s340 + $0xf0] sm:$0xff]
                  %373 = vst [vmem:[%s341 + $0x78] sm:$0xff] %v372
                $region56: #{tpu_custom_call.1} parent=50 // loop_footer
                  %s339 = sadd.s32 1, %s335
                $region57: #{tpu_custom_call.1} parent=50 // loop_footer_branch
                  %334 = sbr.rel target = $region53
                $region58: #{tpu_custom_call.1} parent=50 // loop_exit
                  _
              $region51: #{tpu_custom_call.1} parent=35 // pred_fallthru
                _
              // Predicated region
              $region59: #{tpu_custom_call.1} parent=35 // pred_check
                _
              $region60: #{tpu_custom_call.1} parent=35 // pred_check_branch
                %375 = sbr.rel target = $region62
              $region61: #{tpu_custom_call.1} parent=35 // pred_region
                _
              $region62: #{tpu_custom_call.1} parent=35 // pred_fallthru
                _
            $region36: #{tpu_custom_call.1} parent=31 // pred_fallthru
              _
            // Predicated region
            $region37: #{tpu_custom_call.1} parent=31 // pred_check
              _
            $region38: #{tpu_custom_call.1} parent=31 // pred_check_branch
              %290 = sbr.rel target = $region40
            $region39: #{tpu_custom_call.1} parent=31 // pred_region
              loop: start=0, step=1, limit=1
              $region41: #{tpu_custom_call.1} parent=39 // loop_pre_header
                _
              $region42: #{tpu_custom_call.1} parent=39 // loop_header
                %s293 = sphi 0, %s297
                %p294 = scmp.ge.s32.totalorder %s293, 1
                %s298 = sphi %s284, %s284
                %s299 = sphi %s280, %s280
              $region43: #{tpu_custom_call.1} parent=39 // loop_header_branch
                %296 = sbr.rel (%p294) target = $region47
              $region44: #{tpu_custom_call.1} parent=39 // loop_body
                %v300 = vld [vmem:[%s298] sm:$0xff]
                %301 = vst [vmem:[%s299] sm:$0xff] %v300
                %v302 = vld [vmem:[%s298 + $0x10] sm:$0xff]
                %303 = vst [vmem:[%s299 + $0x8] sm:$0xff] %v302
                %v304 = vld [vmem:[%s298 + $0x20] sm:$0xff]
                %305 = vst [vmem:[%s299 + $0x10] sm:$0xff] %v304
                %v306 = vld [vmem:[%s298 + $0x30] sm:$0xff]
                %307 = vst [vmem:[%s299 + $0x18] sm:$0xff] %v306
                %v308 = vld [vmem:[%s298 + $0x40] sm:$0xff]
                %309 = vst [vmem:[%s299 + $0x20] sm:$0xff] %v308
                %v310 = vld [vmem:[%s298 + $0x50] sm:$0xff]
                %311 = vst [vmem:[%s299 + $0x28] sm:$0xff] %v310
                %v312 = vld [vmem:[%s298 + $0x60] sm:$0xff]
                %313 = vst [vmem:[%s299 + $0x30] sm:$0xff] %v312
                %v314 = vld [vmem:[%s298 + $0x70] sm:$0xff]
                %315 = vst [vmem:[%s299 + $0x38] sm:$0xff] %v314
                %v316 = vld [vmem:[%s298 + $0x80] sm:$0xff]
                %317 = vst [vmem:[%s299 + $0x40] sm:$0xff] %v316
                %v318 = vld [vmem:[%s298 + $0x90] sm:$0xff]
                %319 = vst [vmem:[%s299 + $0x48] sm:$0xff] %v318
                %v320 = vld [vmem:[%s298 + $0xa0] sm:$0xff]
                %321 = vst [vmem:[%s299 + $0x50] sm:$0xff] %v320
                %v322 = vld [vmem:[%s298 + $0xb0] sm:$0xff]
                %323 = vst [vmem:[%s299 + $0x58] sm:$0xff] %v322
                %v324 = vld [vmem:[%s298 + $0xc0] sm:$0xff]
                %325 = vst [vmem:[%s299 + $0x60] sm:$0xff] %v324
                %v326 = vld [vmem:[%s298 + $0xd0] sm:$0xff]
                %327 = vst [vmem:[%s299 + $0x68] sm:$0xff] %v326
                %v328 = vld [vmem:[%s298 + $0xe0] sm:$0xff]
                %329 = vst [vmem:[%s299 + $0x70] sm:$0xff] %v328
                %v330 = vld [vmem:[%s298 + $0xf0] sm:$0xff]
                %331 = vst [vmem:[%s299 + $0x78] sm:$0xff] %v330
              $region45: #{tpu_custom_call.1} parent=39 // loop_footer
                %s297 = sadd.s32 1, %s293
              $region46: #{tpu_custom_call.1} parent=39 // loop_footer_branch
                %292 = sbr.rel target = $region42
              $region47: #{tpu_custom_call.1} parent=39 // loop_exit
                _
            $region40: #{tpu_custom_call.1} parent=31 // pred_fallthru
              _
          $region32: #{tpu_custom_call.1} parent=27 // pred_fallthru
            _
          %376 = vnop
        $region28: #{tpu_custom_call.1} parent=23 // pred_fallthru
          _
        // Predicated region
        $region63: #{tpu_custom_call.1} parent=23 // pred_check
          %p377 = pneg %p81
        $region64: #{tpu_custom_call.1} parent=23 // pred_check_branch
          %379 = sbr.rel (%p377) target = $region66
        $region65: #{tpu_custom_call.1} parent=23 // pred_region
          %p380 = scmp.lt.s32.totalorder %s28, 1
          %s381 = scalar_select %p380, %s28, 1
          %s382 = smul.addr %s381, 16
          %s383 = smul.addr %s382, 8
          %s384 = scalar_lea.vmem %s1, %s383
        $region66: #{tpu_custom_call.1} parent=23 // pred_fallthru
          _
        // Predicated region
        $region67: #{tpu_custom_call.1} parent=23 // pred_check
          %p385 = pneg %p107
        $region68: #{tpu_custom_call.1} parent=23 // pred_check_branch
          %387 = sbr.rel (%p385) target = $region70
        $region69: #{tpu_custom_call.1} parent=23 // pred_region
          %p388 = scmp.lt.s32.totalorder %s28, 1
          %s389 = scalar_select %p388, %s28, 1
          %s390 = smul.addr %s389, 16
          %s391 = smul.addr %s390, 8
          %s392 = scalar_lea.vmem %s2, %s391
        $region70: #{tpu_custom_call.1} parent=23 // pred_fallthru
          _
      $region24: #{tpu_custom_call.1} parent=5 // pred_fallthru
        _
      %p393 = scmp.le.s32.totalorder 1, %s21
      %p394 = scmp.lt.s32.totalorder %s21, 5
      %p395 = pnand %p393, %p394
      %p396 = pneg %p395
      // Predicated region
      $region71: #{tpu_custom_call.1} parent=5 // pred_check
        _
      $region72: #{tpu_custom_call.1} parent=5 // pred_check_branch
        %398 = sbr.rel (%p395) target = $region74
      $region73: #{tpu_custom_call.1} parent=5 // pred_region
        %s399 = ssub.s32 %s21, 1
        %s400 = sand.u32 %s48, 1
        %s401 = sand.u32 %s48, 1
        %s402 = smul.addr %s401, 128
        %s403 = scalar_lea.vmem [#allocation2], %s402
        // Predicated region
        $region75: #{tpu_custom_call.1} parent=73 // pred_check
          %p404 = pneg %p61
        $region76: #{tpu_custom_call.1} parent=73 // pred_check_branch
          %406 = sbr.rel (%p404) target = $region78
        $region77: #{tpu_custom_call.1} parent=73 // pred_region
          _
        $region78: #{tpu_custom_call.1} parent=73 // pred_fallthru
          _
        // Predicated region
        $region79: #{tpu_custom_call.1} parent=73 // pred_check
          %p407 = pneg %p134
        $region80: #{tpu_custom_call.1} parent=73 // pred_check_branch
          %409 = sbr.rel (%p407) target = $region82
        $region81: #{tpu_custom_call.1} parent=73 // pred_region
          %410 = dma.done [#allocation4], 3072
        $region82: #{tpu_custom_call.1} parent=73 // pred_fallthru
          _
        %s411 = sand.u32 %s48, 1
        %s412 = sand.u32 %s48, 1
        %s413 = smul.addr %s412, 128
        %s414 = scalar_lea.vmem [#allocation2], %s413
        %p415 = pneg %p61
        %p416 = pneg %p58
        %p417 = scmp.lt.s32.totalorder %s30, 1
        %s418 = scalar_select %p417, %s30, 1
        %s419 = smul.addr %s418, 16
        %s420 = smul.addr %s419, 8
        %s421 = scalar_lea.vmem %s1, %s420
        %p422 = pneg %p87
        %p423 = pneg %p84
        %p424 = scmp.lt.s32.totalorder %s30, 1
        %s425 = scalar_select %p424, %s30, 1
        %s426 = smul.addr %s425, 16
        %s427 = smul.addr %s426, 8
        %s428 = scalar_lea.vmem %s2, %s427
        %p429 = pneg %p113
        %p430 = pneg %p110
        %p431 = pneg %p134
        %p432 = pneg %p131
        %p433 = pneg %p155
        %p434 = pneg %p152
        %p435 = pneg %p183
        %p436 = pneg %p180
        %s437 = sand.u32 %s170, 1
        %s438 = scalar_lea.sflag [#allocation5], %s437
        %s439 = sand.u32 %s170, 1
        %s440 = smul.addr %s439, 64
        %s441 = scalar_lea.vmem [#allocation6], %s440
        %p442 = pneg %p211
        %p443 = pneg %p208
        %s444 = sand.u32 %s26, 1
        %s445 = scalar_lea.sflag [#allocation8], %s444
        %s446 = sand.u32 %s198, 1
        %s447 = smul.addr %s446, 64
        %s448 = scalar_lea.vmem [#allocation7], %s447
        %p449 = pneg %p239
        %p450 = pneg %p236
        %s451 = sand.u32 %s26, 1
        %s452 = scalar_lea.sflag [#allocation8], %s451
        %s453 = sand.u32 %s226, 1
        %s454 = smul.addr %s453, 64
        %s455 = scalar_lea.vmem [#allocation9], %s454
        %p456 = scmp.lt.s32.totalorder %s30, 1
        %s457 = scalar_select %p456, %s30, 1
        %s458 = smul.addr %s457, 16
        %s459 = smul.addr %s458, 8
        %s460 = scalar_lea.vmem %s1, %s459
        %p461 = scmp.lt.s32.totalorder %s30, 1
        %s462 = scalar_select %p461, %s30, 1
        %s463 = smul.addr %s462, 16
        %s464 = smul.addr %s463, 8
        %s465 = scalar_lea.vmem %s2, %s464
        %s466 = smul.u32 16, %s31
        %s467 = smul.u32 16, %s31
        %s468 = smul.u32 16, %s31
        %v470 = vld [vmem:[%s403] sm:$0xff]
        %v471 = vld [vmem:[%s403 + $0x8] sm:$0xff]
        %v472 = vld [vmem:[%s403 + $0x10] sm:$0xff]
        %v473 = vld [vmem:[%s403 + $0x18] sm:$0xff]
        %v474 = vld [vmem:[%s403 + $0x20] sm:$0xff]
        %v475 = vld [vmem:[%s403 + $0x28] sm:$0xff]
        %v476 = vld [vmem:[%s403 + $0x30] sm:$0xff]
        %v477 = vld [vmem:[%s403 + $0x38] sm:$0xff]
        %v478 = vld [vmem:[%s403 + $0x40] sm:$0xff]
        %v479 = vld [vmem:[%s403 + $0x48] sm:$0xff]
        %v480 = vld [vmem:[%s403 + $0x50] sm:$0xff]
        %v481 = vld [vmem:[%s403 + $0x58] sm:$0xff]
        %v482 = vld [vmem:[%s403 + $0x60] sm:$0xff]
        %v483 = vld [vmem:[%s403 + $0x68] sm:$0xff]
        %v484 = vld [vmem:[%s403 + $0x70] sm:$0xff]
        %v485 = vld [vmem:[%s403 + $0x78] sm:$0xff]
        %v486 = vld [vmem:[%s460] sm:$0xff]
        %v487 = vld [vmem:[%s460 + $0x8] sm:$0xff]
        %v488 = vld [vmem:[%s460 + $0x10] sm:$0xff]
        %v489 = vld [vmem:[%s460 + $0x18] sm:$0xff]
        %v490 = vld [vmem:[%s460 + $0x20] sm:$0xff]
        %v491 = vld [vmem:[%s460 + $0x28] sm:$0xff]
        %v492 = vld [vmem:[%s460 + $0x30] sm:$0xff]
        %v493 = vld [vmem:[%s460 + $0x38] sm:$0xff]
        %v494 = vld [vmem:[%s460 + $0x40] sm:$0xff]
        %v495 = vld [vmem:[%s460 + $0x48] sm:$0xff]
        %v496 = vld [vmem:[%s460 + $0x50] sm:$0xff]
        %v497 = vld [vmem:[%s460 + $0x58] sm:$0xff]
        %v498 = vld [vmem:[%s460 + $0x60] sm:$0xff]
        %v499 = vld [vmem:[%s460 + $0x68] sm:$0xff]
        %v500 = vld [vmem:[%s460 + $0x70] sm:$0xff]
        %v501 = vld [vmem:[%s460 + $0x78] sm:$0xff]
        %503 = vset.pattern.permute.xlu0 0
        %504 = vperm.xlu0 %503, %v486
        %v505 = vpop.permute.xlu0 %504
        %508 = vset.pattern.permute.xlu0 0
        %509 = vperm.xlu0 %508, %v487
        %v510 = vpop.permute.xlu0 %509
        %513 = vset.pattern.permute.xlu0 0
        %514 = vperm.xlu0 %513, %v488
        %v515 = vpop.permute.xlu0 %514
        %518 = vset.pattern.permute.xlu0 0
        %519 = vperm.xlu0 %518, %v489
        %v520 = vpop.permute.xlu0 %519
        %523 = vset.pattern.permute.xlu0 0
        %524 = vperm.xlu0 %523, %v490
        %v525 = vpop.permute.xlu0 %524
        %528 = vset.pattern.permute.xlu0 0
        %529 = vperm.xlu0 %528, %v491
        %v530 = vpop.permute.xlu0 %529
        %533 = vset.pattern.permute.xlu0 0
        %534 = vperm.xlu0 %533, %v492
        %v535 = vpop.permute.xlu0 %534
        %538 = vset.pattern.permute.xlu0 0
        %539 = vperm.xlu0 %538, %v493
        %v540 = vpop.permute.xlu0 %539
        %543 = vset.pattern.permute.xlu0 0
        %544 = vperm.xlu0 %543, %v494
        %v545 = vpop.permute.xlu0 %544
        %548 = vset.pattern.permute.xlu0 0
        %549 = vperm.xlu0 %548, %v495
        %v550 = vpop.permute.xlu0 %549
        %553 = vset.pattern.permute.xlu0 0
        %554 = vperm.xlu0 %553, %v496
        %v555 = vpop.permute.xlu0 %554
        %558 = vset.pattern.permute.xlu0 0
        %559 = vperm.xlu0 %558, %v497
        %v560 = vpop.permute.xlu0 %559
        %563 = vset.pattern.permute.xlu0 0
        %564 = vperm.xlu0 %563, %v498
        %v565 = vpop.permute.xlu0 %564
        %568 = vset.pattern.permute.xlu0 0
        %569 = vperm.xlu0 %568, %v499
        %v570 = vpop.permute.xlu0 %569
        %573 = vset.pattern.permute.xlu0 0
        %574 = vperm.xlu0 %573, %v500
        %v575 = vpop.permute.xlu0 %574
        %578 = vset.pattern.permute.xlu0 0
        %579 = vperm.xlu0 %578, %v501
        %v580 = vpop.permute.xlu0 %579
        %v582 = vmul.f32 %v470, %v505
        %v583 = vmul.f32 %v471, %v510
        %v584 = vmul.f32 %v472, %v515
        %v585 = vmul.f32 %v473, %v520
        %v586 = vmul.f32 %v474, %v525
        %v587 = vmul.f32 %v475, %v530
        %v588 = vmul.f32 %v476, %v535
        %v589 = vmul.f32 %v477, %v540
        %v590 = vmul.f32 %v478, %v545
        %v591 = vmul.f32 %v479, %v550
        %v592 = vmul.f32 %v480, %v555
        %v593 = vmul.f32 %v481, %v560
        %v594 = vmul.f32 %v482, %v565
        %v595 = vmul.f32 %v483, %v570
        %v596 = vmul.f32 %v484, %v575
        %v597 = vmul.f32 %v485, %v580
        %v598 = vld [vmem:[%s465] sm:$0xff]
        %v599 = vld [vmem:[%s465 + $0x8] sm:$0xff]
        %v600 = vld [vmem:[%s465 + $0x10] sm:$0xff]
        %v601 = vld [vmem:[%s465 + $0x18] sm:$0xff]
        %v602 = vld [vmem:[%s465 + $0x20] sm:$0xff]
        %v603 = vld [vmem:[%s465 + $0x28] sm:$0xff]
        %v604 = vld [vmem:[%s465 + $0x30] sm:$0xff]
        %v605 = vld [vmem:[%s465 + $0x38] sm:$0xff]
        %v606 = vld [vmem:[%s465 + $0x40] sm:$0xff]
        %v607 = vld [vmem:[%s465 + $0x48] sm:$0xff]
        %v608 = vld [vmem:[%s465 + $0x50] sm:$0xff]
        %v609 = vld [vmem:[%s465 + $0x58] sm:$0xff]
        %v610 = vld [vmem:[%s465 + $0x60] sm:$0xff]
        %v611 = vld [vmem:[%s465 + $0x68] sm:$0xff]
        %v612 = vld [vmem:[%s465 + $0x70] sm:$0xff]
        %v613 = vld [vmem:[%s465 + $0x78] sm:$0xff]
        %615 = vset.pattern.permute.xlu0 0
        %616 = vperm.xlu0 %615, %v598
        %v617 = vpop.permute.xlu0 %616
        %620 = vset.pattern.permute.xlu0 0
        %621 = vperm.xlu0 %620, %v599
        %v622 = vpop.permute.xlu0 %621
        %625 = vset.pattern.permute.xlu0 0
        %626 = vperm.xlu0 %625, %v600
        %v627 = vpop.permute.xlu0 %626
        %630 = vset.pattern.permute.xlu0 0
        %631 = vperm.xlu0 %630, %v601
        %v632 = vpop.permute.xlu0 %631
        %635 = vset.pattern.permute.xlu0 0
        %636 = vperm.xlu0 %635, %v602
        %v637 = vpop.permute.xlu0 %636
        %640 = vset.pattern.permute.xlu0 0
        %641 = vperm.xlu0 %640, %v603
        %v642 = vpop.permute.xlu0 %641
        %645 = vset.pattern.permute.xlu0 0
        %646 = vperm.xlu0 %645, %v604
        %v647 = vpop.permute.xlu0 %646
        %650 = vset.pattern.permute.xlu0 0
        %651 = vperm.xlu0 %650, %v605
        %v652 = vpop.permute.xlu0 %651
        %655 = vset.pattern.permute.xlu0 0
        %656 = vperm.xlu0 %655, %v606
        %v657 = vpop.permute.xlu0 %656
        %660 = vset.pattern.permute.xlu0 0
        %661 = vperm.xlu0 %660, %v607
        %v662 = vpop.permute.xlu0 %661
        %665 = vset.pattern.permute.xlu0 0
        %666 = vperm.xlu0 %665, %v608
        %v667 = vpop.permute.xlu0 %666
        %670 = vset.pattern.permute.xlu0 0
        %671 = vperm.xlu0 %670, %v609
        %v672 = vpop.permute.xlu0 %671
        %675 = vset.pattern.permute.xlu0 0
        %676 = vperm.xlu0 %675, %v610
        %v677 = vpop.permute.xlu0 %676
        %680 = vset.pattern.permute.xlu0 0
        %681 = vperm.xlu0 %680, %v611
        %v682 = vpop.permute.xlu0 %681
        %685 = vset.pattern.permute.xlu0 0
        %686 = vperm.xlu0 %685, %v612
        %v687 = vpop.permute.xlu0 %686
        %690 = vset.pattern.permute.xlu0 0
        %691 = vperm.xlu0 %690, %v613
        %v692 = vpop.permute.xlu0 %691
        %v694 = vadd.f32 %v582, %v617
        %v695 = vadd.f32 %v583, %v622
        %v696 = vadd.f32 %v584, %v627
        %v697 = vadd.f32 %v585, %v632
        %v698 = vadd.f32 %v586, %v637
        %v699 = vadd.f32 %v587, %v642
        %v700 = vadd.f32 %v588, %v647
        %v701 = vadd.f32 %v589, %v652
        %v702 = vadd.f32 %v590, %v657
        %v703 = vadd.f32 %v591, %v662
        %v704 = vadd.f32 %v592, %v667
        %v705 = vadd.f32 %v593, %v672
        %v706 = vadd.f32 %v594, %v677
        %v707 = vadd.f32 %v595, %v682
        %v708 = vadd.f32 %v596, %v687
        %v709 = vadd.f32 %v597, %v692
        %v710 = vpack.c.bf16 %v695, %v694
        %v711 = vpack.c.bf16 %v697, %v696
        %v712 = vpack.c.bf16 %v699, %v698
        %v713 = vpack.c.bf16 %v701, %v700
        %v714 = vpack.c.bf16 %v703, %v702
        %v715 = vpack.c.bf16 %v705, %v704
        %v716 = vpack.c.bf16 %v707, %v706
        %v717 = vpack.c.bf16 %v709, %v708
        %v718 = vld [vmem:[#allocation3] sm:$0xff]
        %v719 = vld [vmem:[#allocation3 + $0x8] sm:$0xf]
        %v720 = vld [vmem:[#allocation3 + $0xc] sm:$0xff]
        %v721 = vld [vmem:[#allocation3 + $0x14] sm:$0xf]
        %v722 = vld [vmem:[#allocation3 + $0x18] sm:$0xff]
        %v723 = vld [vmem:[#allocation3 + $0x20] sm:$0xf]
        %v724 = vld [vmem:[#allocation3 + $0x24] sm:$0xff]
        %v725 = vld [vmem:[#allocation3 + $0x2c] sm:$0xf]
        %v726 = vld [vmem:[#allocation3 + $0x30] sm:$0xff]
        %v727 = vld [vmem:[#allocation3 + $0x38] sm:$0xf]
        %v728 = vld [vmem:[#allocation3 + $0x3c] sm:$0xff]
        %v729 = vld [vmem:[#allocation3 + $0x44] sm:$0xf]
        %v730 = vld [vmem:[#allocation3 + $0x48] sm:$0xff]
        %v731 = vld [vmem:[#allocation3 + $0x50] sm:$0xf]
        %v732 = vld [vmem:[#allocation3 + $0x54] sm:$0xff]
        %v733 = vld [vmem:[#allocation3 + $0x5c] sm:$0xf]
        %v734 = vld [vmem:[#allocation3 + $0x60] sm:$0xff]
        %v735 = vld [vmem:[#allocation3 + $0x68] sm:$0xf]
        %v736 = vld [vmem:[#allocation3 + $0x6c] sm:$0xff]
        %v737 = vld [vmem:[#allocation3 + $0x74] sm:$0xf]
        %v738 = vld [vmem:[#allocation3 + $0x78] sm:$0xff]
        %v739 = vld [vmem:[#allocation3 + $0x80] sm:$0xf]
        %v740 = vld [vmem:[#allocation3 + $0x84] sm:$0xff]
        %v741 = vld [vmem:[#allocation3 + $0x8c] sm:$0xf]
        %v742 = vld [vmem:[#allocation3 + $0x90] sm:$0xff]
        %v743 = vld [vmem:[#allocation3 + $0x98] sm:$0xf]
        %v744 = vld [vmem:[#allocation3 + $0x9c] sm:$0xff]
        %v745 = vld [vmem:[#allocation3 + $0xa4] sm:$0xf]
        %v746 = vld [vmem:[#allocation3 + $0xa8] sm:$0xff]
        %v747 = vld [vmem:[#allocation3 + $0xb0] sm:$0xf]
        %v748 = vld [vmem:[#allocation3 + $0xb4] sm:$0xff]
        %v749 = vld [vmem:[#allocation3 + $0xbc] sm:$0xf]
        %v750 = vld [vmem:[%s4] sm:$0x7]
        %v752 = vlaneseq
        %v753 = vshrl.u32 %v752, 7
        %v754 = vsub.s32 0, %v753
        %v755 = vrot.slane %v750, %v754
        %v756 = vlaneseq
        %v757 = vshrl.u32 %v756, 7
        %v758 = vsub.s32 1, %v757
        %v759 = vrot.slane %v750, %v758
        %v760 = vlaneseq
        %v761 = vshrl.u32 %v760, 7
        %v762 = vsub.s32 2, %v761
        %v763 = vrot.slane %v750, %v762
        %767 = vxpose.xlu0.c.b16.start [1/8] %v710, 128
        %768 = vxpose.xlu0.c.b16.cont [2/8] %v711, 128
        %769 = vxpose.xlu0.c.b16.cont [3/8] %v712, 128
        %770 = vxpose.xlu0.c.b16.cont [4/8] %v713, 128
        %771 = vxpose.xlu0.c.b16.cont [5/8] %v714, 128
        %772 = vxpose.xlu0.c.b16.cont [6/8] %v715, 128
        %773 = vxpose.xlu0.c.b16.cont [7/8] %v716, 128
        %774 = vxpose.xlu0.c.b16.end [8/8] %v717, 128
        %v775 = vpop.trf.xlu0
        %v776 = vpop.trf.xlu0
        %v777 = vpop.trf.xlu0
        %v778 = vpop.trf.xlu0
        %v779 = vpop.trf.xlu0
        %v780 = vpop.trf.xlu0
        %v781 = vpop.trf.xlu0
        %v782 = vpop.trf.xlu0
        %v815 = vunpack.c.l.b16 %v718
        %v816 = vunpack.c.h.b16 %v718
        %v817 = vunpack.c.l.b16 %v719
        %v818 = vunpack.c.l.b16 %v720
        %v819 = vunpack.c.h.b16 %v720
        %v820 = vunpack.c.l.b16 %v721
        %v821 = vunpack.c.l.b16 %v722
        %v822 = vunpack.c.h.b16 %v722
        %v823 = vunpack.c.l.b16 %v723
        %v824 = vunpack.c.l.b16 %v724
        %v825 = vunpack.c.h.b16 %v724
        %v826 = vunpack.c.l.b16 %v725
        %v827 = vunpack.c.l.b16 %v726
        %v828 = vunpack.c.h.b16 %v726
        %v829 = vunpack.c.l.b16 %v727
        %v830 = vunpack.c.l.b16 %v728
        %v831 = vunpack.c.h.b16 %v728
        %v832 = vunpack.c.l.b16 %v729
        %v833 = vunpack.c.l.b16 %v730
        %v834 = vunpack.c.h.b16 %v730
        %v835 = vunpack.c.l.b16 %v731
        %v836 = vunpack.c.l.b16 %v732
        %v837 = vunpack.c.h.b16 %v732
        %v838 = vunpack.c.l.b16 %v733
        %v839 = vunpack.c.l.b16 %v734
        %v840 = vunpack.c.h.b16 %v734
        %v841 = vunpack.c.l.b16 %v735
        %v842 = vunpack.c.l.b16 %v736
        %v843 = vunpack.c.h.b16 %v736
        %v844 = vunpack.c.l.b16 %v737
        %v845 = vunpack.c.l.b16 %v738
        %v846 = vunpack.c.h.b16 %v738
        %v847 = vunpack.c.l.b16 %v739
        %v848 = vunpack.c.l.b16 %v740
        %v849 = vunpack.c.h.b16 %v740
        %v850 = vunpack.c.l.b16 %v741
        %v851 = vunpack.c.l.b16 %v742
        %v852 = vunpack.c.h.b16 %v742
        %v853 = vunpack.c.l.b16 %v743
        %v854 = vunpack.c.l.b16 %v744
        %v855 = vunpack.c.h.b16 %v744
        %v856 = vunpack.c.l.b16 %v745
        %v857 = vunpack.c.l.b16 %v746
        %v858 = vunpack.c.h.b16 %v746
        %v859 = vunpack.c.l.b16 %v747
        %v860 = vunpack.c.l.b16 %v748
        %v861 = vunpack.c.h.b16 %v748
        %v862 = vunpack.c.l.b16 %v749
        %v863 = vpack.c.b16 %v818, %v815
        %v864 = vpack.c.b16 %v819, %v816
        %v865 = vpack.c.b16 %v820, %v817
        %v866 = vpack.c.b16 %v824, %v821
        %v867 = vpack.c.b16 %v825, %v822
        %v868 = vpack.c.b16 %v826, %v823
        %v869 = vpack.c.b16 %v830, %v827
        %v870 = vpack.c.b16 %v831, %v828
        %v871 = vpack.c.b16 %v832, %v829
        %v872 = vpack.c.b16 %v836, %v833
        %v873 = vpack.c.b16 %v837, %v834
        %v874 = vpack.c.b16 %v838, %v835
        %v875 = vpack.c.b16 %v842, %v839
        %v876 = vpack.c.b16 %v843, %v840
        %v877 = vpack.c.b16 %v844, %v841
        %v878 = vpack.c.b16 %v848, %v845
        %v879 = vpack.c.b16 %v849, %v846
        %v880 = vpack.c.b16 %v850, %v847
        %v881 = vpack.c.b16 %v854, %v851
        %v882 = vpack.c.b16 %v855, %v852
        %v883 = vpack.c.b16 %v856, %v853
        %v884 = vpack.c.b16 %v860, %v857
        %v885 = vpack.c.b16 %v861, %v858
        %v886 = vpack.c.b16 %v862, %v859
        %911 = vmatprep.subr.bf16.mxu0 %v864
        %912 = vmatpush1.bf16.msra.mxu0 %v863
        %913 = vmatprep.subr.bf16.mxu0 %v867
        %914 = vmatpush1.bf16.msra.mxu0 %v866
        %915 = vmatprep.subr.bf16.mxu0 %v870
        %916 = vmatpush1.bf16.msra.mxu0 %v869
        %917 = vmatprep.subr.bf16.mxu0 %v873
        %918 = vmatpush1.bf16.msra.mxu0 %v872
        %919 = vmatprep.subr.bf16.mxu0 %v876
        %920 = vmatpush1.bf16.msra.mxu0 %v875
        %921 = vmatprep.subr.bf16.mxu0 %v879
        %922 = vmatpush1.bf16.msra.mxu0 %v878
        %923 = vmatprep.subr.bf16.mxu0 %v882
        %924 = vmatpush1.bf16.msra.mxu0 %v881
        %925 = vmatprep.subr.bf16.mxu0 %v885
        %926 = vmatpush1.bf16.msra.mxu0 %v884
        %927 = vmatprep.subr.bf16.mxu0 0
        %928 = vmatpush1.bf16.msra.mxu0 0
        %929 = vmatprep.subr.bf16.mxu0 0
        %930 = vmatpush1.bf16.msra.mxu0 0
        %931 = vmatprep.subr.bf16.mxu0 0
        %932 = vmatpush1.bf16.msra.mxu0 0
        %933 = vmatprep.subr.bf16.mxu0 0
        %934 = vmatpush1.bf16.msra.mxu0 0
        %935 = vmatprep.subr.bf16.mxu0 0
        %936 = vmatpush1.bf16.msra.mxu0 0
        %937 = vmatprep.subr.bf16.mxu0 0
        %938 = vmatpush1.bf16.msra.mxu0 0
        %939 = vmatprep.subr.bf16.mxu0 0
        %940 = vmatpush1.bf16.msra.mxu0 0
        %941 = vmatprep.subr.bf16.mxu0 0
        %942 = vmatpush1.bf16.msra.mxu0 0
        %943 = vmatprep.mubr.bf16.mxu0 0
        %944 = vmatmul.mubr.bf16.gmra.mrb[0].mxu0 %v775
        %v945 = vpop.f32.mrb[0].mxu0
        %v946 = vadd.f32 %v755, %v945
        %v947 = vpop.f32.mrb[0].mxu0
        %v948 = vadd.f32 %v759, %v947
        %v949 = vpop.f32.mrb[0].mxu0
        %v950 = vadd.f32 %v755, %v949
        %v951 = vpop.f32.mrb[0].mxu0
        %v952 = vadd.f32 %v759, %v951
        %953 = vmatprep.mubr.bf16.mxu0 0
        %954 = vmatmul.mubr.bf16.gmra.mrb[0].mxu0 %v776
        %v955 = vpop.f32.mrb[0].mxu0
        %v956 = vadd.f32 %v755, %v955
        %v957 = vpop.f32.mrb[0].mxu0
        %v958 = vadd.f32 %v759, %v957
        %v959 = vpop.f32.mrb[0].mxu0
        %v960 = vadd.f32 %v755, %v959
        %v961 = vpop.f32.mrb[0].mxu0
        %v962 = vadd.f32 %v759, %v961
        %963 = vmatprep.mubr.bf16.mxu0 0
        %964 = vmatmul.mubr.bf16.gmra.mrb[0].mxu0 %v777
        %v965 = vpop.f32.mrb[0].mxu0
        %v966 = vadd.f32 %v755, %v965
        %v967 = vpop.f32.mrb[0].mxu0
        %v968 = vadd.f32 %v759, %v967
        %v969 = vpop.f32.mrb[0].mxu0
        %v970 = vadd.f32 %v755, %v969
        %v971 = vpop.f32.mrb[0].mxu0
        %v972 = vadd.f32 %v759, %v971
        %973 = vmatprep.mubr.bf16.mxu0 0
        %974 = vmatmul.mubr.bf16.gmra.mrb[0].mxu0 %v778
        %v975 = vpop.f32.mrb[0].mxu0
        %v976 = vadd.f32 %v755, %v975
        %v977 = vpop.f32.mrb[0].mxu0
        %v978 = vadd.f32 %v759, %v977
        %v979 = vpop.f32.mrb[0].mxu0
        %v980 = vadd.f32 %v755, %v979
        %v981 = vpop.f32.mrb[0].mxu0
        %v982 = vadd.f32 %v759, %v981
        %983 = vmatprep.mubr.bf16.mxu0 0
        %984 = vmatmul.mubr.bf16.gmra.mrb[0].mxu0 %v779
        %v985 = vpop.f32.mrb[0].mxu0
        %v986 = vadd.f32 %v755, %v985
        %v987 = vpop.f32.mrb[0].mxu0
        %v988 = vadd.f32 %v759, %v987
        %v989 = vpop.f32.mrb[0].mxu0
        %v990 = vadd.f32 %v755, %v989
        %v991 = vpop.f32.mrb[0].mxu0
        %v992 = vadd.f32 %v759, %v991
        %993 = vmatprep.mubr.bf16.mxu0 0
        %994 = vmatmul.mubr.bf16.gmra.mrb[0].mxu0 %v780
        %v995 = vpop.f32.mrb[0].mxu0
        %v996 = vadd.f32 %v755, %v995
        %v997 = vpop.f32.mrb[0].mxu0
        %v998 = vadd.f32 %v759, %v997
        %v999 = vpop.f32.mrb[0].mxu0
        %v1000 = vadd.f32 %v755, %v999
        %v1001 = vpop.f32.mrb[0].mxu0
        %v1002 = vadd.f32 %v759, %v1001
        %1003 = vmatprep.mubr.bf16.mxu0 0
        %1004 = vmatmul.mubr.bf16.gmra.mrb[0].mxu0 %v781
        %v1005 = vpop.f32.mrb[0].mxu0
        %v1006 = vadd.f32 %v755, %v1005
        %v1007 = vpop.f32.mrb[0].mxu0
        %v1008 = vadd.f32 %v759, %v1007
        %v1009 = vpop.f32.mrb[0].mxu0
        %v1010 = vadd.f32 %v755, %v1009
        %v1011 = vpop.f32.mrb[0].mxu0
        %v1012 = vadd.f32 %v759, %v1011
        %1013 = vmatprep.mubr.bf16.mxu0 0
        %1014 = vmatmul.mubr.bf16.gmra.mrb[0].mxu0 %v782
        %v1015 = vpop.f32.mrb[0].mxu0
        %v1016 = vadd.f32 %v755, %v1015
        %v1017 = vpop.f32.mrb[0].mxu0
        %v1018 = vadd.f32 %v759, %v1017
        %v1019 = vpop.f32.mrb[0].mxu0
        %v1020 = vadd.f32 %v755, %v1019
        %v1021 = vpop.f32.mrb[0].mxu0
        %v1022 = vadd.f32 %v759, %v1021
        %1023 = vdwg.mxu0
        %1024 = vmatprep.subr.bf16.mxu0 0
        %1025 = vmatpush1.bf16.msra.mxu0 %v865
        %1026 = vmatprep.subr.bf16.mxu0 0
        %1027 = vmatpush1.bf16.msra.mxu0 %v868
        %1028 = vmatprep.subr.bf16.mxu0 0
        %1029 = vmatpush1.bf16.msra.mxu0 %v871
        %1030 = vmatprep.subr.bf16.mxu0 0
        %1031 = vmatpush1.bf16.msra.mxu0 %v874
        %1032 = vmatprep.subr.bf16.mxu0 0
        %1033 = vmatpush1.bf16.msra.mxu0 %v877
        %1034 = vmatprep.subr.bf16.mxu0 0
        %1035 = vmatpush1.bf16.msra.mxu0 %v880
        %1036 = vmatprep.subr.bf16.mxu0 0
        %1037 = vmatpush1.bf16.msra.mxu0 %v883
        %1038 = vmatprep.subr.bf16.mxu0 0
        %1039 = vmatpush1.bf16.msra.mxu0 %v886
        %1040 = vmatprep.subr.bf16.mxu0 0
        %1041 = vmatpush1.bf16.msra.mxu0 0
        %1042 = vmatprep.subr.bf16.mxu0 0
        %1043 = vmatpush1.bf16.msra.mxu0 0
        %1044 = vmatprep.subr.bf16.mxu0 0
        %1045 = vmatpush1.bf16.msra.mxu0 0
        %1046 = vmatprep.subr.bf16.mxu0 0
        %1047 = vmatpush1.bf16.msra.mxu0 0
        %1048 = vmatprep.subr.bf16.mxu0 0
        %1049 = vmatpush1.bf16.msra.mxu0 0
        %1050 = vmatprep.subr.bf16.mxu0 0
        %1051 = vmatpush1.bf16.msra.mxu0 0
        %1052 = vmatprep.subr.bf16.mxu0 0
        %1053 = vmatpush1.bf16.msra.mxu0 0
        %1054 = vmatprep.subr.bf16.mxu0 0
        %1055 = vmatpush1.bf16.msra.mxu0 0
        %1056 = vmatprep.mubr.bf16.mxu0 0
        %1057 = vmatmul.mubr.bf16.gmra.mrb[0].mxu0 %v775
        %v1058 = vpop.f32.mrb[0].mxu0
        %v1059 = vadd.f32 %v763, %v1058
        %v1060 = vpop.f32.mrb[0].mxu0
        %v1061 = vpop.f32.mrb[0].mxu0
        %v1062 = vadd.f32 %v763, %v1061
        %v1063 = vpop.f32.mrb[0].mxu0
        %1064 = vmatprep.mubr.bf16.mxu0 0
        %1065 = vmatmul.mubr.bf16.gmra.mrb[0].mxu0 %v776
        %v1066 = vpop.f32.mrb[0].mxu0
        %v1067 = vadd.f32 %v763, %v1066
        %v1068 = vpop.f32.mrb[0].mxu0
        %v1069 = vpop.f32.mrb[0].mxu0
        %v1070 = vadd.f32 %v763, %v1069
        %v1071 = vpop.f32.mrb[0].mxu0
        %1072 = vmatprep.mubr.bf16.mxu0 0
        %1073 = vmatmul.mubr.bf16.gmra.mrb[0].mxu0 %v777
        %v1074 = vpop.f32.mrb[0].mxu0
        %v1075 = vadd.f32 %v763, %v1074
        %v1076 = vpop.f32.mrb[0].mxu0
        %v1077 = vpop.f32.mrb[0].mxu0
        %v1078 = vadd.f32 %v763, %v1077
        %v1079 = vpop.f32.mrb[0].mxu0
        %1080 = vmatprep.mubr.bf16.mxu0 0
        %1081 = vmatmul.mubr.bf16.gmra.mrb[0].mxu0 %v778
        %v1082 = vpop.f32.mrb[0].mxu0
        %v1083 = vadd.f32 %v763, %v1082
        %v1084 = vpop.f32.mrb[0].mxu0
        %v1085 = vpop.f32.mrb[0].mxu0
        %v1086 = vadd.f32 %v763, %v1085
        %v1087 = vpop.f32.mrb[0].mxu0
        %1088 = vmatprep.mubr.bf16.mxu0 0
        %1089 = vmatmul.mubr.bf16.gmra.mrb[0].mxu0 %v779
        %v1090 = vpop.f32.mrb[0].mxu0
        %v1091 = vadd.f32 %v763, %v1090
        %v1092 = vpop.f32.mrb[0].mxu0
        %v1093 = vpop.f32.mrb[0].mxu0
        %v1094 = vadd.f32 %v763, %v1093
        %v1095 = vpop.f32.mrb[0].mxu0
        %1096 = vmatprep.mubr.bf16.mxu0 0
        %1097 = vmatmul.mubr.bf16.gmra.mrb[0].mxu0 %v780
        %v1098 = vpop.f32.mrb[0].mxu0
        %v1099 = vadd.f32 %v763, %v1098
        %v1100 = vpop.f32.mrb[0].mxu0
        %v1101 = vpop.f32.mrb[0].mxu0
        %v1102 = vadd.f32 %v763, %v1101
        %v1103 = vpop.f32.mrb[0].mxu0
        %1104 = vmatprep.mubr.bf16.mxu0 0
        %1105 = vmatmul.mubr.bf16.gmra.mrb[0].mxu0 %v781
        %v1106 = vpop.f32.mrb[0].mxu0
        %v1107 = vadd.f32 %v763, %v1106
        %v1108 = vpop.f32.mrb[0].mxu0
        %v1109 = vpop.f32.mrb[0].mxu0
        %v1110 = vadd.f32 %v763, %v1109
        %v1111 = vpop.f32.mrb[0].mxu0
        %1112 = vmatprep.mubr.bf16.mxu0 0
        %1113 = vmatmul.mubr.bf16.gmra.mrb[0].mxu0 %v782
        %v1114 = vpop.f32.mrb[0].mxu0
        %v1115 = vadd.f32 %v763, %v1114
        %v1116 = vpop.f32.mrb[0].mxu0
        %v1117 = vpop.f32.mrb[0].mxu0
        %v1118 = vadd.f32 %v763, %v1117
        %v1119 = vpop.f32.mrb[0].mxu0
        %1120 = vdwg.mxu0
        %v1121 = vpack.c.bf16 %v950, %v946
        %v1122 = vpack.c.bf16 %v960, %v956
        %v1123 = vpack.c.bf16 %v970, %v966
        %v1124 = vpack.c.bf16 %v980, %v976
        %v1125 = vpack.c.bf16 %v990, %v986
        %v1126 = vpack.c.bf16 %v1000, %v996
        %v1127 = vpack.c.bf16 %v1010, %v1006
        %v1128 = vpack.c.bf16 %v1020, %v1016
        %v1137 = vunpack.c.l.b16 %v1121
        %v1138 = vunpack.c.h.b16 %v1121
        %v1139 = vunpack.c.l.b16 %v1122
        %v1140 = vunpack.c.h.b16 %v1122
        %v1141 = vunpack.c.l.b16 %v1123
        %v1142 = vunpack.c.h.b16 %v1123
        %v1143 = vunpack.c.l.b16 %v1124
        %v1144 = vunpack.c.h.b16 %v1124
        %v1145 = vunpack.c.l.b16 %v1125
        %v1146 = vunpack.c.h.b16 %v1125
        %v1147 = vunpack.c.l.b16 %v1126
        %v1148 = vunpack.c.h.b16 %v1126
        %v1149 = vunpack.c.l.b16 %v1127
        %v1150 = vunpack.c.h.b16 %v1127
        %v1151 = vunpack.c.l.b16 %v1128
        %v1152 = vunpack.c.h.b16 %v1128
        %v1153 = vpack.c.b16 %v1137, %v1137
        %v1154 = vpack.c.b16 %v1138, %v1138
        %v1155 = vpack.c.b16 %v1139, %v1139
        %v1156 = vpack.c.b16 %v1140, %v1140
        %v1157 = vpack.c.b16 %v1141, %v1141
        %v1158 = vpack.c.b16 %v1142, %v1142
        %v1159 = vpack.c.b16 %v1143, %v1143
        %v1160 = vpack.c.b16 %v1144, %v1144
        %v1161 = vpack.c.b16 %v1145, %v1145
        %v1162 = vpack.c.b16 %v1146, %v1146
        %v1163 = vpack.c.b16 %v1147, %v1147
        %v1164 = vpack.c.b16 %v1148, %v1148
        %v1165 = vpack.c.b16 %v1149, %v1149
        %v1166 = vpack.c.b16 %v1150, %v1150
        %v1167 = vpack.c.b16 %v1151, %v1151
        %v1168 = vpack.c.b16 %v1152, %v1152
        %1185 = vst [vmem:[%s441] sm:$0xf] %v1153
        %1186 = vst [vmem:[%s441 + $0x4] sm:$0xf] %v1154
        %1187 = vst [vmem:[%s441 + $0x8] sm:$0xf] %v1155
        %1188 = vst [vmem:[%s441 + $0xc] sm:$0xf] %v1156
        %1189 = vst [vmem:[%s441 + $0x10] sm:$0xf] %v1157
        %1190 = vst [vmem:[%s441 + $0x14] sm:$0xf] %v1158
        %1191 = vst [vmem:[%s441 + $0x18] sm:$0xf] %v1159
        %1192 = vst [vmem:[%s441 + $0x1c] sm:$0xf] %v1160
        %1193 = vst [vmem:[%s441 + $0x20] sm:$0xf] %v1161
        %1194 = vst [vmem:[%s441 + $0x24] sm:$0xf] %v1162
        %1195 = vst [vmem:[%s441 + $0x28] sm:$0xf] %v1163
        %1196 = vst [vmem:[%s441 + $0x2c] sm:$0xf] %v1164
        %1197 = vst [vmem:[%s441 + $0x30] sm:$0xf] %v1165
        %1198 = vst [vmem:[%s441 + $0x34] sm:$0xf] %v1166
        %1199 = vst [vmem:[%s441 + $0x38] sm:$0xf] %v1167
        %1200 = vst [vmem:[%s441 + $0x3c] sm:$0xf] %v1168
        %v1201 = vpack.c.bf16 %v952, %v948
        %v1202 = vpack.c.bf16 %v962, %v958
        %v1203 = vpack.c.bf16 %v972, %v968
        %v1204 = vpack.c.bf16 %v982, %v978
        %v1205 = vpack.c.bf16 %v992, %v988
        %v1206 = vpack.c.bf16 %v1002, %v998
        %v1207 = vpack.c.bf16 %v1012, %v1008
        %v1208 = vpack.c.bf16 %v1022, %v1018
        %v1217 = vunpack.c.l.b16 %v1201
        %v1218 = vunpack.c.h.b16 %v1201
        %v1219 = vunpack.c.l.b16 %v1202
        %v1220 = vunpack.c.h.b16 %v1202
        %v1221 = vunpack.c.l.b16 %v1203
        %v1222 = vunpack.c.h.b16 %v1203
        %v1223 = vunpack.c.l.b16 %v1204
        %v1224 = vunpack.c.h.b16 %v1204
        %v1225 = vunpack.c.l.b16 %v1205
        %v1226 = vunpack.c.h.b16 %v1205
        %v1227 = vunpack.c.l.b16 %v1206
        %v1228 = vunpack.c.h.b16 %v1206
        %v1229 = vunpack.c.l.b16 %v1207
        %v1230 = vunpack.c.h.b16 %v1207
        %v1231 = vunpack.c.l.b16 %v1208
        %v1232 = vunpack.c.h.b16 %v1208
        %v1233 = vpack.c.b16 %v1217, %v1217
        %v1234 = vpack.c.b16 %v1218, %v1218
        %v1235 = vpack.c.b16 %v1219, %v1219
        %v1236 = vpack.c.b16 %v1220, %v1220
        %v1237 = vpack.c.b16 %v1221, %v1221
        %v1238 = vpack.c.b16 %v1222, %v1222
        %v1239 = vpack.c.b16 %v1223, %v1223
        %v1240 = vpack.c.b16 %v1224, %v1224
        %v1241 = vpack.c.b16 %v1225, %v1225
        %v1242 = vpack.c.b16 %v1226, %v1226
        %v1243 = vpack.c.b16 %v1227, %v1227
        %v1244 = vpack.c.b16 %v1228, %v1228
        %v1245 = vpack.c.b16 %v1229, %v1229
        %v1246 = vpack.c.b16 %v1230, %v1230
        %v1247 = vpack.c.b16 %v1231, %v1231
        %v1248 = vpack.c.b16 %v1232, %v1232
        %1265 = vst [vmem:[%s448] sm:$0xf] %v1233
        %1266 = vst [vmem:[%s448 + $0x4] sm:$0xf] %v1234
        %1267 = vst [vmem:[%s448 + $0x8] sm:$0xf] %v1235
        %1268 = vst [vmem:[%s448 + $0xc] sm:$0xf] %v1236
        %1269 = vst [vmem:[%s448 + $0x10] sm:$0xf] %v1237
        %1270 = vst [vmem:[%s448 + $0x14] sm:$0xf] %v1238
        %1271 = vst [vmem:[%s448 + $0x18] sm:$0xf] %v1239
        %1272 = vst [vmem:[%s448 + $0x1c] sm:$0xf] %v1240
        %1273 = vst [vmem:[%s448 + $0x20] sm:$0xf] %v1241
        %1274 = vst [vmem:[%s448 + $0x24] sm:$0xf] %v1242
        %1275 = vst [vmem:[%s448 + $0x28] sm:$0xf] %v1243
        %1276 = vst [vmem:[%s448 + $0x2c] sm:$0xf] %v1244
        %1277 = vst [vmem:[%s448 + $0x30] sm:$0xf] %v1245
        %1278 = vst [vmem:[%s448 + $0x34] sm:$0xf] %v1246
        %1279 = vst [vmem:[%s448 + $0x38] sm:$0xf] %v1247
        %1280 = vst [vmem:[%s448 + $0x3c] sm:$0xf] %v1248
        %v1281 = vpack.c.bf16 %v1062, %v1059
        %v1282 = vpack.c.bf16 %v1070, %v1067
        %v1283 = vpack.c.bf16 %v1078, %v1075
        %v1284 = vpack.c.bf16 %v1086, %v1083
        %v1285 = vpack.c.bf16 %v1094, %v1091
        %v1286 = vpack.c.bf16 %v1102, %v1099
        %v1287 = vpack.c.bf16 %v1110, %v1107
        %v1288 = vpack.c.bf16 %v1118, %v1115
        %v1297 = vunpack.c.l.b16 %v1281
        %v1298 = vunpack.c.h.b16 %v1281
        %v1299 = vunpack.c.l.b16 %v1282
        %v1300 = vunpack.c.h.b16 %v1282
        %v1301 = vunpack.c.l.b16 %v1283
        %v1302 = vunpack.c.h.b16 %v1283
        %v1303 = vunpack.c.l.b16 %v1284
        %v1304 = vunpack.c.h.b16 %v1284
        %v1305 = vunpack.c.l.b16 %v1285
        %v1306 = vunpack.c.h.b16 %v1285
        %v1307 = vunpack.c.l.b16 %v1286
        %v1308 = vunpack.c.h.b16 %v1286
        %v1309 = vunpack.c.l.b16 %v1287
        %v1310 = vunpack.c.h.b16 %v1287
        %v1311 = vunpack.c.l.b16 %v1288
        %v1312 = vunpack.c.h.b16 %v1288
        %v1313 = vpack.c.b16 %v1297, %v1297
        %v1314 = vpack.c.b16 %v1298, %v1298
        %v1315 = vpack.c.b16 %v1299, %v1299
        %v1316 = vpack.c.b16 %v1300, %v1300
        %v1317 = vpack.c.b16 %v1301, %v1301
        %v1318 = vpack.c.b16 %v1302, %v1302
        %v1319 = vpack.c.b16 %v1303, %v1303
        %v1320 = vpack.c.b16 %v1304, %v1304
        %v1321 = vpack.c.b16 %v1305, %v1305
        %v1322 = vpack.c.b16 %v1306, %v1306
        %v1323 = vpack.c.b16 %v1307, %v1307
        %v1324 = vpack.c.b16 %v1308, %v1308
        %v1325 = vpack.c.b16 %v1309, %v1309
        %v1326 = vpack.c.b16 %v1310, %v1310
        %v1327 = vpack.c.b16 %v1311, %v1311
        %v1328 = vpack.c.b16 %v1312, %v1312
        %1345 = vst [vmem:[%s455] sm:$0xf] %v1313
        %1346 = vst [vmem:[%s455 + $0x4] sm:$0xf] %v1314
        %1347 = vst [vmem:[%s455 + $0x8] sm:$0xf] %v1315
        %1348 = vst [vmem:[%s455 + $0xc] sm:$0xf] %v1316
        %1349 = vst [vmem:[%s455 + $0x10] sm:$0xf] %v1317
        %1350 = vst [vmem:[%s455 + $0x14] sm:$0xf] %v1318
        %1351 = vst [vmem:[%s455 + $0x18] sm:$0xf] %v1319
        %1352 = vst [vmem:[%s455 + $0x1c] sm:$0xf] %v1320
        %1353 = vst [vmem:[%s455 + $0x20] sm:$0xf] %v1321
        %1354 = vst [vmem:[%s455 + $0x24] sm:$0xf] %v1322
        %1355 = vst [vmem:[%s455 + $0x28] sm:$0xf] %v1323
        %1356 = vst [vmem:[%s455 + $0x2c] sm:$0xf] %v1324
        %1357 = vst [vmem:[%s455 + $0x30] sm:$0xf] %v1325
        %1358 = vst [vmem:[%s455 + $0x34] sm:$0xf] %v1326
        %1359 = vst [vmem:[%s455 + $0x38] sm:$0xf] %v1327
        %1360 = vst [vmem:[%s455 + $0x3c] sm:$0xf] %v1328
        %s1361 = sand.u32 %s170, 1
        %s1362 = scalar_lea.sflag [#allocation5], %s1361
        %s1363 = sand.u32 %s170, 1
        %s1364 = smul.addr %s1363, 64
        %s1365 = scalar_lea.vmem [#allocation6], %s1364
        %s1366 = sand.u32 %s26, 1
        %s1367 = scalar_lea.sflag [#allocation8], %s1366
        %s1368 = sand.u32 %s198, 1
        %s1369 = smul.addr %s1368, 64
        %s1370 = scalar_lea.vmem [#allocation7], %s1369
        %s1371 = sand.u32 %s26, 1
        %s1372 = scalar_lea.sflag [#allocation8], %s1371
        %s1373 = sand.u32 %s226, 1
        %s1374 = smul.addr %s1373, 64
        %s1375 = scalar_lea.vmem [#allocation9], %s1374
        // Predicated region
        $region83: #{tpu_custom_call.1} parent=73 // pred_check
          %p1376 = pneg %p180
        $region84: #{tpu_custom_call.1} parent=73 // pred_check_branch
          %1378 = sbr.rel (%p1376) target = $region86
        $region85: #{tpu_custom_call.1} parent=73 // pred_region
          %s1379 = smul.u32 16, %s31
          %s1381 = ssub.s32 1024, 1024
          %1382 = vsyncadd %s1362, %s1381
          %s1383 = smul.addr %s30, 32
          %s1384 = sadd.s32 %s1379, %s1383
          %s1385 = smul.addr %s1384, 64
          %s1386 = scalar_lea.hbm %s5, %s1385
          %s1387 = sshll.u32 %s1365, 4
          %s1388 = int_to_ptr.vmem [resolvable:$true] %s1387
          %1393 = dma.vmem_to_hbm [thread:$0]  %s1388, 1024, %s1386, %s1362, 64, 64, 4
        $region86: #{tpu_custom_call.1} parent=73 // pred_fallthru
          _
        // Predicated region
        $region87: #{tpu_custom_call.1} parent=73 // pred_check
          %p1394 = pneg %p208
        $region88: #{tpu_custom_call.1} parent=73 // pred_check_branch
          %1396 = sbr.rel (%p1394) target = $region90
        $region89: #{tpu_custom_call.1} parent=73 // pred_region
          %s1397 = smul.u32 16, %s31
          %s1399 = ssub.s32 1024, 1024
          %1400 = vsyncadd %s1367, %s1399
          %s1401 = smul.addr %s30, 32
          %s1402 = sadd.s32 %s1397, %s1401
          %s1403 = smul.addr %s1402, 64
          %s1404 = scalar_lea.hbm %s6, %s1403
          %s1405 = sshll.u32 %s1370, 4
          %s1406 = int_to_ptr.vmem [resolvable:$true] %s1405
          %1411 = dma.vmem_to_hbm [thread:$0]  %s1406, 1024, %s1404, %s1367, 64, 64, 4
        $region90: #{tpu_custom_call.1} parent=73 // pred_fallthru
          _
        // Predicated region
        $region91: #{tpu_custom_call.1} parent=73 // pred_check
          %p1412 = pneg %p236
        $region92: #{tpu_custom_call.1} parent=73 // pred_check_branch
          %1414 = sbr.rel (%p1412) target = $region94
        $region93: #{tpu_custom_call.1} parent=73 // pred_region
          %s1415 = smul.u32 16, %s31
          %s1417 = ssub.s32 1024, 1024
          %1418 = vsyncadd %s1372, %s1417
          %s1419 = smul.addr %s30, 32
          %s1420 = sadd.s32 %s1415, %s1419
          %s1421 = smul.addr %s1420, 64
          %s1422 = scalar_lea.hbm %s7, %s1421
          %s1423 = sshll.u32 %s1375, 4
          %s1424 = int_to_ptr.vmem [resolvable:$true] %s1423
          %1429 = dma.vmem_to_hbm [thread:$0]  %s1424, 1024, %s1422, %s1372, 64, 64, 4
        $region94: #{tpu_custom_call.1} parent=73 // pred_fallthru
          _
      $region74: #{tpu_custom_call.1} parent=5 // pred_fallthru
        _
      %p1430 = scmp.le.s32.totalorder 2, %s21
      // Predicated region
      $region95: #{tpu_custom_call.1} parent=5 // pred_check
        %p1431 = pneg %p1430
      $region96: #{tpu_custom_call.1} parent=5 // pred_check_branch
        %1433 = sbr.rel (%p1431) target = $region98
      $region97: #{tpu_custom_call.1} parent=5 // pred_region
        %s1434 = ssub.s32 %s21, 2
        // Predicated region
        $region99: #{tpu_custom_call.1} parent=97 // pred_check
          %p1435 = pneg %p186
        $region100: #{tpu_custom_call.1} parent=97 // pred_check_branch
          %1437 = sbr.rel (%p1435) target = $region102
        $region101: #{tpu_custom_call.1} parent=97 // pred_region
          %s1438 = sand.u32 %s171, 1
          %s1439 = scalar_lea.sflag [#allocation5], %s1438
          %s1440 = sand.u32 %s171, 1
          %s1441 = smul.addr %s1440, 64
          %s1442 = scalar_lea.vmem [#allocation6], %s1441
          %1443 = dma.done %s1439, 1024
        $region102: #{tpu_custom_call.1} parent=97 // pred_fallthru
          _
        // Predicated region
        $region103: #{tpu_custom_call.1} parent=97 // pred_check
          %p1444 = pneg %p214
        $region104: #{tpu_custom_call.1} parent=97 // pred_check_branch
          %1446 = sbr.rel (%p1444) target = $region106
        $region105: #{tpu_custom_call.1} parent=97 // pred_region
          %s1447 = sand.u32 %s27, 1
          %s1448 = scalar_lea.sflag [#allocation8], %s1447
          %s1449 = sand.u32 %s199, 1
          %s1450 = smul.addr %s1449, 64
          %s1451 = scalar_lea.vmem [#allocation7], %s1450
          %1452 = dma.done %s1448, 1024
        $region106: #{tpu_custom_call.1} parent=97 // pred_fallthru
          _
        // Predicated region
        $region107: #{tpu_custom_call.1} parent=97 // pred_check
          %p1453 = pneg %p242
        $region108: #{tpu_custom_call.1} parent=97 // pred_check_branch
          %1455 = sbr.rel (%p1453) target = $region110
        $region109: #{tpu_custom_call.1} parent=97 // pred_region
          %s1456 = sand.u32 %s27, 1
          %s1457 = scalar_lea.sflag [#allocation8], %s1456
          %s1458 = sand.u32 %s227, 1
          %s1459 = smul.addr %s1458, 64
          %s1460 = scalar_lea.vmem [#allocation9], %s1459
          %1461 = dma.done %s1457, 1024
        $region110: #{tpu_custom_call.1} parent=97 // pred_fallthru
          _
      $region98: #{tpu_custom_call.1} parent=5 // pred_fallthru
        _
    $region6: #{tpu_custom_call.1} parent=1 // loop_footer
      %s25 = sadd.s32 1, %s21
    $region7: #{tpu_custom_call.1} parent=1 // loop_footer_branch
      %20 = sbr.rel target = $region3
    $region8: #{tpu_custom_call.1} parent=1 // loop_exit
      _
    %1462 = vsyncpa [#allocation4], 1
    %s1463 = scalar_lea.sflag [#allocation4], 1
    %1464 = vsyncpa %s1463, 1
    %1465 = vsyncpa [#allocation5], 1
    %s1466 = scalar_lea.sflag [#allocation5], 1
    %1467 = vsyncpa %s1466, 1
    %1468 = vsyncpa [#allocation8], 1
    %s1469 = scalar_lea.sflag [#allocation8], 1
    %1470 = vsyncpa %s1469, 1

// kernel: tpu_custom_call.1
$region0: #{tpu_custom_call.1}
  #allocation0 [shape = 'u32[]', space=smem, size = 0x4, offset = 0x4, fixed_abs, tag = 'smem constant byte address 0x4 - core index']
  #allocation1 [shape = 'u32[144,128]{1,0:T(1,128)}', space=vmem, size = 0x12000, scoped, tag = 'internal scratch']
  %s0 = inlined_call_operand.vmem [shape: f32[2,128,256], index: 0, kind: input, shape index: {}]
  %s1 = inlined_call_operand.vmem [shape: f32[2,128,1], index: 1, kind: input, shape index: {}]
  %s2 = inlined_call_operand.vmem [shape: f32[2,128,1], index: 2, kind: input, shape index: {}]
  %s3 = inlined_call_operand.hbm [shape: bf16[128,384], index: 3, kind: input, shape index: {}]
  %s4 = inlined_call_operand.vmem [shape: f32[1,384], index: 4, kind: input, shape index: {}]
  %s5 = inlined_call_operand.hbm [shape: bf16[2,256,128], index: 5, kind: output, shape index: {0}]
  %s6 = inlined_call_operand.hbm [shape: bf16[2,256,128], index: 6, kind: output, shape index: {1}]
  %s7 = inlined_call_operand.hbm [shape: bf16[2,256,128], index: 7, kind: output, shape index: {2}]
  %8 = xla_tuple %s5, %s6, %s7
  %s9 = sld [smem:[#allocation0]]
  $region111: #{tpu_custom_call.1} parent=0
    _
  %s11 = ssub.s32 1, %s9
  %s12 = scalar_select 0, %s11, %s9
  $region1: #{tpu_custom_call.1} parent=0
    #allocation2 [shape = 'u8[131072]{0}', space=vmem, size = 0x20000, scoped, tag = 'input window, operand 0']
    #allocation3 [shape = 'u8[98304]{0}', space=vmem, size = 0x18000, scoped, tag = 'input window, operand 3, single buffered']
    #allocation4 [shape = 's32[2]{0}', space=sflag, size = 0x8, scoped, tag = 'scoped memory for tpu_custom_call.1']
    #allocation5 [shape = 's32[2]{0}', space=sflag, size = 0x8, scoped, tag = 'scoped memory for tpu_custom_call.1']
    #allocation6 [shape = 'u8[65536]{0}', space=vmem, size = 0x10000, scoped, tag = 'output window, operand 0']
    #allocation7 [shape = 'u8[65536]{0}', space=vmem, size = 0x10000, scoped, tag = 'output window, operand 1']
    #allocation8 [shape = 's32[2]{0}', space=sflag, size = 0x8, scoped, tag = 'scoped memory for tpu_custom_call.1']
    #allocation9 [shape = 'u8[65536]{0}', space=vmem, size = 0x10000, scoped, tag = 'output window, operand 2']
    %13 = vsyncpa [#allocation4], 0
    %14 = vsyncpa [#allocation5], 0
    %s15 = scalar_lea.sflag [#allocation5], 1
    %16 = vsyncpa %s15, 0
    %17 = vsyncpa [#allocation8], 0
    %s18 = scalar_lea.sflag [#allocation8], 1
    %19 = vsyncpa %s18, 0
    loop: start=0, step=1, limit=6
    $region2: #{tpu_custom_call.1} parent=1 // loop_pre_header
      _
    $region3: #{tpu_custom_call.1} parent=1 // loop_header
      %s21 = sphi 0, %s25
      %p22 = scmp.ge.s32.totalorder %s21, 6
      %s28 = sphi 0, %s40
      %s29 = sphi 0, %s36
      %s30 = sphi 0, %s28
      %s31 = sphi 0, %s29
      %s32 = sphi 0, %s30
      %s33 = sphi 0, %s31
      %s45 = sphi 0, %s47
      %s48 = sphi 0, %s45
      %s49 = sphi 0, %s48
      %s65 = sphi 0, %s49
      %s71 = sphi 0, %s73
      %s74 = sphi 0, %s71
      %s75 = sphi 0, %s74
      %s91 = sphi 0, %s75
      %s97 = sphi 0, %s99
      %s100 = sphi 0, %s97
      %s101 = sphi 0, %s100
      %s117 = sphi 0, %s101
      %s121 = sphi 0, %s121
      %s123 = sphi 0, %s121
      %s124 = sphi 0, %s123
      %s138 = sphi 0, %s124
      %s142 = sphi 0, %s142
      %s144 = sphi 0, %s142
      %s145 = sphi 0, %s144
      %s159 = sphi 0, %s145
      %s167 = sphi 0, %s169
      %s170 = sphi 0, %s167
      %s171 = sphi 0, %s170
      %s187 = sphi 0, %s171
      %s195 = sphi 0, %s197
      %s198 = sphi 0, %s195
      %s199 = sphi 0, %s198
      %s215 = sphi 0, %s199
      %s223 = sphi 0, %s225
      %s226 = sphi 0, %s223
      %s227 = sphi 0, %s226
      %s243 = sphi 0, %s227
    $region4: #{tpu_custom_call.1} parent=1 // loop_header_branch
      %24 = sbr.rel (%p22) target = $region8
    $region5: #{tpu_custom_call.1} parent=1 // loop_body
      %s26 = ssub.s32 %s21, 1
      %s27 = ssub.s32 %s21, 2
      %s34 = sadd.s32 1, %s29
      %p35 = scmp.ge.s32.totalorder %s34, 2
      %s36 = scalar_select %p35, 0, %s34
      %s37 = sadd.s32 1, %s28
      %s38 = scalar_select %p35, %s37, %s28
      %p39 = scmp.ge.s32.totalorder %s38, 2
      %s40 = scalar_select %p39, 0, %s38
      %s41 = ssub.s32 %s28, %s40
      %s42 = ssub.s32 %s29, %s36
      %s43 = sor.u32 %s41, %s42
      %p44 = scmp.eq.s32.totalorder %s43, 0
      %s46 = sadd.s32 %s45, 1
      %s47 = scalar_select %p44, %s45, %s46
      %p50 = pneg %p44
      %p51 = scmp.eq.s32.totalorder %s21, 3
      %p52 = por %p50, %p51
      %p53 = scmp.ne.s32.totalorder %s45, %s48
      %p54 = scmp.eq.s32.totalorder %s21, 0
      %p55 = por %p53, %p54
      %p56 = scmp.ne.s32.totalorder %s45, %s48
      %p57 = scmp.eq.s32.totalorder %s26, 3
      %p58 = por %p56, %p57
      %p59 = scmp.ne.s32.totalorder %s48, %s49
      %p60 = scmp.eq.s32.totalorder %s26, 0
      %p61 = por %p59, %p60
      %p62 = scmp.ne.s32.totalorder %s48, %s49
      %p63 = scmp.eq.s32.totalorder %s27, 3
      %p64 = por %p62, %p63
      %p66 = scmp.ne.s32.totalorder %s49, %s65
      %p67 = scmp.eq.s32.totalorder %s27, 0
      %p68 = por %p66, %p67
      %s69 = ssub.s32 %s28, %s40
      %p70 = scmp.eq.s32.totalorder %s69, 0
      %s72 = sadd.s32 %s71, 1
      %s73 = scalar_select %p70, %s71, %s72
      %p76 = pneg %p70
      %p77 = scmp.eq.s32.totalorder %s21, 3
      %p78 = por %p76, %p77
      %p79 = scmp.ne.s32.totalorder %s71, %s74
      %p80 = scmp.eq.s32.totalorder %s21, 0
      %p81 = por %p79, %p80
      %p82 = scmp.ne.s32.totalorder %s71, %s74
      %p83 = scmp.eq.s32.totalorder %s26, 3
      %p84 = por %p82, %p83
      %p85 = scmp.ne.s32.totalorder %s74, %s75
      %p86 = scmp.eq.s32.totalorder %s26, 0
      %p87 = por %p85, %p86
      %p88 = scmp.ne.s32.totalorder %s74, %s75
      %p89 = scmp.eq.s32.totalorder %s27, 3
      %p90 = por %p88, %p89
      %p92 = scmp.ne.s32.totalorder %s75, %s91
      %p93 = scmp.eq.s32.totalorder %s27, 0
      %p94 = por %p92, %p93
      %s95 = ssub.s32 %s28, %s40
      %p96 = scmp.eq.s32.totalorder %s95, 0
      %s98 = sadd.s32 %s97, 1
      %s99 = scalar_select %p96, %s97, %s98
      %p102 = pneg %p96
      %p103 = scmp.eq.s32.totalorder %s21, 3
      %p104 = por %p102, %p103
      %p105 = scmp.ne.s32.totalorder %s97, %s100
      %p106 = scmp.eq.s32.totalorder %s21, 0
      %p107 = por %p105, %p106
      %p108 = scmp.ne.s32.totalorder %s97, %s100
      %p109 = scmp.eq.s32.totalorder %s26, 3
      %p110 = por %p108, %p109
      %p111 = scmp.ne.s32.totalorder %s100, %s101
      %p112 = scmp.eq.s32.totalorder %s26, 0
      %p113 = por %p111, %p112
      %p114 = scmp.ne.s32.totalorder %s100, %s101
      %p115 = scmp.eq.s32.totalorder %s27, 3
      %p116 = por %p114, %p115
      %p118 = scmp.ne.s32.totalorder %s101, %s117
      %p119 = scmp.eq.s32.totalorder %s27, 0
      %p120 = por %p118, %p119
      %s122 = sadd.s32 %s121, 1
      %p125 = scmp.eq.s32.totalorder %s21, 3
      %p126 = scmp.ne.s32.totalorder %s121, %s123
      %p127 = scmp.eq.s32.totalorder %s21, 0
      %p128 = por %p126, %p127
      %p129 = scmp.ne.s32.totalorder %s121, %s123
      %p130 = scmp.eq.s32.totalorder %s26, 3
      %p131 = por %p129, %p130
      %p132 = scmp.ne.s32.totalorder %s123, %s124
      %p133 = scmp.eq.s32.totalorder %s26, 0
      %p134 = por %p132, %p133
      %p135 = scmp.ne.s32.totalorder %s123, %s124
      %p136 = scmp.eq.s32.totalorder %s27, 3
      %p137 = por %p135, %p136
      %p139 = scmp.ne.s32.totalorder %s124, %s138
      %p140 = scmp.eq.s32.totalorder %s27, 0
      %p141 = por %p139, %p140
      %s143 = sadd.s32 %s142, 1
      %p146 = scmp.eq.s32.totalorder %s21, 3
      %p147 = scmp.ne.s32.totalorder %s142, %s144
      %p148 = scmp.eq.s32.totalorder %s21, 0
      %p149 = por %p147, %p148
      %p150 = scmp.ne.s32.totalorder %s142, %s144
      %p151 = scmp.eq.s32.totalorder %s26, 3
      %p152 = por %p150, %p151
      %p153 = scmp.ne.s32.totalorder %s144, %s145
      %p154 = scmp.eq.s32.totalorder %s26, 0
      %p155 = por %p153, %p154
      %p156 = scmp.ne.s32.totalorder %s144, %s145
      %p157 = scmp.eq.s32.totalorder %s27, 3
      %p158 = por %p156, %p157
      %p160 = scmp.ne.s32.totalorder %s145, %s159
      %p161 = scmp.eq.s32.totalorder %s27, 0
      %p162 = por %p160, %p161
      %s163 = ssub.s32 %s28, %s40
      %s164 = ssub.s32 %s29, %s36
      %s165 = sor.u32 %s163, %s164
      %p166 = scmp.eq.s32.totalorder %s165, 0
      %s168 = sadd.s32 %s167, 1
      %s169 = scalar_select %p166, %s167, %s168
      %p172 = pneg %p166
      %p173 = scmp.eq.s32.totalorder %s21, 3
      %p174 = por %p172, %p173
      %p175 = scmp.ne.s32.totalorder %s167, %s170
      %p176 = scmp.eq.s32.totalorder %s21, 0
      %p177 = por %p175, %p176
      %p178 = scmp.ne.s32.totalorder %s167, %s170
      %p179 = scmp.eq.s32.totalorder %s26, 3
      %p180 = por %p178, %p179
      %p181 = scmp.ne.s32.totalorder %s170, %s171
      %p182 = scmp.eq.s32.totalorder %s26, 0
      %p183 = por %p181, %p182
      %p184 = scmp.ne.s32.totalorder %s170, %s171
      %p185 = scmp.eq.s32.totalorder %s27, 3
      %p186 = por %p184, %p185
      %p188 = scmp.ne.s32.totalorder %s171, %s187
      %p189 = scmp.eq.s32.totalorder %s27, 0
      %p190 = por %p188, %p189
      %s191 = ssub.s32 %s28, %s40
      %s192 = ssub.s32 %s29, %s36
      %s193 = sor.u32 %s191, %s192
      %p194 = scmp.eq.s32.totalorder %s193, 0
      %s196 = sadd.s32 %s195, 1
      %s197 = scalar_select %p194, %s195, %s196
      %p200 = pneg %p194
      %p201 = scmp.eq.s32.totalorder %s21, 3
      %p202 = por %p200, %p201
      %p203 = scmp.ne.s32.totalorder %s195, %s198
      %p204 = scmp.eq.s32.totalorder %s21, 0
      %p205 = por %p203, %p204
      %p206 = scmp.ne.s32.totalorder %s195, %s198
      %p207 = scmp.eq.s32.totalorder %s26, 3
      %p208 = por %p206, %p207
      %p209 = scmp.ne.s32.totalorder %s198, %s199
      %p210 = scmp.eq.s32.totalorder %s26, 0
      %p211 = por %p209, %p210
      %p212 = scmp.ne.s32.totalorder %s198, %s199
      %p213 = scmp.eq.s32.totalorder %s27, 3
      %p214 = por %p212, %p213
      %p216 = scmp.ne.s32.totalorder %s199, %s215
      %p217 = scmp.eq.s32.totalorder %s27, 0
      %p218 = por %p216, %p217
      %s219 = ssub.s32 %s28, %s40
      %s220 = ssub.s32 %s29, %s36
      %s221 = sor.u32 %s219, %s220
      %p222 = scmp.eq.s32.totalorder %s221, 0
      %s224 = sadd.s32 %s223, 1
      %s225 = scalar_select %p222, %s223, %s224
      %p228 = pneg %p222
      %p229 = scmp.eq.s32.totalorder %s21, 3
      %p230 = por %p228, %p229
      %p231 = scmp.ne.s32.totalorder %s223, %s226
      %p232 = scmp.eq.s32.totalorder %s21, 0
      %p233 = por %p231, %p232
      %p234 = scmp.ne.s32.totalorder %s223, %s226
      %p235 = scmp.eq.s32.totalorder %s26, 3
      %p236 = por %p234, %p235
      %p237 = scmp.ne.s32.totalorder %s226, %s227
      %p238 = scmp.eq.s32.totalorder %s26, 0
      %p239 = por %p237, %p238
      %p240 = scmp.ne.s32.totalorder %s226, %s227
      %p241 = scmp.eq.s32.totalorder %s27, 3
      %p242 = por %p240, %p241
      %p244 = scmp.ne.s32.totalorder %s227, %s243
      %p245 = scmp.eq.s32.totalorder %s27, 0
      %p246 = por %p244, %p245
      %p247 = scmp.le.s32.totalorder 1, %s21
      %p248 = scmp.lt.s32.totalorder %s21, 5
      %p249 = pnand %p247, %p248
      %p250 = pneg %p249
      // Predicated region
      $region9: #{tpu_custom_call.1} parent=5 // pred_check
        _
      $region10: #{tpu_custom_call.1} parent=5 // pred_check_branch
        %252 = sbr.rel (%p249) target = $region12
      $region11: #{tpu_custom_call.1} parent=5 // pred_region
        %s253 = ssub.s32 %s21, 1
        // Predicated region
        $region13: #{tpu_custom_call.1} parent=11 // pred_check
          %p254 = pneg %p134
        $region14: #{tpu_custom_call.1} parent=11 // pred_check_branch
          %256 = sbr.rel (%p254) target = $region16
        $region15: #{tpu_custom_call.1} parent=11 // pred_region
          %s258 = ssub.s32 3072, 3072
          %259 = vsyncadd [#allocation4], %s258
          %s260 = sshll.u32 [#allocation3], 4
          %s261 = int_to_ptr.vmem [resolvable:$true] %s260
          %266 = dma.hbm_to_vmem [thread:$0]  %s3, 3072, %s261, [#allocation4], 192, 192, 12
        $region16: #{tpu_custom_call.1} parent=11 // pred_fallthru
          _
        // Predicated region
        $region17: #{tpu_custom_call.1} parent=11 // pred_check
          %p267 = pneg %p155
        $region18: #{tpu_custom_call.1} parent=11 // pred_check_branch
          %269 = sbr.rel (%p267) target = $region20
        $region19: #{tpu_custom_call.1} parent=11 // pred_region
          _
        $region20: #{tpu_custom_call.1} parent=11 // pred_fallthru
          _
      $region12: #{tpu_custom_call.1} parent=5 // pred_fallthru
        _
      %p270 = scmp.lt.s32.totalorder %s21, 4
      // Predicated region
      $region21: #{tpu_custom_call.1} parent=5 // pred_check
        %p271 = pneg %p270
      $region22: #{tpu_custom_call.1} parent=5 // pred_check_branch
        %273 = sbr.rel (%p271) target = $region24
      $region23: #{tpu_custom_call.1} parent=5 // pred_region
        // Predicated region
        $region25: #{tpu_custom_call.1} parent=23 // pred_check
          %p274 = pneg %p55
        $region26: #{tpu_custom_call.1} parent=23 // pred_check_branch
          %276 = sbr.rel (%p274) target = $region28
        $region27: #{tpu_custom_call.1} parent=23 // pred_region
          %s277 = sand.u32 %s45, 1
          %s278 = sand.u32 %s45, 1
          %s279 = smul.addr %s278, 128
          %s280 = scalar_lea.vmem [#allocation2], %s279
          %s281 = smul.addr %s28, 32
          %s282 = sadd.s32 %s29, %s281
          %s283 = smul.addr %s282, 8
          %s284 = scalar_lea.vmem %s0, %s283
          // Predicated region
          $region29: #{tpu_custom_call.1} parent=27 // pred_check
            _
          $region30: #{tpu_custom_call.1} parent=27 // pred_check_branch
            %286 = sbr.rel (0) target = $region32
          $region31: #{tpu_custom_call.1} parent=27 // pred_region
            // Predicated region
            $region33: #{tpu_custom_call.1} parent=31 // pred_check
              _
            $region34: #{tpu_custom_call.1} parent=31 // pred_check_branch
              %288 = sbr.rel (0) target = $region36
            $region35: #{tpu_custom_call.1} parent=31 // pred_region
              // Predicated region
              $region48: #{tpu_custom_call.1} parent=35 // pred_check
                _
              $region49: #{tpu_custom_call.1} parent=35 // pred_check_branch
                %333 = sbr.rel (0) target = $region51
              $region50: #{tpu_custom_call.1} parent=35 // pred_region
                loop: start=0, step=1, limit=1
                $region52: #{tpu_custom_call.1} parent=50 // loop_pre_header
                  _
                $region53: #{tpu_custom_call.1} parent=50 // loop_header
                  %s335 = sphi 0, %s339
                  %p336 = scmp.ge.s32.totalorder %s335, 1
                  %s340 = sphi %s284, %s284
                  %s341 = sphi %s280, %s280
                $region54: #{tpu_custom_call.1} parent=50 // loop_header_branch
                  %338 = sbr.rel (%p336) target = $region58
                $region55: #{tpu_custom_call.1} parent=50 // loop_body
                  %v342 = vld [vmem:[%s340] sm:$0xff]
                  %343 = vst [vmem:[%s341] sm:$0xff] %v342
                  %v344 = vld [vmem:[%s340 + $0x10] sm:$0xff]
                  %345 = vst [vmem:[%s341 + $0x8] sm:$0xff] %v344
                  %v346 = vld [vmem:[%s340 + $0x20] sm:$0xff]
                  %347 = vst [vmem:[%s341 + $0x10] sm:$0xff] %v346
                  %v348 = vld [vmem:[%s340 + $0x30] sm:$0xff]
                  %349 = vst [vmem:[%s341 + $0x18] sm:$0xff] %v348
                  %v350 = vld [vmem:[%s340 + $0x40] sm:$0xff]
                  %351 = vst [vmem:[%s341 + $0x20] sm:$0xff] %v350
                  %v352 = vld [vmem:[%s340 + $0x50] sm:$0xff]
                  %353 = vst [vmem:[%s341 + $0x28] sm:$0xff] %v352
                  %v354 = vld [vmem:[%s340 + $0x60] sm:$0xff]
                  %355 = vst [vmem:[%s341 + $0x30] sm:$0xff] %v354
                  %v356 = vld [vmem:[%s340 + $0x70] sm:$0xff]
                  %357 = vst [vmem:[%s341 + $0x38] sm:$0xff] %v356
                  %v358 = vld [vmem:[%s340 + $0x80] sm:$0xff]
                  %359 = vst [vmem:[%s341 + $0x40] sm:$0xff] %v358
                  %v360 = vld [vmem:[%s340 + $0x90] sm:$0xff]
                  %361 = vst [vmem:[%s341 + $0x48] sm:$0xff] %v360
                  %v362 = vld [vmem:[%s340 + $0xa0] sm:$0xff]
                  %363 = vst [vmem:[%s341 + $0x50] sm:$0xff] %v362
                  %v364 = vld [vmem:[%s340 + $0xb0] sm:$0xff]
                  %365 = vst [vmem:[%s341 + $0x58] sm:$0xff] %v364
                  %v366 = vld [vmem:[%s340 + $0xc0] sm:$0xff]
                  %367 = vst [vmem:[%s341 + $0x60] sm:$0xff] %v366
                  %v368 = vld [vmem:[%s340 + $0xd0] sm:$0xff]
                  %369 = vst [vmem:[%s341 + $0x68] sm:$0xff] %v368
                  %v370 = vld [vmem:[%s340 + $0xe0] sm:$0xff]
                  %371 = vst [vmem:[%s341 + $0x70] sm:$0xff] %v370
                  %v372 = vld [vmem:[%s340 + $0xf0] sm:$0xff]
                  %373 = vst [vmem:[%s341 + $0x78] sm:$0xff] %v372
                $region56: #{tpu_custom_call.1} parent=50 // loop_footer
                  %s339 = sadd.s32 1, %s335
                $region57: #{tpu_custom_call.1} parent=50 // loop_footer_branch
                  %334 = sbr.rel target = $region53
                $region58: #{tpu_custom_call.1} parent=50 // loop_exit
                  _
              $region51: #{tpu_custom_call.1} parent=35 // pred_fallthru
                _
              // Predicated region
              $region59: #{tpu_custom_call.1} parent=35 // pred_check
                _
              $region60: #{tpu_custom_call.1} parent=35 // pred_check_branch
                %375 = sbr.rel target = $region62
              $region61: #{tpu_custom_call.1} parent=35 // pred_region
                _
              $region62: #{tpu_custom_call.1} parent=35 // pred_fallthru
                _
            $region36: #{tpu_custom_call.1} parent=31 // pred_fallthru
              _
            // Predicated region
            $region37: #{tpu_custom_call.1} parent=31 // pred_check
              _
            $region38: #{tpu_custom_call.1} parent=31 // pred_check_branch
              %290 = sbr.rel target = $region40
            $region39: #{tpu_custom_call.1} parent=31 // pred_region
              loop: start=0, step=1, limit=1
              $region41: #{tpu_custom_call.1} parent=39 // loop_pre_header
                _
              $region42: #{tpu_custom_call.1} parent=39 // loop_header
                %s293 = sphi 0, %s297
                %p294 = scmp.ge.s32.totalorder %s293, 1
                %s298 = sphi %s284, %s284
                %s299 = sphi %s280, %s280
              $region43: #{tpu_custom_call.1} parent=39 // loop_header_branch
                %296 = sbr.rel (%p294) target = $region47
              $region44: #{tpu_custom_call.1} parent=39 // loop_body
                %v300 = vld [vmem:[%s298] sm:$0xff]
                %301 = vst [vmem:[%s299] sm:$0xff] %v300
                %v302 = vld [vmem:[%s298 + $0x10] sm:$0xff]
                %303 = vst [vmem:[%s299 + $0x8] sm:$0xff] %v302
                %v304 = vld [vmem:[%s298 + $0x20] sm:$0xff]
                %305 = vst [vmem:[%s299 + $0x10] sm:$0xff] %v304
                %v306 = vld [vmem:[%s298 + $0x30] sm:$0xff]
                %307 = vst [vmem:[%s299 + $0x18] sm:$0xff] %v306
                %v308 = vld [vmem:[%s298 + $0x40] sm:$0xff]
                %309 = vst [vmem:[%s299 + $0x20] sm:$0xff] %v308
                %v310 = vld [vmem:[%s298 + $0x50] sm:$0xff]
                %311 = vst [vmem:[%s299 + $0x28] sm:$0xff] %v310
                %v312 = vld [vmem:[%s298 + $0x60] sm:$0xff]
                %313 = vst [vmem:[%s299 + $0x30] sm:$0xff] %v312
                %v314 = vld [vmem:[%s298 + $0x70] sm:$0xff]
                %315 = vst [vmem:[%s299 + $0x38] sm:$0xff] %v314
                %v316 = vld [vmem:[%s298 + $0x80] sm:$0xff]
                %317 = vst [vmem:[%s299 + $0x40] sm:$0xff] %v316
                %v318 = vld [vmem:[%s298 + $0x90] sm:$0xff]
                %319 = vst [vmem:[%s299 + $0x48] sm:$0xff] %v318
                %v320 = vld [vmem:[%s298 + $0xa0] sm:$0xff]
                %321 = vst [vmem:[%s299 + $0x50] sm:$0xff] %v320
                %v322 = vld [vmem:[%s298 + $0xb0] sm:$0xff]
                %323 = vst [vmem:[%s299 + $0x58] sm:$0xff] %v322
                %v324 = vld [vmem:[%s298 + $0xc0] sm:$0xff]
                %325 = vst [vmem:[%s299 + $0x60] sm:$0xff] %v324
                %v326 = vld [vmem:[%s298 + $0xd0] sm:$0xff]
                %327 = vst [vmem:[%s299 + $0x68] sm:$0xff] %v326
                %v328 = vld [vmem:[%s298 + $0xe0] sm:$0xff]
                %329 = vst [vmem:[%s299 + $0x70] sm:$0xff] %v328
                %v330 = vld [vmem:[%s298 + $0xf0] sm:$0xff]
                %331 = vst [vmem:[%s299 + $0x78] sm:$0xff] %v330
              $region45: #{tpu_custom_call.1} parent=39 // loop_footer
                %s297 = sadd.s32 1, %s293
              $region46: #{tpu_custom_call.1} parent=39 // loop_footer_branch
                %292 = sbr.rel target = $region42
              $region47: #{tpu_custom_call.1} parent=39 // loop_exit
                _
            $region40: #{tpu_custom_call.1} parent=31 // pred_fallthru
              _
          $region32: #{tpu_custom_call.1} parent=27 // pred_fallthru
            _
          %376 = vnop
        $region28: #{tpu_custom_call.1} parent=23 // pred_fallthru
          _
        // Predicated region
        $region63: #{tpu_custom_call.1} parent=23 // pred_check
          %p377 = pneg %p81
        $region64: #{tpu_custom_call.1} parent=23 // pred_check_branch
          %379 = sbr.rel (%p377) target = $region66
        $region65: #{tpu_custom_call.1} parent=23 // pred_region
          %p380 = scmp.lt.s32.totalorder %s28, 1
          %s381 = scalar_select %p380, %s28, 1
          %s382 = smul.addr %s381, 16
          %s383 = smul.addr %s382, 8
          %s384 = scalar_lea.vmem %s1, %s383
        $region66: #{tpu_custom_call.1} parent=23 // pred_fallthru
          _
        // Predicated region
        $region67: #{tpu_custom_call.1} parent=23 // pred_check
          %p385 = pneg %p107
        $region68: #{tpu_custom_call.1} parent=23 // pred_check_branch
          %387 = sbr.rel (%p385) target = $region70
        $region69: #{tpu_custom_call.1} parent=23 // pred_region
          %p388 = scmp.lt.s32.totalorder %s28, 1
          %s389 = scalar_select %p388, %s28, 1
          %s390 = smul.addr %s389, 16
          %s391 = smul.addr %s390, 8
          %s392 = scalar_lea.vmem %s2, %s391
        $region70: #{tpu_custom_call.1} parent=23 // pred_fallthru
          _
      $region24: #{tpu_custom_call.1} parent=5 // pred_fallthru
        _
      %p393 = scmp.le.s32.totalorder 1, %s21
      %p394 = scmp.lt.s32.totalorder %s21, 5
      %p395 = pnand %p393, %p394
      %p396 = pneg %p395
      // Predicated region
      $region71: #{tpu_custom_call.1} parent=5 // pred_check
        _
      $region72: #{tpu_custom_call.1} parent=5 // pred_check_branch
        %398 = sbr.rel (%p395) target = $region74
      $region73: #{tpu_custom_call.1} parent=5 // pred_region
        %s399 = ssub.s32 %s21, 1
        %s400 = sand.u32 %s48, 1
        %s401 = sand.u32 %s48, 1
        %s402 = smul.addr %s401, 128
        %s403 = scalar_lea.vmem [#allocation2], %s402
        // Predicated region
        $region75: #{tpu_custom_call.1} parent=73 // pred_check
          %p404 = pneg %p61
        $region76: #{tpu_custom_call.1} parent=73 // pred_check_branch
          %406 = sbr.rel (%p404) target = $region78
        $region77: #{tpu_custom_call.1} parent=73 // pred_region
          _
        $region78: #{tpu_custom_call.1} parent=73 // pred_fallthru
          _
        // Predicated region
        $region79: #{tpu_custom_call.1} parent=73 // pred_check
          %p407 = pneg %p134
        $region80: #{tpu_custom_call.1} parent=73 // pred_check_branch
          %409 = sbr.rel (%p407) target = $region82
        $region81: #{tpu_custom_call.1} parent=73 // pred_region
          %410 = dma.done [#allocation4], 3072
        $region82: #{tpu_custom_call.1} parent=73 // pred_fallthru
          _
        %s411 = sand.u32 %s48, 1
        %s412 = sand.u32 %s48, 1
        %s413 = smul.addr %s412, 128
        %s414 = scalar_lea.vmem [#allocation2], %s413
        %p415 = pneg %p61
        %p416 = pneg %p58
        %p417 = scmp.lt.s32.totalorder %s30, 1
        %s418 = scalar_select %p417, %s30, 1
        %s419 = smul.addr %s418, 16
        %s420 = smul.addr %s419, 8
        %s421 = scalar_lea.vmem %s1, %s420
        %p422 = pneg %p87
        %p423 = pneg %p84
        %p424 = scmp.lt.s32.totalorder %s30, 1
        %s425 = scalar_select %p424, %s30, 1
        %s426 = smul.addr %s425, 16
        %s427 = smul.addr %s426, 8
        %s428 = scalar_lea.vmem %s2, %s427
        %p429 = pneg %p113
        %p430 = pneg %p110
        %p431 = pneg %p134
        %p432 = pneg %p131
        %p433 = pneg %p155
        %p434 = pneg %p152
        %p435 = pneg %p183
        %p436 = pneg %p180
        %s437 = sand.u32 %s170, 1
        %s438 = scalar_lea.sflag [#allocation5], %s437
        %s439 = sand.u32 %s170, 1
        %s440 = smul.addr %s439, 64
        %s441 = scalar_lea.vmem [#allocation6], %s440
        %p442 = pneg %p211
        %p443 = pneg %p208
        %s444 = sand.u32 %s26, 1
        %s445 = scalar_lea.sflag [#allocation8], %s444
        %s446 = sand.u32 %s198, 1
        %s447 = smul.addr %s446, 64
        %s448 = scalar_lea.vmem [#allocation7], %s447
        %p449 = pneg %p239
        %p450 = pneg %p236
        %s451 = sand.u32 %s26, 1
        %s452 = scalar_lea.sflag [#allocation8], %s451
        %s453 = sand.u32 %s226, 1
        %s454 = smul.addr %s453, 64
        %s455 = scalar_lea.vmem [#allocation9], %s454
        %p456 = scmp.lt.s32.totalorder %s30, 1
        %s457 = scalar_select %p456, %s30, 1
        %s458 = smul.addr %s457, 16
        %s459 = smul.addr %s458, 8
        %s460 = scalar_lea.vmem %s1, %s459
        %p461 = scmp.lt.s32.totalorder %s30, 1
        %s462 = scalar_select %p461, %s30, 1
        %s463 = smul.addr %s462, 16
        %s464 = smul.addr %s463, 8
        %s465 = scalar_lea.vmem %s2, %s464
        %s466 = smul.u32 16, %s31
        %s467 = smul.u32 16, %s31
        %s468 = smul.u32 16, %s31
        %v470 = vld [vmem:[%s403] sm:$0xff]
        %v471 = vld [vmem:[%s403 + $0x8] sm:$0xff]
        %v472 = vld [vmem:[%s403 + $0x10] sm:$0xff]
        %v473 = vld [vmem:[%s403 + $0x18] sm:$0xff]
        %v474 = vld [vmem:[%s403 + $0x20] sm:$0xff]
        %v475 = vld [vmem:[%s403 + $0x28] sm:$0xff]
        %v476 = vld [vmem:[%s403 + $0x30] sm:$0xff]
        %v477 = vld [vmem:[%s403 + $0x38] sm:$0xff]
        %v478 = vld [vmem:[%s403 + $0x40] sm:$0xff]
        %v479 = vld [vmem:[%s403 + $0x48] sm:$0xff]
        %v480 = vld [vmem:[%s403 + $0x50] sm:$0xff]
        %v481 = vld [vmem:[%s403 + $0x58] sm:$0xff]
        %v482 = vld [vmem:[%s403 + $0x60] sm:$0xff]
        %v483 = vld [vmem:[%s403 + $0x68] sm:$0xff]
        %v484 = vld [vmem:[%s403 + $0x70] sm:$0xff]
        %v485 = vld [vmem:[%s403 + $0x78] sm:$0xff]
        %v486 = vld [vmem:[%s460] sm:$0xff]
        %v487 = vld [vmem:[%s460 + $0x8] sm:$0xff]
        %v488 = vld [vmem:[%s460 + $0x10] sm:$0xff]
        %v489 = vld [vmem:[%s460 + $0x18] sm:$0xff]
        %v490 = vld [vmem:[%s460 + $0x20] sm:$0xff]
        %v491 = vld [vmem:[%s460 + $0x28] sm:$0xff]
        %v492 = vld [vmem:[%s460 + $0x30] sm:$0xff]
        %v493 = vld [vmem:[%s460 + $0x38] sm:$0xff]
        %v494 = vld [vmem:[%s460 + $0x40] sm:$0xff]
        %v495 = vld [vmem:[%s460 + $0x48] sm:$0xff]
        %v496 = vld [vmem:[%s460 + $0x50] sm:$0xff]
        %v497 = vld [vmem:[%s460 + $0x58] sm:$0xff]
        %v498 = vld [vmem:[%s460 + $0x60] sm:$0xff]
        %v499 = vld [vmem:[%s460 + $0x68] sm:$0xff]
        %v500 = vld [vmem:[%s460 + $0x70] sm:$0xff]
        %v501 = vld [vmem:[%s460 + $0x78] sm:$0xff]
        %503 = vset.pattern.permute.xlu0 0
        %504 = vperm.xlu0 %503, %v486
        %v505 = vpop.permute.xlu0 %504
        %508 = vset.pattern.permute.xlu0 0
        %509 = vperm.xlu0 %508, %v487
        %v510 = vpop.permute.xlu0 %509
        %513 = vset.pattern.permute.xlu0 0
        %514 = vperm.xlu0 %513, %v488
        %v515 = vpop.permute.xlu0 %514
        %518 = vset.pattern.permute.xlu0 0
        %519 = vperm.xlu0 %518, %v489
        %v520 = vpop.permute.xlu0 %519
        %523 = vset.pattern.permute.xlu0 0
        %524 = vperm.xlu0 %523, %v490
        %v525 = vpop.permute.xlu0 %524
        %528 = vset.pattern.permute.xlu0 0
        %529 = vperm.xlu0 %528, %v491
        %v530 = vpop.permute.xlu0 %529
        %533 = vset.pattern.permute.xlu0 0
        %534 = vperm.xlu0 %533, %v492
        %v535 = vpop.permute.xlu0 %534
        %538 = vset.pattern.permute.xlu0 0
        %539 = vperm.xlu0 %538, %v493
        %v540 = vpop.permute.xlu0 %539
        %543 = vset.pattern.permute.xlu0 0
        %544 = vperm.xlu0 %543, %v494
        %v545 = vpop.permute.xlu0 %544
        %548 = vset.pattern.permute.xlu0 0
        %549 = vperm.xlu0 %548, %v495
        %v550 = vpop.permute.xlu0 %549
        %553 = vset.pattern.permute.xlu0 0
        %554 = vperm.xlu0 %553, %v496
        %v555 = vpop.permute.xlu0 %554
        %558 = vset.pattern.permute.xlu0 0
        %559 = vperm.xlu0 %558, %v497
        %v560 = vpop.permute.xlu0 %559
        %563 = vset.pattern.permute.xlu0 0
        %564 = vperm.xlu0 %563, %v498
        %v565 = vpop.permute.xlu0 %564
        %568 = vset.pattern.permute.xlu0 0
        %569 = vperm.xlu0 %568, %v499
        %v570 = vpop.permute.xlu0 %569
        %573 = vset.pattern.permute.xlu0 0
        %574 = vperm.xlu0 %573, %v500
        %v575 = vpop.permute.xlu0 %574
        %578 = vset.pattern.permute.xlu0 0
        %579 = vperm.xlu0 %578, %v501
        %v580 = vpop.permute.xlu0 %579
        %v582 = vmul.f32 %v470, %v505
        %v583 = vmul.f32 %v471, %v510
        %v584 = vmul.f32 %v472, %v515
        %v585 = vmul.f32 %v473, %v520
        %v586 = vmul.f32 %v474, %v525
        %v587 = vmul.f32 %v475, %v530
        %v588 = vmul.f32 %v476, %v535
        %v589 = vmul.f32 %v477, %v540
        %v590 = vmul.f32 %v478, %v545
        %v591 = vmul.f32 %v479, %v550
        %v592 = vmul.f32 %v480, %v555
        %v593 = vmul.f32 %v481, %v560
        %v594 = vmul.f32 %v482, %v565
        %v595 = vmul.f32 %v483, %v570
        %v596 = vmul.f32 %v484, %v575
        %v597 = vmul.f32 %v485, %v580
        %v598 = vld [vmem:[%s465] sm:$0xff]
        %v599 = vld [vmem:[%s465 + $0x8] sm:$0xff]
        %v600 = vld [vmem:[%s465 + $0x10] sm:$0xff]
        %v601 = vld [vmem:[%s465 + $0x18] sm:$0xff]
        %v602 = vld [vmem:[%s465 + $0x20] sm:$0xff]
        %v603 = vld [vmem:[%s465 + $0x28] sm:$0xff]
        %v604 = vld [vmem:[%s465 + $0x30] sm:$0xff]
        %v605 = vld [vmem:[%s465 + $0x38] sm:$0xff]
        %v606 = vld [vmem:[%s465 + $0x40] sm:$0xff]
        %v607 = vld [vmem:[%s465 + $0x48] sm:$0xff]
        %v608 = vld [vmem:[%s465 + $0x50] sm:$0xff]
        %v609 = vld [vmem:[%s465 + $0x58] sm:$0xff]
        %v610 = vld [vmem:[%s465 + $0x60] sm:$0xff]
        %v611 = vld [vmem:[%s465 + $0x68] sm:$0xff]
        %v612 = vld [vmem:[%s465 + $0x70] sm:$0xff]
        %v613 = vld [vmem:[%s465 + $0x78] sm:$0xff]
        %615 = vset.pattern.permute.xlu0 0
        %616 = vperm.xlu0 %615, %v598
        %v617 = vpop.permute.xlu0 %616
        %620 = vset.pattern.permute.xlu0 0
        %621 = vperm.xlu0 %620, %v599
        %v622 = vpop.permute.xlu0 %621
        %625 = vset.pattern.permute.xlu0 0
        %626 = vperm.xlu0 %625, %v600
        %v627 = vpop.permute.xlu0 %626
        %630 = vset.pattern.permute.xlu0 0
        %631 = vperm.xlu0 %630, %v601
        %v632 = vpop.permute.xlu0 %631
        %635 = vset.pattern.permute.xlu0 0
        %636 = vperm.xlu0 %635, %v602
        %v637 = vpop.permute.xlu0 %636
        %640 = vset.pattern.permute.xlu0 0
        %641 = vperm.xlu0 %640, %v603
        %v642 = vpop.permute.xlu0 %641
        %645 = vset.pattern.permute.xlu0 0
        %646 = vperm.xlu0 %645, %v604
        %v647 = vpop.permute.xlu0 %646
        %650 = vset.pattern.permute.xlu0 0
        %651 = vperm.xlu0 %650, %v605
        %v652 = vpop.permute.xlu0 %651
        %655 = vset.pattern.permute.xlu0 0
        %656 = vperm.xlu0 %655, %v606
        %v657 = vpop.permute.xlu0 %656
        %660 = vset.pattern.permute.xlu0 0
        %661 = vperm.xlu0 %660, %v607
        %v662 = vpop.permute.xlu0 %661
        %665 = vset.pattern.permute.xlu0 0
        %666 = vperm.xlu0 %665, %v608
        %v667 = vpop.permute.xlu0 %666
        %670 = vset.pattern.permute.xlu0 0
        %671 = vperm.xlu0 %670, %v609
        %v672 = vpop.permute.xlu0 %671
        %675 = vset.pattern.permute.xlu0 0
        %676 = vperm.xlu0 %675, %v610
        %v677 = vpop.permute.xlu0 %676
        %680 = vset.pattern.permute.xlu0 0
        %681 = vperm.xlu0 %680, %v611
        %v682 = vpop.permute.xlu0 %681
        %685 = vset.pattern.permute.xlu0 0
        %686 = vperm.xlu0 %685, %v612
        %v687 = vpop.permute.xlu0 %686
        %690 = vset.pattern.permute.xlu0 0
        %691 = vperm.xlu0 %690, %v613
        %v692 = vpop.permute.xlu0 %691
        %v694 = vadd.f32 %v582, %v617
        %v695 = vadd.f32 %v583, %v622
        %v696 = vadd.f32 %v584, %v627
        %v697 = vadd.f32 %v585, %v632
        %v698 = vadd.f32 %v586, %v637
        %v699 = vadd.f32 %v587, %v642
        %v700 = vadd.f32 %v588, %v647
        %v701 = vadd.f32 %v589, %v652
        %v702 = vadd.f32 %v590, %v657
        %v703 = vadd.f32 %v591, %v662
        %v704 = vadd.f32 %v592, %v667
        %v705 = vadd.f32 %v593, %v672
        %v706 = vadd.f32 %v594, %v677
        %v707 = vadd.f32 %v595, %v682
        %v708 = vadd.f32 %v596, %v687
        %v709 = vadd.f32 %v597, %v692
        %v710 = vpack.c.bf16 %v695, %v694
        %v711 = vpack.c.bf16 %v697, %v696
        %v712 = vpack.c.bf16 %v699, %v698
        %v713 = vpack.c.bf16 %v701, %v700
        %v714 = vpack.c.bf16 %v703, %v702
        %v715 = vpack.c.bf16 %v705, %v704
        %v716 = vpack.c.bf16 %v707, %v706
        %v717 = vpack.c.bf16 %v709, %v708
        %v718 = vld [vmem:[#allocation3] sm:$0xff]
        %v719 = vld [vmem:[#allocation3 + $0x8] sm:$0xf]
        %v720 = vld [vmem:[#allocation3 + $0xc] sm:$0xff]
        %v721 = vld [vmem:[#allocation3 + $0x14] sm:$0xf]
        %v722 = vld [vmem:[#allocation3 + $0x18] sm:$0xff]
        %v723 = vld [vmem:[#allocation3 + $0x20] sm:$0xf]
        %v724 = vld [vmem:[#allocation3 + $0x24] sm:$0xff]
        %v725 = vld [vmem:[#allocation3 + $0x2c] sm:$0xf]
        %v726 = vld [vmem:[#allocation3 + $0x30] sm:$0xff]
        %v727 = vld [vmem:[#allocation3 + $0x38] sm:$0xf]
        %v728 = vld [vmem:[#allocation3 + $0x3c] sm:$0xff]
        %v729 = vld [vmem:[#allocation3 + $0x44] sm:$0xf]
        %v730 = vld [vmem:[#allocation3 + $0x48] sm:$0xff]
        %v731 = vld [vmem:[#allocation3 + $0x50] sm:$0xf]
        %v732 = vld [vmem:[#allocation3 + $0x54] sm:$0xff]
        %v733 = vld [vmem:[#allocation3 + $0x5c] sm:$0xf]
        %v734 = vld [vmem:[#allocation3 + $0x60] sm:$0xff]
        %v735 = vld [vmem:[#allocation3 + $0x68] sm:$0xf]
        %v736 = vld [vmem:[#allocation3 + $0x6c] sm:$0xff]
        %v737 = vld [vmem:[#allocation3 + $0x74] sm:$0xf]
        %v738 = vld [vmem:[#allocation3 + $0x78] sm:$0xff]
        %v739 = vld [vmem:[#allocation3 + $0x80] sm:$0xf]
        %v740 = vld [vmem:[#allocation3 + $0x84] sm:$0xff]
        %v741 = vld [vmem:[#allocation3 + $0x8c] sm:$0xf]
        %v742 = vld [vmem:[#allocation3 + $0x90] sm:$0xff]
        %v743 = vld [vmem:[#allocation3 + $0x98] sm:$0xf]
        %v744 = vld [vmem:[#allocation3 + $0x9c] sm:$0xff]
        %v745 = vld [vmem:[#allocation3 + $0xa4] sm:$0xf]
        %v746 = vld [vmem:[#allocation3 + $0xa8] sm:$0xff]
        %v747 = vld [vmem:[#allocation3 + $0xb0] sm:$0xf]
        %v748 = vld [vmem:[#allocation3 + $0xb4] sm:$0xff]
        %v749 = vld [vmem:[#allocation3 + $0xbc] sm:$0xf]
        %v750 = vld [vmem:[%s4] sm:$0x7]
        %v752 = vlaneseq
        %v753 = vshrl.u32 %v752, 7
        %v754 = vsub.s32 0, %v753
        %v755 = vrot.slane %v750, %v754
        %v756 = vlaneseq
        %v757 = vshrl.u32 %v756, 7
        %v758 = vsub.s32 1, %v757
        %v759 = vrot.slane %v750, %v758
        %v760 = vlaneseq
        %v761 = vshrl.u32 %v760, 7
        %v762 = vsub.s32 2, %v761
        %v763 = vrot.slane %v750, %v762
        %767 = vxpose.xlu0.c.b16.start [1/8] %v710, 128
        %768 = vxpose.xlu0.c.b16.cont [2/8] %v711, 128
        %769 = vxpose.xlu0.c.b16.cont [3/8] %v712, 128
        %770 = vxpose.xlu0.c.b16.cont [4/8] %v713, 128
        %771 = vxpose.xlu0.c.b16.cont [5/8] %v714, 128
        %772 = vxpose.xlu0.c.b16.cont [6/8] %v715, 128
        %773 = vxpose.xlu0.c.b16.cont [7/8] %v716, 128
        %774 = vxpose.xlu0.c.b16.end [8/8] %v717, 128
        %v775 = vpop.trf.xlu0
        %v776 = vpop.trf.xlu0
        %v777 = vpop.trf.xlu0
        %v778 = vpop.trf.xlu0
        %v779 = vpop.trf.xlu0
        %v780 = vpop.trf.xlu0
        %v781 = vpop.trf.xlu0
        %v782 = vpop.trf.xlu0
        %v815 = vunpack.c.l.b16 %v718
        %v816 = vunpack.c.h.b16 %v718
        %v817 = vunpack.c.l.b16 %v719
        %v818 = vunpack.c.l.b16 %v720
        %v819 = vunpack.c.h.b16 %v720
        %v820 = vunpack.c.l.b16 %v721
        %v821 = vunpack.c.l.b16 %v722
        %v822 = vunpack.c.h.b16 %v722
        %v823 = vunpack.c.l.b16 %v723
        %v824 = vunpack.c.l.b16 %v724
        %v825 = vunpack.c.h.b16 %v724
        %v826 = vunpack.c.l.b16 %v725
        %v827 = vunpack.c.l.b16 %v726
        %v828 = vunpack.c.h.b16 %v726
        %v829 = vunpack.c.l.b16 %v727
        %v830 = vunpack.c.l.b16 %v728
        %v831 = vunpack.c.h.b16 %v728
        %v832 = vunpack.c.l.b16 %v729
        %v833 = vunpack.c.l.b16 %v730
        %v834 = vunpack.c.h.b16 %v730
        %v835 = vunpack.c.l.b16 %v731
        %v836 = vunpack.c.l.b16 %v732
        %v837 = vunpack.c.h.b16 %v732
        %v838 = vunpack.c.l.b16 %v733
        %v839 = vunpack.c.l.b16 %v734
        %v840 = vunpack.c.h.b16 %v734
        %v841 = vunpack.c.l.b16 %v735
        %v842 = vunpack.c.l.b16 %v736
        %v843 = vunpack.c.h.b16 %v736
        %v844 = vunpack.c.l.b16 %v737
        %v845 = vunpack.c.l.b16 %v738
        %v846 = vunpack.c.h.b16 %v738
        %v847 = vunpack.c.l.b16 %v739
        %v848 = vunpack.c.l.b16 %v740
        %v849 = vunpack.c.h.b16 %v740
        %v850 = vunpack.c.l.b16 %v741
        %v851 = vunpack.c.l.b16 %v742
        %v852 = vunpack.c.h.b16 %v742
        %v853 = vunpack.c.l.b16 %v743
        %v854 = vunpack.c.l.b16 %v744
        %v855 = vunpack.c.h.b16 %v744
        %v856 = vunpack.c.l.b16 %v745
        %v857 = vunpack.c.l.b16 %v746
        %v858 = vunpack.c.h.b16 %v746
        %v859 = vunpack.c.l.b16 %v747
        %v860 = vunpack.c.l.b16 %v748
        %v861 = vunpack.c.h.b16 %v748
        %v862 = vunpack.c.l.b16 %v749
        %v863 = vpack.c.b16 %v818, %v815
        %v864 = vpack.c.b16 %v819, %v816
        %v865 = vpack.c.b16 %v820, %v817
        %v866 = vpack.c.b16 %v824, %v821
        %v867 = vpack.c.b16 %v825, %v822
        %v868 = vpack.c.b16 %v826, %v823
        %v869 = vpack.c.b16 %v830, %v827
        %v870 = vpack.c.b16 %v831, %v828
        %v871 = vpack.c.b16 %v832, %v829
        %v872 = vpack.c.b16 %v836, %v833
        %v873 = vpack.c.b16 %v837, %v834
        %v874 = vpack.c.b16 %v838, %v835
        %v875 = vpack.c.b16 %v842, %v839
        %v876 = vpack.c.b16 %v843, %v840
        %v877 = vpack.c.b16 %v844, %v841
        %v878 = vpack.c.b16 %v848, %v845
        %v879 = vpack.c.b16 %v849, %v846
        %v880 = vpack.c.b16 %v850, %v847
        %v881 = vpack.c.b16 %v854, %v851
        %v882 = vpack.c.b16 %v855, %v852
        %v883 = vpack.c.b16 %v856, %v853
        %v884 = vpack.c.b16 %v860, %v857
        %v885 = vpack.c.b16 %v861, %v858
        %v886 = vpack.c.b16 %v862, %v859
        %911 = vmatprep.subr.bf16.mxu0 %v864
        %912 = vmatpush1.bf16.msra.mxu0 %v863
        %913 = vmatprep.subr.bf16.mxu0 %v867
        %914 = vmatpush1.bf16.msra.mxu0 %v866
        %915 = vmatprep.subr.bf16.mxu0 %v870
        %916 = vmatpush1.bf16.msra.mxu0 %v869
        %917 = vmatprep.subr.bf16.mxu0 %v873
        %918 = vmatpush1.bf16.msra.mxu0 %v872
        %919 = vmatprep.subr.bf16.mxu0 %v876
        %920 = vmatpush1.bf16.msra.mxu0 %v875
        %921 = vmatprep.subr.bf16.mxu0 %v879
        %922 = vmatpush1.bf16.msra.mxu0 %v878
        %923 = vmatprep.subr.bf16.mxu0 %v882
        %924 = vmatpush1.bf16.msra.mxu0 %v881
        %925 = vmatprep.subr.bf16.mxu0 %v885
        %926 = vmatpush1.bf16.msra.mxu0 %v884
        %927 = vmatprep.subr.bf16.mxu0 0
        %928 = vmatpush1.bf16.msra.mxu0 0
        %929 = vmatprep.subr.bf16.mxu0 0
        %930 = vmatpush1.bf16.msra.mxu0 0
        %931 = vmatprep.subr.bf16.mxu0 0
        %932 = vmatpush1.bf16.msra.mxu0 0
        %933 = vmatprep.subr.bf16.mxu0 0
        %934 = vmatpush1.bf16.msra.mxu0 0
        %935 = vmatprep.subr.bf16.mxu0 0
        %936 = vmatpush1.bf16.msra.mxu0 0
        %937 = vmatprep.subr.bf16.mxu0 0
        %938 = vmatpush1.bf16.msra.mxu0 0
        %939 = vmatprep.subr.bf16.mxu0 0
        %940 = vmatpush1.bf16.msra.mxu0 0
        %941 = vmatprep.subr.bf16.mxu0 0
        %942 = vmatpush1.bf16.msra.mxu0 0
        %943 = vmatprep.mubr.bf16.mxu0 0
        %944 = vmatmul.mubr.bf16.gmra.mrb[0].mxu0 %v775
        %v945 = vpop.f32.mrb[0].mxu0
        %v946 = vadd.f32 %v755, %v945
        %v947 = vpop.f32.mrb[0].mxu0
        %v948 = vadd.f32 %v759, %v947
        %v949 = vpop.f32.mrb[0].mxu0
        %v950 = vadd.f32 %v755, %v949
        %v951 = vpop.f32.mrb[0].mxu0
        %v952 = vadd.f32 %v759, %v951
        %953 = vmatprep.mubr.bf16.mxu0 0
        %954 = vmatmul.mubr.bf16.gmra.mrb[0].mxu0 %v776
        %v955 = vpop.f32.mrb[0].mxu0
        %v956 = vadd.f32 %v755, %v955
        %v957 = vpop.f32.mrb[0].mxu0
        %v958 = vadd.f32 %v759, %v957
        %v959 = vpop.f32.mrb[0].mxu0
        %v960 = vadd.f32 %v755, %v959
        %v961 = vpop.f32.mrb[0].mxu0
        %v962 = vadd.f32 %v759, %v961
        %963 = vmatprep.mubr.bf16.mxu0 0
        %964 = vmatmul.mubr.bf16.gmra.mrb[0].mxu0 %v777
        %v965 = vpop.f32.mrb[0].mxu0
        %v966 = vadd.f32 %v755, %v965
        %v967 = vpop.f32.mrb[0].mxu0
        %v968 = vadd.f32 %v759, %v967
        %v969 = vpop.f32.mrb[0].mxu0
        %v970 = vadd.f32 %v755, %v969
        %v971 = vpop.f32.mrb[0].mxu0
        %v972 = vadd.f32 %v759, %v971
        %973 = vmatprep.mubr.bf16.mxu0 0
        %974 = vmatmul.mubr.bf16.gmra.mrb[0].mxu0 %v778
        %v975 = vpop.f32.mrb[0].mxu0
        %v976 = vadd.f32 %v755, %v975
        %v977 = vpop.f32.mrb[0].mxu0
        %v978 = vadd.f32 %v759, %v977
        %v979 = vpop.f32.mrb[0].mxu0
        %v980 = vadd.f32 %v755, %v979
        %v981 = vpop.f32.mrb[0].mxu0
        %v982 = vadd.f32 %v759, %v981
        %983 = vmatprep.mubr.bf16.mxu0 0
        %984 = vmatmul.mubr.bf16.gmra.mrb[0].mxu0 %v779
        %v985 = vpop.f32.mrb[0].mxu0
        %v986 = vadd.f32 %v755, %v985
        %v987 = vpop.f32.mrb[0].mxu0
        %v988 = vadd.f32 %v759, %v987
        %v989 = vpop.f32.mrb[0].mxu0
        %v990 = vadd.f32 %v755, %v989
        %v991 = vpop.f32.mrb[0].mxu0
        %v992 = vadd.f32 %v759, %v991
        %993 = vmatprep.mubr.bf16.mxu0 0
        %994 = vmatmul.mubr.bf16.gmra.mrb[0].mxu0 %v780
        %v995 = vpop.f32.mrb[0].mxu0
        %v996 = vadd.f32 %v755, %v995
        %v997 = vpop.f32.mrb[0].mxu0
        %v998 = vadd.f32 %v759, %v997
        %v999 = vpop.f32.mrb[0].mxu0
        %v1000 = vadd.f32 %v755, %v999
        %v1001 = vpop.f32.mrb[0].mxu0
        %v1002 = vadd.f32 %v759, %v1001
        %1003 = vmatprep.mubr.bf16.mxu0 0
        %1004 = vmatmul.mubr.bf16.gmra.mrb[0].mxu0 %v781
        %v1005 = vpop.f32.mrb[0].mxu0
        %v1006 = vadd.f32 %v755, %v1005
        %v1007 = vpop.f32.mrb[0].mxu0
        %v1008 = vadd.f32 %v759, %v1007
        %v1009 = vpop.f32.mrb[0].mxu0
        %v1010 = vadd.f32 %v755, %v1009
        %v1011 = vpop.f32.mrb[0].mxu0
        %v1012 = vadd.f32 %v759, %v1011
        %1013 = vmatprep.mubr.bf16.mxu0 0
        %1014 = vmatmul.mubr.bf16.gmra.mrb[0].mxu0 %v782
        %v1015 = vpop.f32.mrb[0].mxu0
        %v1016 = vadd.f32 %v755, %v1015
        %v1017 = vpop.f32.mrb[0].mxu0
        %v1018 = vadd.f32 %v759, %v1017
        %v1019 = vpop.f32.mrb[0].mxu0
        %v1020 = vadd.f32 %v755, %v1019
        %v1021 = vpop.f32.mrb[0].mxu0
        %v1022 = vadd.f32 %v759, %v1021
        %1023 = vdwg.mxu0
        %1024 = vmatprep.subr.bf16.mxu0 0
        %1025 = vmatpush1.bf16.msra.mxu0 %v865
        %1026 = vmatprep.subr.bf16.mxu0 0
        %1027 = vmatpush1.bf16.msra.mxu0 %v868
        %1028 = vmatprep.subr.bf16.mxu0 0
        %1029 = vmatpush1.bf16.msra.mxu0 %v871
        %1030 = vmatprep.subr.bf16.mxu0 0
        %1031 = vmatpush1.bf16.msra.mxu0 %v874
        %1032 = vmatprep.subr.bf16.mxu0 0
        %1033 = vmatpush1.bf16.msra.mxu0 %v877
        %1034 = vmatprep.subr.bf16.mxu0 0
        %1035 = vmatpush1.bf16.msra.mxu0 %v880
        %1036 = vmatprep.subr.bf16.mxu0 0
        %1037 = vmatpush1.bf16.msra.mxu0 %v883
        %1038 = vmatprep.subr.bf16.mxu0 0
        %1039 = vmatpush1.bf16.msra.mxu0 %v886
        %1040 = vmatprep.subr.bf16.mxu0 0
        %1041 = vmatpush1.bf16.msra.mxu0 0
        %1042 = vmatprep.subr.bf16.mxu0 0
        %1043 = vmatpush1.bf16.msra.mxu0 0
        %1044 = vmatprep.subr.bf16.mxu0 0
        %1045 = vmatpush1.bf16.msra.mxu0 0
        %1046 = vmatprep.subr.bf16.mxu0 0
        %1047 = vmatpush1.bf16.msra.mxu0 0
        %1048 = vmatprep.subr.bf16.mxu0 0
        %1049 = vmatpush1.bf16.msra.mxu0 0
        %1050 = vmatprep.subr.bf16.mxu0 0
        %1051 = vmatpush1.bf16.msra.mxu0 0
        %1052 = vmatprep.subr.bf16.mxu0 0
        %1053 = vmatpush1.bf16.msra.mxu0 0
        %1054 = vmatprep.subr.bf16.mxu0 0
        %1055 = vmatpush1.bf16.msra.mxu0 0
        %1056 = vmatprep.mubr.bf16.mxu0 0
        %1057 = vmatmul.mubr.bf16.gmra.mrb[0].mxu0 %v775
        %v1058 = vpop.f32.mrb[0].mxu0
        %v1059 = vadd.f32 %v763, %v1058
        %v1060 = vpop.f32.mrb[0].mxu0
        %v1061 = vpop.f32.mrb[0].mxu0
        %v1062 = vadd.f32 %v763, %v1061
        %v1063 = vpop.f32.mrb[0].mxu0
        %1064 = vmatprep.mubr.bf16.mxu0 0
        %1065 = vmatmul.mubr.bf16.gmra.mrb[0].mxu0 %v776
        %v1066 = vpop.f32.mrb[0].mxu0
        %v1067 = vadd.f32 %v763, %v1066
        %v1068 = vpop.f32.mrb[0].mxu0
        %v1069 = vpop.f32.mrb[0].mxu0
        %v1070 = vadd.f32 %v763, %v1069
        %v1071 = vpop.f32.mrb[0].mxu0
        %1072 = vmatprep.mubr.bf16.mxu0 0
        %1073 = vmatmul.mubr.bf16.gmra.mrb[0].mxu0 %v777
        %v1074 = vpop.f32.mrb[0].mxu0
        %v1075 = vadd.f32 %v763, %v1074
        %v1076 = vpop.f32.mrb[0].mxu0
        %v1077 = vpop.f32.mrb[0].mxu0
        %v1078 = vadd.f32 %v763, %v1077
        %v1079 = vpop.f32.mrb[0].mxu0
        %1080 = vmatprep.mubr.bf16.mxu0 0
        %1081 = vmatmul.mubr.bf16.gmra.mrb[0].mxu0 %v778
        %v1082 = vpop.f32.mrb[0].mxu0
        %v1083 = vadd.f32 %v763, %v1082
        %v1084 = vpop.f32.mrb[0].mxu0
        %v1085 = vpop.f32.mrb[0].mxu0
        %v1086 = vadd.f32 %v763, %v1085
        %v1087 = vpop.f32.mrb[0].mxu0
        %1088 = vmatprep.mubr.bf16.mxu0 0
        %1089 = vmatmul.mubr.bf16.gmra.mrb[0].mxu0 %v779
        %v1090 = vpop.f32.mrb[0].mxu0
        %v1091 = vadd.f32 %v763, %v1090
        %v1092 = vpop.f32.mrb[0].mxu0
        %v1093 = vpop.f32.mrb[0].mxu0
        %v1094 = vadd.f32 %v763, %v1093
        %v1095 = vpop.f32.mrb[0].mxu0
        %1096 = vmatprep.mubr.bf16.mxu0 0
        %1097 = vmatmul.mubr.bf16.gmra.mrb[0].mxu0 %v780
        %v1098 = vpop.f32.mrb[0].mxu0
        %v1099 = vadd.f32 %v763, %v1098
        %v1100 = vpop.f32.mrb[0].mxu0
        %v1101 = vpop.f32.mrb[0].mxu0
        %v1102 = vadd.f32 %v763, %v1101
        %v1103 = vpop.f32.mrb[0].mxu0
        %1104 = vmatprep.mubr.bf16.mxu0 0
        %1105 = vmatmul.mubr.bf16.gmra.mrb[0].mxu0 %v781
        %v1106 = vpop.f32.mrb[0].mxu0
        %v1107 = vadd.f32 %v763, %v1106
        %v1108 = vpop.f32.mrb[0].mxu0
        %v1109 = vpop.f32.mrb[0].mxu0
        %v1110 = vadd.f32 %v763, %v1109
        %v1111 = vpop.f32.mrb[0].mxu0
        %1112 = vmatprep.mubr.bf16.mxu0 0
        %1113 = vmatmul.mubr.bf16.gmra.mrb[0].mxu0 %v782
        %v1114 = vpop.f32.mrb[0].mxu0
        %v1115 = vadd.f32 %v763, %v1114
        %v1116 = vpop.f32.mrb[0].mxu0
        %v1117 = vpop.f32.mrb[0].mxu0
        %v1118 = vadd.f32 %v763, %v1117
        %v1119 = vpop.f32.mrb[0].mxu0
        %1120 = vdwg.mxu0
        %v1121 = vpack.c.bf16 %v950, %v946
        %v1122 = vpack.c.bf16 %v960, %v956
        %v1123 = vpack.c.bf16 %v970, %v966
        %v1124 = vpack.c.bf16 %v980, %v976
        %v1125 = vpack.c.bf16 %v990, %v986
        %v1126 = vpack.c.bf16 %v1000, %v996
        %v1127 = vpack.c.bf16 %v1010, %v1006
        %v1128 = vpack.c.bf16 %v1020, %v1016
        %v1137 = vunpack.c.l.b16 %v1121
        %v1138 = vunpack.c.h.b16 %v1121
        %v1139 = vunpack.c.l.b16 %v1122
        %v1140 = vunpack.c.h.b16 %v1122
        %v1141 = vunpack.c.l.b16 %v1123
        %v1142 = vunpack.c.h.b16 %v1123
        %v1143 = vunpack.c.l.b16 %v1124
        %v1144 = vunpack.c.h.b16 %v1124
        %v1145 = vunpack.c.l.b16 %v1125
        %v1146 = vunpack.c.h.b16 %v1125
        %v1147 = vunpack.c.l.b16 %v1126
        %v1148 = vunpack.c.h.b16 %v1126
        %v1149 = vunpack.c.l.b16 %v1127
        %v1150 = vunpack.c.h.b16 %v1127
        %v1151 = vunpack.c.l.b16 %v1128
        %v1152 = vunpack.c.h.b16 %v1128
        %v1153 = vpack.c.b16 %v1137, %v1137
        %v1154 = vpack.c.b16 %v1138, %v1138
        %v1155 = vpack.c.b16 %v1139, %v1139
        %v1156 = vpack.c.b16 %v1140, %v1140
        %v1157 = vpack.c.b16 %v1141, %v1141
        %v1158 = vpack.c.b16 %v1142, %v1142
        %v1159 = vpack.c.b16 %v1143, %v1143
        %v1160 = vpack.c.b16 %v1144, %v1144
        %v1161 = vpack.c.b16 %v1145, %v1145
        %v1162 = vpack.c.b16 %v1146, %v1146
        %v1163 = vpack.c.b16 %v1147, %v1147
        %v1164 = vpack.c.b16 %v1148, %v1148
        %v1165 = vpack.c.b16 %v1149, %v1149
        %v1166 = vpack.c.b16 %v1150, %v1150
        %v1167 = vpack.c.b16 %v1151, %v1151
        %v1168 = vpack.c.b16 %v1152, %v1152
        %1185 = vst [vmem:[%s441] sm:$0xf] %v1153
        %1186 = vst [vmem:[%s441 + $0x4] sm:$0xf] %v1154
        %1187 = vst [vmem:[%s441 + $0x8] sm:$0xf] %v1155
        %1188 = vst [vmem:[%s441 + $0xc] sm:$0xf] %v1156
        %1189 = vst [vmem:[%s441 + $0x10] sm:$0xf] %v1157
        %1190 = vst [vmem:[%s441 + $0x14] sm:$0xf] %v1158
        %1191 = vst [vmem:[%s441 + $0x18] sm:$0xf] %v1159
        %1192 = vst [vmem:[%s441 + $0x1c] sm:$0xf] %v1160
        %1193 = vst [vmem:[%s441 + $0x20] sm:$0xf] %v1161
        %1194 = vst [vmem:[%s441 + $0x24] sm:$0xf] %v1162
        %1195 = vst [vmem:[%s441 + $0x28] sm:$0xf] %v1163
        %1196 = vst [vmem:[%s441 + $0x2c] sm:$0xf] %v1164
        %1197 = vst [vmem:[%s441 + $0x30] sm:$0xf] %v1165
        %1198 = vst [vmem:[%s441 + $0x34] sm:$0xf] %v1166
        %1199 = vst [vmem:[%s441 + $0x38] sm:$0xf] %v1167
        %1200 = vst [vmem:[%s441 + $0x3c] sm:$0xf] %v1168
        %v1201 = vpack.c.bf16 %v952, %v948
        %v1202 = vpack.c.bf16 %v962, %v958
        %v1203 = vpack.c.bf16 %v972, %v968
        %v1204 = vpack.c.bf16 %v982, %v978
        %v1205 = vpack.c.bf16 %v992, %v988
        %v1206 = vpack.c.bf16 %v1002, %v998
        %v1207 = vpack.c.bf16 %v1012, %v1008
        %v1208 = vpack.c.bf16 %v1022, %v1018
        %v1217 = vunpack.c.l.b16 %v1201
        %v1218 = vunpack.c.h.b16 %v1201
        %v1219 = vunpack.c.l.b16 %v1202
        %v1220 = vunpack.c.h.b16 %v1202
        %v1221 = vunpack.c.l.b16 %v1203
        %v1222 = vunpack.c.h.b16 %v1203
        %v1223 = vunpack.c.l.b16 %v1204
        %v1224 = vunpack.c.h.b16 %v1204
        %v1225 = vunpack.c.l.b16 %v1205
        %v1226 = vunpack.c.h.b16 %v1205
        %v1227 = vunpack.c.l.b16 %v1206
        %v1228 = vunpack.c.h.b16 %v1206
        %v1229 = vunpack.c.l.b16 %v1207
        %v1230 = vunpack.c.h.b16 %v1207
        %v1231 = vunpack.c.l.b16 %v1208
        %v1232 = vunpack.c.h.b16 %v1208
        %v1233 = vpack.c.b16 %v1217, %v1217
        %v1234 = vpack.c.b16 %v1218, %v1218
        %v1235 = vpack.c.b16 %v1219, %v1219
        %v1236 = vpack.c.b16 %v1220, %v1220
        %v1237 = vpack.c.b16 %v1221, %v1221
        %v1238 = vpack.c.b16 %v1222, %v1222
        %v1239 = vpack.c.b16 %v1223, %v1223
        %v1240 = vpack.c.b16 %v1224, %v1224
        %v1241 = vpack.c.b16 %v1225, %v1225
        %v1242 = vpack.c.b16 %v1226, %v1226
        %v1243 = vpack.c.b16 %v1227, %v1227
        %v1244 = vpack.c.b16 %v1228, %v1228
        %v1245 = vpack.c.b16 %v1229, %v1229
        %v1246 = vpack.c.b16 %v1230, %v1230
        %v1247 = vpack.c.b16 %v1231, %v1231
        %v1248 = vpack.c.b16 %v1232, %v1232
        %1265 = vst [vmem:[%s448] sm:$0xf] %v1233
        %1266 = vst [vmem:[%s448 + $0x4] sm:$0xf] %v1234
        %1267 = vst [vmem:[%s448 + $0x8] sm:$0xf] %v1235
        %1268 = vst [vmem:[%s448 + $0xc] sm:$0xf] %v1236
        %1269 = vst [vmem:[%s448 + $0x10] sm:$0xf] %v1237
        %1270 = vst [vmem:[%s448 + $0x14] sm:$0xf] %v1238
        %1271 = vst [vmem:[%s448 + $0x18] sm:$0xf] %v1239
        %1272 = vst [vmem:[%s448 + $0x1c] sm:$0xf] %v1240
        %1273 = vst [vmem:[%s448 + $0x20] sm:$0xf] %v1241
        %1274 = vst [vmem:[%s448 + $0x24] sm:$0xf] %v1242
        %1275 = vst [vmem:[%s448 + $0x28] sm:$0xf] %v1243
        %1276 = vst [vmem:[%s448 + $0x2c] sm:$0xf] %v1244
        %1277 = vst [vmem:[%s448 + $0x30] sm:$0xf] %v1245
        %1278 = vst [vmem:[%s448 + $0x34] sm:$0xf] %v1246
        %1279 = vst [vmem:[%s448 + $0x38] sm:$0xf] %v1247
        %1280 = vst [vmem:[%s448 + $0x3c] sm:$0xf] %v1248
        %v1281 = vpack.c.bf16 %v1062, %v1059
        %v1282 = vpack.c.bf16 %v1070, %v1067
        %v1283 = vpack.c.bf16 %v1078, %v1075
        %v1284 = vpack.c.bf16 %v1086, %v1083
        %v1285 = vpack.c.bf16 %v1094, %v1091
        %v1286 = vpack.c.bf16 %v1102, %v1099
        %v1287 = vpack.c.bf16 %v1110, %v1107
        %v1288 = vpack.c.bf16 %v1118, %v1115
        %v1297 = vunpack.c.l.b16 %v1281
        %v1298 = vunpack.c.h.b16 %v1281
        %v1299 = vunpack.c.l.b16 %v1282
        %v1300 = vunpack.c.h.b16 %v1282
        %v1301 = vunpack.c.l.b16 %v1283
        %v1302 = vunpack.c.h.b16 %v1283
        %v1303 = vunpack.c.l.b16 %v1284
        %v1304 = vunpack.c.h.b16 %v1284
        %v1305 = vunpack.c.l.b16 %v1285
        %v1306 = vunpack.c.h.b16 %v1285
        %v1307 = vunpack.c.l.b16 %v1286
        %v1308 = vunpack.c.h.b16 %v1286
        %v1309 = vunpack.c.l.b16 %v1287
        %v1310 = vunpack.c.h.b16 %v1287
        %v1311 = vunpack.c.l.b16 %v1288
        %v1312 = vunpack.c.h.b16 %v1288
        %v1313 = vpack.c.b16 %v1297, %v1297
        %v1314 = vpack.c.b16 %v1298, %v1298
        %v1315 = vpack.c.b16 %v1299, %v1299
        %v1316 = vpack.c.b16 %v1300, %v1300
        %v1317 = vpack.c.b16 %v1301, %v1301
        %v1318 = vpack.c.b16 %v1302, %v1302
        %v1319 = vpack.c.b16 %v1303, %v1303
        %v1320 = vpack.c.b16 %v1304, %v1304
        %v1321 = vpack.c.b16 %v1305, %v1305
        %v1322 = vpack.c.b16 %v1306, %v1306
        %v1323 = vpack.c.b16 %v1307, %v1307
        %v1324 = vpack.c.b16 %v1308, %v1308
        %v1325 = vpack.c.b16 %v1309, %v1309
        %v1326 = vpack.c.b16 %v1310, %v1310
        %v1327 = vpack.c.b16 %v1311, %v1311
        %v1328 = vpack.c.b16 %v1312, %v1312
        %1345 = vst [vmem:[%s455] sm:$0xf] %v1313
        %1346 = vst [vmem:[%s455 + $0x4] sm:$0xf] %v1314
        %1347 = vst [vmem:[%s455 + $0x8] sm:$0xf] %v1315
        %1348 = vst [vmem:[%s455 + $0xc] sm:$0xf] %v1316
        %1349 = vst [vmem:[%s455 + $0x10] sm:$0xf] %v1317
        %1350 = vst [vmem:[%s455 + $0x14] sm:$0xf] %v1318
        %1351 = vst [vmem:[%s455 + $0x18] sm:$0xf] %v1319
        %1352 = vst [vmem:[%s455 + $0x1c] sm:$0xf] %v1320
        %1353 = vst [vmem:[%s455 + $0x20] sm:$0xf] %v1321
        %1354 = vst [vmem:[%s455 + $0x24] sm:$0xf] %v1322
        %1355 = vst [vmem:[%s455 + $0x28] sm:$0xf] %v1323
        %1356 = vst [vmem:[%s455 + $0x2c] sm:$0xf] %v1324
        %1357 = vst [vmem:[%s455 + $0x30] sm:$0xf] %v1325
        %1358 = vst [vmem:[%s455 + $0x34] sm:$0xf] %v1326
        %1359 = vst [vmem:[%s455 + $0x38] sm:$0xf] %v1327
        %1360 = vst [vmem:[%s455 + $0x3c] sm:$0xf] %v1328
        %s1361 = sand.u32 %s170, 1
        %s1362 = scalar_lea.sflag [#allocation5], %s1361
        %s1363 = sand.u32 %s170, 1
        %s1364 = smul.addr %s1363, 64
        %s1365 = scalar_lea.vmem [#allocation6], %s1364
        %s1366 = sand.u32 %s26, 1
        %s1367 = scalar_lea.sflag [#allocation8], %s1366
        %s1368 = sand.u32 %s198, 1
        %s1369 = smul.addr %s1368, 64
        %s1370 = scalar_lea.vmem [#allocation7], %s1369
        %s1371 = sand.u32 %s26, 1
        %s1372 = scalar_lea.sflag [#allocation8], %s1371
        %s1373 = sand.u32 %s226, 1
        %s1374 = smul.addr %s1373, 64
        %s1375 = scalar_lea.vmem [#allocation9], %s1374
        // Predicated region
        $region83: #{tpu_custom_call.1} parent=73 // pred_check
          %p1376 = pneg %p180
        $region84: #{tpu_custom_call.1} parent=73 // pred_check_branch
          %1378 = sbr.rel (%p1376) target = $region86
        $region85: #{tpu_custom_call.1} parent=73 // pred_region
          %s1379 = smul.u32 16, %s31
          %s1381 = ssub.s32 1024, 1024
          %1382 = vsyncadd %s1362, %s1381
          %s1383 = smul.addr %s30, 32
          %s1384 = sadd.s32 %s1379, %s1383
          %s1385 = smul.addr %s1384, 64
          %s1386 = scalar_lea.hbm %s5, %s1385
          %s1387 = sshll.u32 %s1365, 4
          %s1388 = int_to_ptr.vmem [resolvable:$true] %s1387
          %1393 = dma.vmem_to_hbm [thread:$0]  %s1388, 1024, %s1386, %s1362, 64, 64, 4
        $region86: #{tpu_custom_call.1} parent=73 // pred_fallthru
          _
        // Predicated region
        $region87: #{tpu_custom_call.1} parent=73 // pred_check
          %p1394 = pneg %p208
        $region88: #{tpu_custom_call.1} parent=73 // pred_check_branch
          %1396 = sbr.rel (%p1394) target = $region90
        $region89: #{tpu_custom_call.1} parent=73 // pred_region
          %s1397 = smul.u32 16, %s31
          %s1399 = ssub.s32 1024, 1024
          %1400 = vsyncadd %s1367, %s1399
          %s1401 = smul.addr %s30, 32
          %s1402 = sadd.s32 %s1397, %s1401
          %s1403 = smul.addr %s1402, 64
          %s1404 = scalar_lea.hbm %s6, %s1403
          %s1405 = sshll.u32 %s1370, 4
          %s1406 = int_to_ptr.vmem [resolvable:$true] %s1405
          %1411 = dma.vmem_to_hbm [thread:$0]  %s1406, 1024, %s1404, %s1367, 64, 64, 4
        $region90: #{tpu_custom_call.1} parent=73 // pred_fallthru
          _
        // Predicated region
        $region91: #{tpu_custom_call.1} parent=73 // pred_check
          %p1412 = pneg %p236
        $region92: #{tpu_custom_call.1} parent=73 // pred_check_branch
          %1414 = sbr.rel (%p1412) target = $region94
        $region93: #{tpu_custom_call.1} parent=73 // pred_region
          %s1415 = smul.u32 16, %s31
          %s1417 = ssub.s32 1024, 1024
          %1418 = vsyncadd %s1372, %s1417
          %s1419 = smul.addr %s30, 32
          %s1420 = sadd.s32 %s1415, %s1419
          %s1421 = smul.addr %s1420, 64
          %s1422 = scalar_lea.hbm %s7, %s1421
          %s1423 = sshll.u32 %s1375, 4
          %s1424 = int_to_ptr.vmem [resolvable:$true] %s1423
          %1429 = dma.vmem_to_hbm [thread:$0]  %s1424, 1024, %s1422, %s1372, 64, 64, 4
        $region94: #{tpu_custom_call.1} parent=73 // pred_fallthru
          _
      $region74: #{tpu_custom_call.1} parent=5 // pred_fallthru
        _
      %p1430 = scmp.le.s32.totalorder 2, %s21
      // Predicated region
      $region95: #{tpu_custom_call.1} parent=5 // pred_check
        %p1431 = pneg %p1430
      $region96: #{tpu_custom_call.1} parent=5 // pred_check_branch
        %1433 = sbr.rel (%p1431) target = $region98
      $region97: #{tpu_custom_call.1} parent=5 // pred_region
        %s1434 = ssub.s32 %s21, 2
        // Predicated region
        $region99: #{tpu_custom_call.1} parent=97 // pred_check
          %p1435 = pneg %p186
        $region100: #{tpu_custom_call.1} parent=97 // pred_check_branch
          %1437 = sbr.rel (%p1435) target = $region102
        $region101: #{tpu_custom_call.1} parent=97 // pred_region
          %s1438 = sand.u32 %s171, 1
          %s1439 = scalar_lea.sflag [#allocation5], %s1438
          %s1440 = sand.u32 %s171, 1
          %s1441 = smul.addr %s1440, 64
          %s1442 = scalar_lea.vmem [#allocation6], %s1441
          %1443 = dma.done %s1439, 1024
        $region102: #{tpu_custom_call.1} parent=97 // pred_fallthru
          _
        // Predicated region
        $region103: #{tpu_custom_call.1} parent=97 // pred_check
          %p1444 = pneg %p214
        $region104: #{tpu_custom_call.1} parent=97 // pred_check_branch
          %1446 = sbr.rel (%p1444) target = $region106
        $region105: #{tpu_custom_call.1} parent=97 // pred_region
          %s1447 = sand.u32 %s27, 1
          %s1448 = scalar_lea.sflag [#allocation8], %s1447
          %s1449 = sand.u32 %s199, 1
          %s1450 = smul.addr %s1449, 64
          %s1451 = scalar_lea.vmem [#allocation7], %s1450
          %1452 = dma.done %s1448, 1024
        $region106: #{tpu_custom_call.1} parent=97 // pred_fallthru
          _
        // Predicated region
        $region107: #{tpu_custom_call.1} parent=97 // pred_check
          %p1453 = pneg %p242
        $region108: #{tpu_custom_call.1} parent=97 // pred_check_branch
          %1455 = sbr.rel (%p1453) target = $region110
        $region109: #{tpu_custom_call.1} parent=97 // pred_region
          %s1456 = sand.u32 %s27, 1
          %s1457 = scalar_lea.sflag [#allocation8], %s1456
          %s1458 = sand.u32 %s227, 1
          %s1459 = smul.addr %s1458, 64
          %s1460 = scalar_lea.vmem [#allocation9], %s1459
          %1461 = dma.done %s1457, 1024
        $region110: #{tpu_custom_call.1} parent=97 // pred_fallthru
          _
      $region98: #{tpu_custom_call.1} parent=5 // pred_fallthru
        _
    $region6: #{tpu_custom_call.1} parent=1 // loop_footer
      %s25 = sadd.s32 1, %s21
    $region7: #{tpu_custom_call.1} parent=1 // loop_footer_branch
      %20 = sbr.rel target = $region3
    $region8: #{tpu_custom_call.1} parent=1 // loop_exit
      _
    %1462 = vsyncpa [#allocation4], 1
    %s1463 = scalar_lea.sflag [#allocation4], 1
    %1464 = vsyncpa %s1463, 1
    %1465 = vsyncpa [#allocation5], 1
    %s1466 = scalar_lea.sflag [#allocation5], 1
    %1467 = vsyncpa %s1466, 1
    %1468 = vsyncpa [#allocation8], 1
    %s1469 = scalar_lea.sflag [#allocation8], 1
    %1470 = vsyncpa %s1469, 1

</llo_original>
